<compile_context>
chip_gen: v6e
topology: v6e:2x2x1
jax: 0.10.0
libtpu: 0.0.40
codegen_flags: <defaults>
</compile_context>

<pallas_src>
import jax
import jax.numpy as jnp
import numpy as np
from jax.experimental import pallas as pl
from jax.experimental.pallas import tpu as pltpu

EPS = 1e-5  # nn.BatchNorm2d default eps


def residual_kernel(x_ref, w1_ref, g1_ref, b1_ref, w2_ref, g2_ref, b2_ref,
                    out_ref, pad_ref, im_ref):
    N, H, W, C = x_ref.shape
    Hp, Wp = H + 2, W + 2
    M = N * H * W

    # ---- zero only the 1-pixel halo of the padded staging buffer, once ------
    zrow = jnp.zeros((N, 1, Wp, C), jnp.float32)
    zcol = jnp.zeros((N, Hp, 1, C), jnp.float32)
    pad_ref[:, 0:1, :, :] = zrow
    pad_ref[:, H + 1:H + 2, :, :] = zrow
    pad_ref[:, :, 0:1, :] = zcol
    pad_ref[:, :, W + 1:W + 2, :] = zcol

    def conv3x3(w_ref):
        # im2col: stage the 9 shifted taps into one (M, 9*C) buffer, then a
        # single K=9*C GEMM on the MXU (bf16 inputs, f32 accumulation).
        for dy in range(3):
            for dx in range(3):
                j = dy * 3 + dx
                im_ref[:, j * C:(j + 1) * C] = (
                    pad_ref[:, dy:dy + H, dx:dx + W, :].reshape(M, C))
        return jnp.dot(im_ref[...].astype(jnp.bfloat16), w_ref[...],
                       preferred_element_type=jnp.float32)      # (M, C) f32

    def batchnorm(y, g_ref, b_ref):
        # Training-mode BN over (N, H, W): single-pass sum / sum-of-squares.
        s = jnp.sum(y, axis=0, keepdims=True)
        ss = jnp.sum(y * y, axis=0, keepdims=True)
        mean = s * (1.0 / M)
        var = jnp.maximum(ss * (1.0 / M) - mean * mean, 0.0)    # biased var
        scale = jax.lax.rsqrt(var + EPS) * g_ref[...]
        shift = b_ref[...] - mean * scale
        return y * scale + shift

    # ---------------- conv1 -> bn1 -> ReLU ------------------------------------
    pad_ref[:, 1:H + 1, 1:W + 1, :] = x_ref[...]
    y = jnp.maximum(batchnorm(conv3x3(w1_ref), g1_ref, b1_ref), 0.0)

    # ---------------- conv2 -> bn2 --------------------------------------------
    pad_ref[:, 1:H + 1, 1:W + 1, :] = y.reshape(N, H, W, C)     # halo already 0
    y = batchnorm(conv3x3(w2_ref), g2_ref, b2_ref)

    # ---------------- residual add + ReLU --------------------------------------
    y = jnp.maximum(y + x_ref[...].reshape(M, C), 0.0)
    out_ref[...] = y.reshape(N, H, W, C).astype(out_ref.dtype)


def residual_forward(x_nchw, w1, g1, b1, w2, g2, b2):
    """x_nchw: (N, C, H, W); w*: (Cout, Cin, 3, 3) PyTorch OIHW; g*/b*: (Cout,)."""
    N, C, H, W = x_nchw.shape
    Cout = w1.shape[0]
    assert Cout == C, "downsample=None, stride=1 => in_channels == out_channels"

    # NCHW -> NHWC (channels on the lane axis inside the kernel).
    x = jnp.transpose(x_nchw, (0, 2, 3, 1)).astype(jnp.float32)

    def prep_w(w):
        # OIHW -> (kh, kw, Cin, Cout) -> (9*Cin, Cout); bf16 for the MXU.
        # Row order matches the im2col column order: (dy*3 + dx)*Cin + cin.
        return jnp.transpose(w, (2, 3, 1, 0)).reshape(9 * C, Cout).astype(jnp.bfloat16)

    vmem = pl.BlockSpec(memory_space=pltpu.MemorySpace.VMEM)
    out_nhwc = pl.pallas_call(
        residual_kernel,
        out_shape=jax.ShapeDtypeStruct((N, H, W, Cout), jnp.float32),
        in_specs=[vmem] * 7,
        out_specs=vmem,
        scratch_shapes=[
            pltpu.VMEM((N, H + 2, W + 2, C), jnp.float32),   # padded staging buf
            pltpu.VMEM((N * H * W, 9 * C), jnp.float32),     # im2col buffer
        ],
        compiler_params=pltpu.CompilerParams(vmem_limit_bytes=32 * 1024 * 1024),
    )(x, prep_w(w1),
      g1.reshape(1, Cout).astype(jnp.float32), b1.reshape(1, Cout).astype(jnp.float32),
      prep_w(w2),
      g2.reshape(1, Cout).astype(jnp.float32), b2.reshape(1, Cout).astype(jnp.float32))
    return jnp.transpose(out_nhwc, (0, 3, 1, 2))              # back to NCHW


def residual_reference(x, w1, g1, b1, w2, g2, b2):
    """Pure-JAX f32 reference (NCHW), matches PyTorch training-mode forward."""
    def conv(x, w):
        return jax.lax.conv_general_dilated(
            x, w, window_strides=(1, 1), padding=((1, 1), (1, 1)),
            dimension_numbers=('NCHW', 'OIHW', 'NCHW'))

    def bn(x, g, b):
        mean = jnp.mean(x, axis=(0, 2, 3), keepdims=True)
        var = jnp.mean((x - mean) ** 2, axis=(0, 2, 3), keepdims=True)
        return ((x - mean) * jax.lax.rsqrt(var + EPS)
                * g.reshape(1, -1, 1, 1) + b.reshape(1, -1, 1, 1))

    out = jnp.maximum(bn(conv(x, w1), g1, b1), 0.0)
    out = bn(conv(out, w2), g2, b2)
    return jnp.maximum(out + x, 0.0)


if __name__ == "__main__":
    key = jax.random.PRNGKey(0)
    N, C, H, W = 2, 32, 8, 8            # small NCHW input, in_channels == out_channels

    k_x, k_w1, k_w2, k_g1, k_b1, k_g2, k_b2 = jax.random.split(key, 7)
    x = jax.random.normal(k_x, (N, C, H, W), dtype=jnp.float32)
    w1 = jax.random.normal(k_w1, (C, C, 3, 3), dtype=jnp.float32) * 0.1
    w2 = jax.random.normal(k_w2, (C, C, 3, 3), dtype=jnp.float32) * 0.1
    g1 = 1.0 + 0.1 * jax.random.normal(k_g1, (C,), dtype=jnp.float32)
    b1 = 0.1 * jax.random.normal(k_b1, (C,), dtype=jnp.float32)
    g2 = 1.0 + 0.1 * jax.random.normal(k_g2, (C,), dtype=jnp.float32)
    b2 = 0.1 * jax.random.normal(k_b2, (C,), dtype=jnp.float32)

    out = jax.block_until_ready(residual_forward(x, w1, g1, b1, w2, g2, b2))
    ref = jax.block_until_ready(residual_reference(x, w1, g1, b1, w2, g2, b2))

    # bf16 matmul inputs (f32 accumulation) -> slightly looser tolerance.
    np.testing.assert_allclose(np.asarray(out), np.asarray(ref), rtol=2e-2, atol=2e-2)

    print("KERNEL_OK")
</pallas_src>

<mosaic_0001>
module attributes {stable_mosaic.version = 11 : i64} {
  func.func @residual_kernel(%arg0: memref<2x8x8x32xf32, #tpu.memory_space<vmem>>, %arg1: memref<288x32xbf16, #tpu.memory_space<vmem>>, %arg2: memref<1x32xf32, #tpu.memory_space<vmem>>, %arg3: memref<1x32xf32, #tpu.memory_space<vmem>>, %arg4: memref<288x32xbf16, #tpu.memory_space<vmem>>, %arg5: memref<1x32xf32, #tpu.memory_space<vmem>>, %arg6: memref<1x32xf32, #tpu.memory_space<vmem>>, %arg7: memref<2x8x8x32xf32, #tpu.memory_space<vmem>>, %arg8: memref<2x10x10x32xf32, #tpu.memory_space<vmem>>, %arg9: memref<128x288xf32, #tpu.memory_space<vmem>>) attributes {dimension_semantics = [], scalar_prefetch = 0 : i64, scratch_operands = 2 : i64, tpu.core_type = #tpu.core_type<tc>} {
    %cst = arith.constant 0.000000e+00 : f32
    %0 = vector.broadcast %cst : f32 to vector<2x1x10x32xf32>
    %cst_0 = arith.constant 0.000000e+00 : f32
    %1 = vector.broadcast %cst_0 : f32 to vector<2x10x1x32xf32>
    %c0 = arith.constant 0 : index
    %c0_1 = arith.constant 0 : index
    %c0_2 = arith.constant 0 : index
    %c0_3 = arith.constant 0 : index
    %2 = vector.load %arg8[%c0, %c0_1, %c0_2, %c0_3] : memref<2x10x10x32xf32, #tpu.memory_space<vmem>>, vector<2x1x10x32xf32>
    tpu.vector_store %arg8[%c0, %c0_1, %c0_2, %c0_3], %0 {strides = array<i32>} : memref<2x10x10x32xf32, #tpu.memory_space<vmem>>, vector<2x1x10x32xf32>,
    %c0_4 = arith.constant 0 : index
    %c9 = arith.constant 9 : index
    %c0_5 = arith.constant 0 : index
    %c0_6 = arith.constant 0 : index
    %3 = vector.load %arg8[%c0_4, %c9, %c0_5, %c0_6] : memref<2x10x10x32xf32, #tpu.memory_space<vmem>>, vector<2x1x10x32xf32>
    tpu.vector_store %arg8[%c0_4, %c9, %c0_5, %c0_6], %0 {strides = array<i32>} : memref<2x10x10x32xf32, #tpu.memory_space<vmem>>, vector<2x1x10x32xf32>,
    %c0_7 = arith.constant 0 : index
    %c0_8 = arith.constant 0 : index
    %c0_9 = arith.constant 0 : index
    %c0_10 = arith.constant 0 : index
    %4 = vector.load %arg8[%c0_7, %c0_8, %c0_9, %c0_10] : memref<2x10x10x32xf32, #tpu.memory_space<vmem>>, vector<2x10x1x32xf32>
    tpu.vector_store %arg8[%c0_7, %c0_8, %c0_9, %c0_10], %1 {strides = array<i32>} : memref<2x10x10x32xf32, #tpu.memory_space<vmem>>, vector<2x10x1x32xf32>,
    %c0_11 = arith.constant 0 : index
    %c0_12 = arith.constant 0 : index
    %c9_13 = arith.constant 9 : index
    %c0_14 = arith.constant 0 : index
    %5 = vector.load %arg8[%c0_11, %c0_12, %c9_13, %c0_14] : memref<2x10x10x32xf32, #tpu.memory_space<vmem>>, vector<2x10x1x32xf32>
    tpu.vector_store %arg8[%c0_11, %c0_12, %c9_13, %c0_14], %1 {strides = array<i32>} : memref<2x10x10x32xf32, #tpu.memory_space<vmem>>, vector<2x10x1x32xf32>,
    %c0_15 = arith.constant 0 : index
    %c0_16 = arith.constant 0 : index
    %c0_17 = arith.constant 0 : index
    %c0_18 = arith.constant 0 : index
    %6 = vector.load %arg0[%c0_15, %c0_16, %c0_17, %c0_18] : memref<2x8x8x32xf32, #tpu.memory_space<vmem>>, vector<2x8x8x32xf32>
    %c0_19 = arith.constant 0 : index
    %c1 = arith.constant 1 : index
    %c1_20 = arith.constant 1 : index
    %c0_21 = arith.constant 0 : index
    %7 = vector.load %arg8[%c0_19, %c1, %c1_20, %c0_21] : memref<2x10x10x32xf32, #tpu.memory_space<vmem>>, vector<2x8x8x32xf32>
    tpu.vector_store %arg8[%c0_19, %c1, %c1_20, %c0_21], %6 {strides = array<i32>} : memref<2x10x10x32xf32, #tpu.memory_space<vmem>>, vector<2x8x8x32xf32>,
    %c0_22 = arith.constant 0 : index
    %c0_23 = arith.constant 0 : index
    %c0_24 = arith.constant 0 : index
    %c0_25 = arith.constant 0 : index
    %8 = vector.load %arg8[%c0_22, %c0_23, %c0_24, %c0_25] : memref<2x10x10x32xf32, #tpu.memory_space<vmem>>, vector<2x8x8x32xf32>
    %9 = vector.shape_cast %8 : vector<2x8x8x32xf32> to vector<128x32xf32>
    %c0_26 = arith.constant 0 : index
    %c0_27 = arith.constant 0 : index
    %10 = vector.load %arg9[%c0_26, %c0_27] : memref<128x288xf32, #tpu.memory_space<vmem>>, vector<128x32xf32>
    tpu.vector_store %arg9[%c0_26, %c0_27], %9 {strides = array<i32>} : memref<128x288xf32, #tpu.memory_space<vmem>>, vector<128x32xf32>,
    %c0_28 = arith.constant 0 : index
    %c0_29 = arith.constant 0 : index
    %c1_30 = arith.constant 1 : index
    %c0_31 = arith.constant 0 : index
    %11 = vector.load %arg8[%c0_28, %c0_29, %c1_30, %c0_31] : memref<2x10x10x32xf32, #tpu.memory_space<vmem>>, vector<2x8x8x32xf32>
    %12 = vector.shape_cast %11 : vector<2x8x8x32xf32> to vector<128x32xf32>
    %c0_32 = arith.constant 0 : index
    %c32 = arith.constant 32 : index
    %13 = vector.load %arg9[%c0_32, %c32] : memref<128x288xf32, #tpu.memory_space<vmem>>, vector<128x32xf32>
    tpu.vector_store %arg9[%c0_32, %c32], %12 {strides = array<i32>} : memref<128x288xf32, #tpu.memory_space<vmem>>, vector<128x32xf32>,
    %c0_33 = arith.constant 0 : index
    %c0_34 = arith.constant 0 : index
    %c2 = arith.constant 2 : index
    %c0_35 = arith.constant 0 : index
    %14 = vector.load %arg8[%c0_33, %c0_34, %c2, %c0_35] : memref<2x10x10x32xf32, #tpu.memory_space<vmem>>, vector<2x8x8x32xf32>
    %15 = vector.shape_cast %14 : vector<2x8x8x32xf32> to vector<128x32xf32>
    %c0_36 = arith.constant 0 : index
    %c64 = arith.constant 64 : index
    %16 = vector.load %arg9[%c0_36, %c64] : memref<128x288xf32, #tpu.memory_space<vmem>>, vector<128x32xf32>
    tpu.vector_store %arg9[%c0_36, %c64], %15 {strides = array<i32>} : memref<128x288xf32, #tpu.memory_space<vmem>>, vector<128x32xf32>,
    %c0_37 = arith.constant 0 : index
    %c1_38 = arith.constant 1 : index
    %c0_39 = arith.constant 0 : index
    %c0_40 = arith.constant 0 : index
    %17 = vector.load %arg8[%c0_37, %c1_38, %c0_39, %c0_40] : memref<2x10x10x32xf32, #tpu.memory_space<vmem>>, vector<2x8x8x32xf32>
    %18 = vector.shape_cast %17 : vector<2x8x8x32xf32> to vector<128x32xf32>
    %c0_41 = arith.constant 0 : index
    %c96 = arith.constant 96 : index
    %19 = vector.load %arg9[%c0_41, %c96] : memref<128x288xf32, #tpu.memory_space<vmem>>, vector<128x32xf32>
    tpu.vector_store %arg9[%c0_41, %c96], %18 {strides = array<i32>} : memref<128x288xf32, #tpu.memory_space<vmem>>, vector<128x32xf32>,
    %c0_42 = arith.constant 0 : index
    %c1_43 = arith.constant 1 : index
    %c1_44 = arith.constant 1 : index
    %c0_45 = arith.constant 0 : index
    %20 = vector.load %arg8[%c0_42, %c1_43, %c1_44, %c0_45] : memref<2x10x10x32xf32, #tpu.memory_space<vmem>>, vector<2x8x8x32xf32>
    %21 = vector.shape_cast %20 : vector<2x8x8x32xf32> to vector<128x32xf32>
    %c0_46 = arith.constant 0 : index
    %c128 = arith.constant 128 : index
    %22 = vector.load %arg9[%c0_46, %c128] : memref<128x288xf32, #tpu.memory_space<vmem>>, vector<128x32xf32>
    tpu.vector_store %arg9[%c0_46, %c128], %21 {strides = array<i32>} : memref<128x288xf32, #tpu.memory_space<vmem>>, vector<128x32xf32>,
    %c0_47 = arith.constant 0 : index
    %c1_48 = arith.constant 1 : index
    %c2_49 = arith.constant 2 : index
    %c0_50 = arith.constant 0 : index
    %23 = vector.load %arg8[%c0_47, %c1_48, %c2_49, %c0_50] : memref<2x10x10x32xf32, #tpu.memory_space<vmem>>, vector<2x8x8x32xf32>
    %24 = vector.shape_cast %23 : vector<2x8x8x32xf32> to vector<128x32xf32>
    %c0_51 = arith.constant 0 : index
    %c160 = arith.constant 160 : index
    %25 = vector.load %arg9[%c0_51, %c160] : memref<128x288xf32, #tpu.memory_space<vmem>>, vector<128x32xf32>
    tpu.vector_store %arg9[%c0_51, %c160], %24 {strides = array<i32>} : memref<128x288xf32, #tpu.memory_space<vmem>>, vector<128x32xf32>,
    %c0_52 = arith.constant 0 : index
    %c2_53 = arith.constant 2 : index
    %c0_54 = arith.constant 0 : index
    %c0_55 = arith.constant 0 : index
    %26 = vector.load %arg8[%c0_52, %c2_53, %c0_54, %c0_55] : memref<2x10x10x32xf32, #tpu.memory_space<vmem>>, vector<2x8x8x32xf32>
    %27 = vector.shape_cast %26 : vector<2x8x8x32xf32> to vector<128x32xf32>
    %c0_56 = arith.constant 0 : index
    %c192 = arith.constant 192 : index
    %28 = vector.load %arg9[%c0_56, %c192] : memref<128x288xf32, #tpu.memory_space<vmem>>, vector<128x32xf32>
    tpu.vector_store %arg9[%c0_56, %c192], %27 {strides = array<i32>} : memref<128x288xf32, #tpu.memory_space<vmem>>, vector<128x32xf32>,
    %c0_57 = arith.constant 0 : index
    %c2_58 = arith.constant 2 : index
    %c1_59 = arith.constant 1 : index
    %c0_60 = arith.constant 0 : index
    %29 = vector.load %arg8[%c0_57, %c2_58, %c1_59, %c0_60] : memref<2x10x10x32xf32, #tpu.memory_space<vmem>>, vector<2x8x8x32xf32>
    %30 = vector.shape_cast %29 : vector<2x8x8x32xf32> to vector<128x32xf32>
    %c0_61 = arith.constant 0 : index
    %c224 = arith.constant 224 : index
    %31 = vector.load %arg9[%c0_61, %c224] : memref<128x288xf32, #tpu.memory_space<vmem>>, vector<128x32xf32>
    tpu.vector_store %arg9[%c0_61, %c224], %30 {strides = array<i32>} : memref<128x288xf32, #tpu.memory_space<vmem>>, vector<128x32xf32>,
    %c0_62 = arith.constant 0 : index
    %c2_63 = arith.constant 2 : index
    %c2_64 = arith.constant 2 : index
    %c0_65 = arith.constant 0 : index
    %32 = vector.load %arg8[%c0_62, %c2_63, %c2_64, %c0_65] : memref<2x10x10x32xf32, #tpu.memory_space<vmem>>, vector<2x8x8x32xf32>
    %33 = vector.shape_cast %32 : vector<2x8x8x32xf32> to vector<128x32xf32>
    %c0_66 = arith.constant 0 : index
    %c256 = arith.constant 256 : index
    %34 = vector.load %arg9[%c0_66, %c256] : memref<128x288xf32, #tpu.memory_space<vmem>>, vector<128x32xf32>
    tpu.vector_store %arg9[%c0_66, %c256], %33 {strides = array<i32>} : memref<128x288xf32, #tpu.memory_space<vmem>>, vector<128x32xf32>,
    %c0_67 = arith.constant 0 : index
    %c0_68 = arith.constant 0 : index
    %35 = vector.load %arg9[%c0_67, %c0_68] : memref<128x288xf32, #tpu.memory_space<vmem>>, vector<128x288xf32>
    %36 = arith.truncf %35 : vector<128x288xf32> to vector<128x288xbf16>
    %c0_69 = arith.constant 0 : index
    %c0_70 = arith.constant 0 : index
    %37 = vector.load %arg1[%c0_69, %c0_70] : memref<288x32xbf16, #tpu.memory_space<vmem>>, vector<288x32xbf16>
    %cst_71 = arith.constant dense<0.000000e+00> : vector<128x32xf32>
    %38 = tpu.matmul %36, %37, %cst_71 {dimension_numbers = #tpu.dot_dimension_numbers<[1], [0], [0], [1], [0, 0, 1, 1], [], []>} : vector<128x288xbf16>, vector<288x32xbf16>, vector<128x32xf32> -> vector<128x32xf32>
    %cst_72 = arith.constant dense<0.000000e+00> : vector<32xf32>
    %39 = vector.multi_reduction <add>, %38, %cst_72 [0] : vector<128x32xf32> to vector<32xf32>
    %40 = vector.shape_cast %39 : vector<32xf32> to vector<1x32xf32>
    %41 = arith.mulf %38, %38 : vector<128x32xf32>
    %cst_73 = arith.constant dense<0.000000e+00> : vector<32xf32>
    %42 = vector.multi_reduction <add>, %41, %cst_73 [0] : vector<128x32xf32> to vector<32xf32>
    %43 = vector.shape_cast %42 : vector<32xf32> to vector<1x32xf32>
    %cst_74 = arith.constant 7.812500e-03 : f32
    %44 = vector.broadcast %cst_74 : f32 to vector<1x32xf32>
    %45 = arith.mulf %40, %44 : vector<1x32xf32>
    %cst_75 = arith.constant 7.812500e-03 : f32
    %46 = vector.broadcast %cst_75 : f32 to vector<1x32xf32>
    %47 = arith.mulf %43, %46 : vector<1x32xf32>
    %48 = arith.mulf %45, %45 : vector<1x32xf32>
    %49 = arith.subf %47, %48 : vector<1x32xf32>
    %cst_76 = arith.constant 0.000000e+00 : f32
    %50 = vector.broadcast %cst_76 : f32 to vector<1x32xf32>
    %51 = arith.maximumf %49, %50 : vector<1x32xf32>
    %cst_77 = arith.constant 9.99999974E-6 : f32
    %52 = vector.broadcast %cst_77 : f32 to vector<1x32xf32>
    %53 = arith.addf %51, %52 : vector<1x32xf32>
    %54 = math.rsqrt %53 : vector<1x32xf32>
    %c0_78 = arith.constant 0 : index
    %c0_79 = arith.constant 0 : index
    %55 = vector.load %arg2[%c0_78, %c0_79] : memref<1x32xf32, #tpu.memory_space<vmem>>, vector<1x32xf32>
    %56 = arith.mulf %54, %55 : vector<1x32xf32>
    %c0_80 = arith.constant 0 : index
    %c0_81 = arith.constant 0 : index
    %57 = vector.load %arg3[%c0_80, %c0_81] : memref<1x32xf32, #tpu.memory_space<vmem>>, vector<1x32xf32>
    %58 = arith.mulf %45, %56 : vector<1x32xf32>
    %59 = arith.subf %57, %58 : vector<1x32xf32>
    %60 = vector.broadcast %56 : vector<1x32xf32> to vector<128x32xf32>
    %61 = arith.mulf %38, %60 : vector<128x32xf32>
    %62 = vector.broadcast %59 : vector<1x32xf32> to vector<128x32xf32>
    %63 = arith.addf %61, %62 : vector<128x32xf32>
    %cst_82 = arith.constant 0.000000e+00 : f32
    %64 = vector.broadcast %cst_82 : f32 to vector<128x32xf32>
    %65 = arith.maximumf %63, %64 : vector<128x32xf32>
    %66 = vector.shape_cast %65 : vector<128x32xf32> to vector<2x8x8x32xf32>
    %c0_83 = arith.constant 0 : index
    %c1_84 = arith.constant 1 : index
    %c1_85 = arith.constant 1 : index
    %c0_86 = arith.constant 0 : index
    %67 = vector.load %arg8[%c0_83, %c1_84, %c1_85, %c0_86] : memref<2x10x10x32xf32, #tpu.memory_space<vmem>>, vector<2x8x8x32xf32>
    tpu.vector_store %arg8[%c0_83, %c1_84, %c1_85, %c0_86], %66 {strides = array<i32>} : memref<2x10x10x32xf32, #tpu.memory_space<vmem>>, vector<2x8x8x32xf32>,
    %c0_87 = arith.constant 0 : index
    %c0_88 = arith.constant 0 : index
    %c0_89 = arith.constant 0 : index
    %c0_90 = arith.constant 0 : index
    %68 = vector.load %arg8[%c0_87, %c0_88, %c0_89, %c0_90] : memref<2x10x10x32xf32, #tpu.memory_space<vmem>>, vector<2x8x8x32xf32>
    %69 = vector.shape_cast %68 : vector<2x8x8x32xf32> to vector<128x32xf32>
    %c0_91 = arith.constant 0 : index
    %c0_92 = arith.constant 0 : index
    %70 = vector.load %arg9[%c0_91, %c0_92] : memref<128x288xf32, #tpu.memory_space<vmem>>, vector<128x32xf32>
    tpu.vector_store %arg9[%c0_91, %c0_92], %69 {strides = array<i32>} : memref<128x288xf32, #tpu.memory_space<vmem>>, vector<128x32xf32>,
    %c0_93 = arith.constant 0 : index
    %c0_94 = arith.constant 0 : index
    %c1_95 = arith.constant 1 : index
    %c0_96 = arith.constant 0 : index
    %71 = vector.load %arg8[%c0_93, %c0_94, %c1_95, %c0_96] : memref<2x10x10x32xf32, #tpu.memory_space<vmem>>, vector<2x8x8x32xf32>
    %72 = vector.shape_cast %71 : vector<2x8x8x32xf32> to vector<128x32xf32>
    %c0_97 = arith.constant 0 : index
    %c32_98 = arith.constant 32 : index
    %73 = vector.load %arg9[%c0_97, %c32_98] : memref<128x288xf32, #tpu.memory_space<vmem>>, vector<128x32xf32>
    tpu.vector_store %arg9[%c0_97, %c32_98], %72 {strides = array<i32>} : memref<128x288xf32, #tpu.memory_space<vmem>>, vector<128x32xf32>,
    %c0_99 = arith.constant 0 : index
    %c0_100 = arith.constant 0 : index
    %c2_101 = arith.constant 2 : index
    %c0_102 = arith.constant 0 : index
    %74 = vector.load %arg8[%c0_99, %c0_100, %c2_101, %c0_102] : memref<2x10x10x32xf32, #tpu.memory_space<vmem>>, vector<2x8x8x32xf32>
    %75 = vector.shape_cast %74 : vector<2x8x8x32xf32> to vector<128x32xf32>
    %c0_103 = arith.constant 0 : index
    %c64_104 = arith.constant 64 : index
    %76 = vector.load %arg9[%c0_103, %c64_104] : memref<128x288xf32, #tpu.memory_space<vmem>>, vector<128x32xf32>
    tpu.vector_store %arg9[%c0_103, %c64_104], %75 {strides = array<i32>} : memref<128x288xf32, #tpu.memory_space<vmem>>, vector<128x32xf32>,
    %c0_105 = arith.constant 0 : index
    %c1_106 = arith.constant 1 : index
    %c0_107 = arith.constant 0 : index
    %c0_108 = arith.constant 0 : index
    %77 = vector.load %arg8[%c0_105, %c1_106, %c0_107, %c0_108] : memref<2x10x10x32xf32, #tpu.memory_space<vmem>>, vector<2x8x8x32xf32>
    %78 = vector.shape_cast %77 : vector<2x8x8x32xf32> to vector<128x32xf32>
    %c0_109 = arith.constant 0 : index
    %c96_110 = arith.constant 96 : index
    %79 = vector.load %arg9[%c0_109, %c96_110] : memref<128x288xf32, #tpu.memory_space<vmem>>, vector<128x32xf32>
    tpu.vector_store %arg9[%c0_109, %c96_110], %78 {strides = array<i32>} : memref<128x288xf32, #tpu.memory_space<vmem>>, vector<128x32xf32>,
    %c0_111 = arith.constant 0 : index
    %c1_112 = arith.constant 1 : index
    %c1_113 = arith.constant 1 : index
    %c0_114 = arith.constant 0 : index
    %80 = vector.load %arg8[%c0_111, %c1_112, %c1_113, %c0_114] : memref<2x10x10x32xf32, #tpu.memory_space<vmem>>, vector<2x8x8x32xf32>
    %81 = vector.shape_cast %80 : vector<2x8x8x32xf32> to vector<128x32xf32>
    %c0_115 = arith.constant 0 : index
    %c128_116 = arith.constant 128 : index
    %82 = vector.load %arg9[%c0_115, %c128_116] : memref<128x288xf32, #tpu.memory_space<vmem>>, vector<128x32xf32>
    tpu.vector_store %arg9[%c0_115, %c128_116], %81 {strides = array<i32>} : memref<128x288xf32, #tpu.memory_space<vmem>>, vector<128x32xf32>,
    %c0_117 = arith.constant 0 : index
    %c1_118 = arith.constant 1 : index
    %c2_119 = arith.constant 2 : index
    %c0_120 = arith.constant 0 : index
    %83 = vector.load %arg8[%c0_117, %c1_118, %c2_119, %c0_120] : memref<2x10x10x32xf32, #tpu.memory_space<vmem>>, vector<2x8x8x32xf32>
    %84 = vector.shape_cast %83 : vector<2x8x8x32xf32> to vector<128x32xf32>
    %c0_121 = arith.constant 0 : index
    %c160_122 = arith.constant 160 : index
    %85 = vector.load %arg9[%c0_121, %c160_122] : memref<128x288xf32, #tpu.memory_space<vmem>>, vector<128x32xf32>
    tpu.vector_store %arg9[%c0_121, %c160_122], %84 {strides = array<i32>} : memref<128x288xf32, #tpu.memory_space<vmem>>, vector<128x32xf32>,
    %c0_123 = arith.constant 0 : index
    %c2_124 = arith.constant 2 : index
    %c0_125 = arith.constant 0 : index
    %c0_126 = arith.constant 0 : index
    %86 = vector.load %arg8[%c0_123, %c2_124, %c0_125, %c0_126] : memref<2x10x10x32xf32, #tpu.memory_space<vmem>>, vector<2x8x8x32xf32>
    %87 = vector.shape_cast %86 : vector<2x8x8x32xf32> to vector<128x32xf32>
    %c0_127 = arith.constant 0 : index
    %c192_128 = arith.constant 192 : index
    %88 = vector.load %arg9[%c0_127, %c192_128] : memref<128x288xf32, #tpu.memory_space<vmem>>, vector<128x32xf32>
    tpu.vector_store %arg9[%c0_127, %c192_128], %87 {strides = array<i32>} : memref<128x288xf32, #tpu.memory_space<vmem>>, vector<128x32xf32>,
    %c0_129 = arith.constant 0 : index
    %c2_130 = arith.constant 2 : index
    %c1_131 = arith.constant 1 : index
    %c0_132 = arith.constant 0 : index
    %89 = vector.load %arg8[%c0_129, %c2_130, %c1_131, %c0_132] : memref<2x10x10x32xf32, #tpu.memory_space<vmem>>, vector<2x8x8x32xf32>
    %90 = vector.shape_cast %89 : vector<2x8x8x32xf32> to vector<128x32xf32>
    %c0_133 = arith.constant 0 : index
    %c224_134 = arith.constant 224 : index
    %91 = vector.load %arg9[%c0_133, %c224_134] : memref<128x288xf32, #tpu.memory_space<vmem>>, vector<128x32xf32>
    tpu.vector_store %arg9[%c0_133, %c224_134], %90 {strides = array<i32>} : memref<128x288xf32, #tpu.memory_space<vmem>>, vector<128x32xf32>,
    %c0_135 = arith.constant 0 : index
    %c2_136 = arith.constant 2 : index
    %c2_137 = arith.constant 2 : index
    %c0_138 = arith.constant 0 : index
    %92 = vector.load %arg8[%c0_135, %c2_136, %c2_137, %c0_138] : memref<2x10x10x32xf32, #tpu.memory_space<vmem>>, vector<2x8x8x32xf32>
    %93 = vector.shape_cast %92 : vector<2x8x8x32xf32> to vector<128x32xf32>
    %c0_139 = arith.constant 0 : index
    %c256_140 = arith.constant 256 : index
    %94 = vector.load %arg9[%c0_139, %c256_140] : memref<128x288xf32, #tpu.memory_space<vmem>>, vector<128x32xf32>
    tpu.vector_store %arg9[%c0_139, %c256_140], %93 {strides = array<i32>} : memref<128x288xf32, #tpu.memory_space<vmem>>, vector<128x32xf32>,
    %c0_141 = arith.constant 0 : index
    %c0_142 = arith.constant 0 : index
    %95 = vector.load %arg9[%c0_141, %c0_142] : memref<128x288xf32, #tpu.memory_space<vmem>>, vector<128x288xf32>
    %96 = arith.truncf %95 : vector<128x288xf32> to vector<128x288xbf16>
    %c0_143 = arith.constant 0 : index
    %c0_144 = arith.constant 0 : index
    %97 = vector.load %arg4[%c0_143, %c0_144] : memref<288x32xbf16, #tpu.memory_space<vmem>>, vector<288x32xbf16>
    %cst_145 = arith.constant dense<0.000000e+00> : vector<128x32xf32>
    %98 = tpu.matmul %96, %97, %cst_145 {dimension_numbers = #tpu.dot_dimension_numbers<[1], [0], [0], [1], [0, 0, 1, 1], [], []>} : vector<128x288xbf16>, vector<288x32xbf16>, vector<128x32xf32> -> vector<128x32xf32>
    %cst_146 = arith.constant dense<0.000000e+00> : vector<32xf32>
    %99 = vector.multi_reduction <add>, %98, %cst_146 [0] : vector<128x32xf32> to vector<32xf32>
    %100 = vector.shape_cast %99 : vector<32xf32> to vector<1x32xf32>
    %101 = arith.mulf %98, %98 : vector<128x32xf32>
    %cst_147 = arith.constant dense<0.000000e+00> : vector<32xf32>
    %102 = vector.multi_reduction <add>, %101, %cst_147 [0] : vector<128x32xf32> to vector<32xf32>
    %103 = vector.shape_cast %102 : vector<32xf32> to vector<1x32xf32>
    %cst_148 = arith.constant 7.812500e-03 : f32
    %104 = vector.broadcast %cst_148 : f32 to vector<1x32xf32>
    %105 = arith.mulf %100, %104 : vector<1x32xf32>
    %cst_149 = arith.constant 7.812500e-03 : f32
    %106 = vector.broadcast %cst_149 : f32 to vector<1x32xf32>
    %107 = arith.mulf %103, %106 : vector<1x32xf32>
    %108 = arith.mulf %105, %105 : vector<1x32xf32>
    %109 = arith.subf %107, %108 : vector<1x32xf32>
    %cst_150 = arith.constant 0.000000e+00 : f32
    %110 = vector.broadcast %cst_150 : f32 to vector<1x32xf32>
    %111 = arith.maximumf %109, %110 : vector<1x32xf32>
    %cst_151 = arith.constant 9.99999974E-6 : f32
    %112 = vector.broadcast %cst_151 : f32 to vector<1x32xf32>
    %113 = arith.addf %111, %112 : vector<1x32xf32>
    %114 = math.rsqrt %113 : vector<1x32xf32>
    %c0_152 = arith.constant 0 : index
    %c0_153 = arith.constant 0 : index
    %115 = vector.load %arg5[%c0_152, %c0_153] : memref<1x32xf32, #tpu.memory_space<vmem>>, vector<1x32xf32>
    %116 = arith.mulf %114, %115 : vector<1x32xf32>
    %c0_154 = arith.constant 0 : index
    %c0_155 = arith.constant 0 : index
    %117 = vector.load %arg6[%c0_154, %c0_155] : memref<1x32xf32, #tpu.memory_space<vmem>>, vector<1x32xf32>
    %118 = arith.mulf %105, %116 : vector<1x32xf32>
    %119 = arith.subf %117, %118 : vector<1x32xf32>
    %120 = vector.broadcast %116 : vector<1x32xf32> to vector<128x32xf32>
    %121 = arith.mulf %98, %120 : vector<128x32xf32>
    %122 = vector.broadcast %119 : vector<1x32xf32> to vector<128x32xf32>
    %123 = arith.addf %121, %122 : vector<128x32xf32>
    %c0_156 = arith.constant 0 : index
    %c0_157 = arith.constant 0 : index
    %c0_158 = arith.constant 0 : index
    %c0_159 = arith.constant 0 : index
    %124 = vector.load %arg0[%c0_156, %c0_157, %c0_158, %c0_159] : memref<2x8x8x32xf32, #tpu.memory_space<vmem>>, vector<2x8x8x32xf32>
    %125 = vector.shape_cast %124 : vector<2x8x8x32xf32> to vector<128x32xf32>
    %126 = arith.addf %123, %125 : vector<128x32xf32>
    %cst_160 = arith.constant 0.000000e+00 : f32
    %127 = vector.broadcast %cst_160 : f32 to vector<128x32xf32>
    %128 = arith.maximumf %126, %127 : vector<128x32xf32>
    %129 = vector.shape_cast %128 : vector<128x32xf32> to vector<2x8x8x32xf32>
    %c0_161 = arith.constant 0 : index
    %c0_162 = arith.constant 0 : index
    %c0_163 = arith.constant 0 : index
    %c0_164 = arith.constant 0 : index
    %130 = vector.load %arg7[%c0_161, %c0_162, %c0_163, %c0_164] : memref<2x8x8x32xf32, #tpu.memory_space<vmem>>, vector<2x8x8x32xf32>
    tpu.vector_store %arg7[%c0_161, %c0_162, %c0_163, %c0_164], %129 {strides = array<i32>} : memref<2x8x8x32xf32, #tpu.memory_space<vmem>>, vector<2x8x8x32xf32>,
    return
  }
}

</mosaic_0001>

<llo_original>
// kernel: tpu_custom_call.1
$region0: #{tpu_custom_call.1}
  #allocation0 [shape = 'u32[]', space=smem, size = 0x4, offset = 0x4, fixed_abs, tag = 'smem constant byte address 0x4 - core index']
  #allocation1 [shape = 'u32[144,128]{1,0:T(1,128)}', space=vmem, size = 0x12000, scoped, tag = 'internal scratch']
  #allocation2 [shape = 'f32[2,10,10,32]{3,2,1,0:T(8,128)}', space=vmem, size = 0x28000, scoped, tag = 'scratch operand']
  #allocation3 [shape = 'f32[128,288]{1,0:T(8,128)}', space=vmem, size = 0x30000, scoped, tag = 'scratch operand']
  %s0 = inlined_call_operand.vmem [shape: f32[2,8,8,32], index: 0, kind: input, shape index: {}]
  %s1 = inlined_call_operand.vmem [shape: bf16[288,32], index: 1, kind: input, shape index: {}]
  %s2 = inlined_call_operand.vmem [shape: f32[1,32], index: 2, kind: input, shape index: {}]
  %s3 = inlined_call_operand.vmem [shape: f32[1,32], index: 3, kind: input, shape index: {}]
  %s4 = inlined_call_operand.vmem [shape: bf16[288,32], index: 4, kind: input, shape index: {}]
  %s5 = inlined_call_operand.vmem [shape: f32[1,32], index: 5, kind: input, shape index: {}]
  %s6 = inlined_call_operand.vmem [shape: f32[1,32], index: 6, kind: input, shape index: {}]
  %s7 = inlined_call_operand.hbm [shape: f32[2,8,8,32], index: 7, kind: output, shape index: {}]
  %s8 = sld [smem:[#allocation0]]
  $region38: #{tpu_custom_call.1} parent=0
    _
  %s10 = ssub.s32 1, %s8
  %s11 = scalar_select 0, %s10, %s8
  $region1: #{tpu_custom_call.1} parent=0
    #allocation4 [shape = 'u8[65536]{0}', space=vmem, size = 0x10000, scoped, tag = 'output window, operand 0, single buffered']
    #allocation5 [shape = 's32[1]{0}', space=sflag, size = 0x4, scoped, tag = 'scoped memory for tpu_custom_call.1']
    %12 = vsyncpa [#allocation5], 0
    // Predicated region
    $region2: #{tpu_custom_call.1} parent=1 // pred_check
      _
    $region3: #{tpu_custom_call.1} parent=1 // pred_check_branch
      %14 = sbr.rel (0) target = $region5
    $region4: #{tpu_custom_call.1} parent=1 // pred_region
      _
    $region5: #{tpu_custom_call.1} parent=1 // pred_fallthru
      _
    // Predicated region
    $region6: #{tpu_custom_call.1} parent=1 // pred_check
      _
    $region7: #{tpu_custom_call.1} parent=1 // pred_check_branch
      %16 = sbr.rel (0) target = $region9
    $region8: #{tpu_custom_call.1} parent=1 // pred_region
      _
    $region9: #{tpu_custom_call.1} parent=1 // pred_fallthru
      _
    // Predicated region
    $region10: #{tpu_custom_call.1} parent=1 // pred_check
      _
    $region11: #{tpu_custom_call.1} parent=1 // pred_check_branch
      %18 = sbr.rel (0) target = $region13
    $region12: #{tpu_custom_call.1} parent=1 // pred_region
      _
    $region13: #{tpu_custom_call.1} parent=1 // pred_fallthru
      _
    // Predicated region
    $region14: #{tpu_custom_call.1} parent=1 // pred_check
      _
    $region15: #{tpu_custom_call.1} parent=1 // pred_check_branch
      %20 = sbr.rel (0) target = $region17
    $region16: #{tpu_custom_call.1} parent=1 // pred_region
      _
    $region17: #{tpu_custom_call.1} parent=1 // pred_fallthru
      _
    // Predicated region
    $region18: #{tpu_custom_call.1} parent=1 // pred_check
      _
    $region19: #{tpu_custom_call.1} parent=1 // pred_check_branch
      %22 = sbr.rel (0) target = $region21
    $region20: #{tpu_custom_call.1} parent=1 // pred_region
      _
    $region21: #{tpu_custom_call.1} parent=1 // pred_fallthru
      _
    // Predicated region
    $region22: #{tpu_custom_call.1} parent=1 // pred_check
      _
    $region23: #{tpu_custom_call.1} parent=1 // pred_check_branch
      %24 = sbr.rel (0) target = $region25
    $region24: #{tpu_custom_call.1} parent=1 // pred_region
      _
    $region25: #{tpu_custom_call.1} parent=1 // pred_fallthru
      _
    // Predicated region
    $region26: #{tpu_custom_call.1} parent=1 // pred_check
      _
    $region27: #{tpu_custom_call.1} parent=1 // pred_check_branch
      %26 = sbr.rel (0) target = $region29
    $region28: #{tpu_custom_call.1} parent=1 // pred_region
      _
    $region29: #{tpu_custom_call.1} parent=1 // pred_fallthru
      _
    %vm28 = vcmask 261120
    %29 = vst.msk [vmem:[#allocation2] sm:$0xff] %vm28, 0.0
    %vm30 = vcmask 254976
    %31 = vst.msk [vmem:[#allocation2 + $0x8] sm:$0x3] %vm30, 0.0
    %32 = vst.msk [vmem:[#allocation2 + $0xa0] sm:$0xff] %vm28, 0.0
    %33 = vst.msk [vmem:[#allocation2 + $0xa8] sm:$0x3] %vm30, 0.0
    %s34 = scalar_lea.vmem [#allocation2], 144
    %35 = vst.msk [vmem:[%s34] sm:$0xff] %vm28, 0.0
    %36 = vst.msk [vmem:[%s34 + $0x8] sm:$0x3] %vm30, 0.0
    %37 = vst.msk [vmem:[%s34 + $0xa0] sm:$0xff] %vm28, 0.0
    %38 = vst.msk [vmem:[%s34 + $0xa8] sm:$0x3] %vm30, 0.0
    %vm39 = vcmask 253952
    %40 = vst.msk [vmem:[#allocation2] sm:$0x1] %vm39, 0.0
    %41 = vst.msk [vmem:[#allocation2 + $0x10] sm:$0x1] %vm39, 0.0
    %42 = vst.msk [vmem:[#allocation2 + $0x20] sm:$0x1] %vm39, 0.0
    %43 = vst.msk [vmem:[#allocation2 + $0x30] sm:$0x1] %vm39, 0.0
    %44 = vst.msk [vmem:[#allocation2 + $0x40] sm:$0x1] %vm39, 0.0
    %45 = vst.msk [vmem:[#allocation2 + $0x50] sm:$0x1] %vm39, 0.0
    %46 = vst.msk [vmem:[#allocation2 + $0x60] sm:$0x1] %vm39, 0.0
    %47 = vst.msk [vmem:[#allocation2 + $0x70] sm:$0x1] %vm39, 0.0
    %48 = vst.msk [vmem:[#allocation2 + $0x80] sm:$0x1] %vm39, 0.0
    %49 = vst.msk [vmem:[#allocation2 + $0x90] sm:$0x1] %vm39, 0.0
    %50 = vst.msk [vmem:[#allocation2 + $0xa0] sm:$0x1] %vm39, 0.0
    %51 = vst.msk [vmem:[#allocation2 + $0xb0] sm:$0x1] %vm39, 0.0
    %52 = vst.msk [vmem:[#allocation2 + $0xc0] sm:$0x1] %vm39, 0.0
    %53 = vst.msk [vmem:[#allocation2 + $0xd0] sm:$0x1] %vm39, 0.0
    %54 = vst.msk [vmem:[#allocation2 + $0xe0] sm:$0x1] %vm39, 0.0
    %55 = vst.msk [vmem:[#allocation2 + $0xf0] sm:$0x1] %vm39, 0.0
    %56 = vst.msk [vmem:[#allocation2 + $0x100] sm:$0x1] %vm39, 0.0
    %57 = vst.msk [vmem:[#allocation2 + $0x110] sm:$0x1] %vm39, 0.0
    %58 = vst.msk [vmem:[#allocation2 + $0x120] sm:$0x1] %vm39, 0.0
    %59 = vst.msk [vmem:[#allocation2 + $0x130] sm:$0x1] %vm39, 0.0
    %60 = vst.msk [vmem:[#allocation2 + $0x9] sm:$0x1] %vm39, 0.0
    %61 = vst.msk [vmem:[#allocation2 + $0x19] sm:$0x1] %vm39, 0.0
    %62 = vst.msk [vmem:[#allocation2 + $0x29] sm:$0x1] %vm39, 0.0
    %63 = vst.msk [vmem:[#allocation2 + $0x39] sm:$0x1] %vm39, 0.0
    %64 = vst.msk [vmem:[#allocation2 + $0x49] sm:$0x1] %vm39, 0.0
    %65 = vst.msk [vmem:[#allocation2 + $0x59] sm:$0x1] %vm39, 0.0
    %66 = vst.msk [vmem:[#allocation2 + $0x69] sm:$0x1] %vm39, 0.0
    %67 = vst.msk [vmem:[#allocation2 + $0x79] sm:$0x1] %vm39, 0.0
    %68 = vst.msk [vmem:[#allocation2 + $0x89] sm:$0x1] %vm39, 0.0
    %69 = vst.msk [vmem:[#allocation2 + $0x99] sm:$0x1] %vm39, 0.0
    %70 = vst.msk [vmem:[#allocation2 + $0xa9] sm:$0x1] %vm39, 0.0
    %71 = vst.msk [vmem:[#allocation2 + $0xb9] sm:$0x1] %vm39, 0.0
    %72 = vst.msk [vmem:[#allocation2 + $0xc9] sm:$0x1] %vm39, 0.0
    %73 = vst.msk [vmem:[#allocation2 + $0xd9] sm:$0x1] %vm39, 0.0
    %74 = vst.msk [vmem:[#allocation2 + $0xe9] sm:$0x1] %vm39, 0.0
    %75 = vst.msk [vmem:[#allocation2 + $0xf9] sm:$0x1] %vm39, 0.0
    %76 = vst.msk [vmem:[#allocation2 + $0x109] sm:$0x1] %vm39, 0.0
    %77 = vst.msk [vmem:[#allocation2 + $0x119] sm:$0x1] %vm39, 0.0
    %78 = vst.msk [vmem:[#allocation2 + $0x129] sm:$0x1] %vm39, 0.0
    %79 = vst.msk [vmem:[#allocation2 + $0x139] sm:$0x1] %vm39, 0.0
    %v80 = vld [vmem:[%s0] sm:$0xff]
    %v81 = vld [vmem:[%s0 + $0x8] sm:$0xff]
    %v82 = vld [vmem:[%s0 + $0x10] sm:$0xff]
    %v83 = vld [vmem:[%s0 + $0x18] sm:$0xff]
    %v84 = vld [vmem:[%s0 + $0x20] sm:$0xff]
    %v85 = vld [vmem:[%s0 + $0x28] sm:$0xff]
    %v86 = vld [vmem:[%s0 + $0x30] sm:$0xff]
    %v87 = vld [vmem:[%s0 + $0x38] sm:$0xff]
    %v88 = vld [vmem:[%s0 + $0x40] sm:$0xff]
    %v89 = vld [vmem:[%s0 + $0x48] sm:$0xff]
    %v90 = vld [vmem:[%s0 + $0x50] sm:$0xff]
    %v91 = vld [vmem:[%s0 + $0x58] sm:$0xff]
    %v92 = vld [vmem:[%s0 + $0x60] sm:$0xff]
    %v93 = vld [vmem:[%s0 + $0x68] sm:$0xff]
    %v94 = vld [vmem:[%s0 + $0x70] sm:$0xff]
    %v95 = vld [vmem:[%s0 + $0x78] sm:$0xff]
    %s96 = scalar_lea.vmem [#allocation2], 16
    %97 = vst.msk [vmem:[%s96 + $0x1] sm:$0xff] %vm28, %v80
    %98 = vst.msk [vmem:[%s96 + $0x11] sm:$0xff] %vm28, %v81
    %99 = vst.msk [vmem:[%s96 + $0x21] sm:$0xff] %vm28, %v82
    %100 = vst.msk [vmem:[%s96 + $0x31] sm:$0xff] %vm28, %v83
    %101 = vst.msk [vmem:[%s96 + $0x41] sm:$0xff] %vm28, %v84
    %102 = vst.msk [vmem:[%s96 + $0x51] sm:$0xff] %vm28, %v85
    %103 = vst.msk [vmem:[%s96 + $0x61] sm:$0xff] %vm28, %v86
    %104 = vst.msk [vmem:[%s96 + $0x71] sm:$0xff] %vm28, %v87
    %105 = vst.msk [vmem:[%s96 + $0xa1] sm:$0xff] %vm28, %v88
    %106 = vst.msk [vmem:[%s96 + $0xb1] sm:$0xff] %vm28, %v89
    %107 = vst.msk [vmem:[%s96 + $0xc1] sm:$0xff] %vm28, %v90
    %108 = vst.msk [vmem:[%s96 + $0xd1] sm:$0xff] %vm28, %v91
    %109 = vst.msk [vmem:[%s96 + $0xe1] sm:$0xff] %vm28, %v92
    %110 = vst.msk [vmem:[%s96 + $0xf1] sm:$0xff] %vm28, %v93
    %111 = vst.msk [vmem:[%s96 + $0x101] sm:$0xff] %vm28, %v94
    %112 = vst.msk [vmem:[%s96 + $0x111] sm:$0xff] %vm28, %v95
    %v113 = vld [vmem:[#allocation2] sm:$0xff]
    %v114 = vld [vmem:[#allocation2 + $0x10] sm:$0xff]
    %v115 = vld [vmem:[#allocation2 + $0x20] sm:$0xff]
    %v116 = vld [vmem:[#allocation2 + $0x30] sm:$0xff]
    %v117 = vld [vmem:[#allocation2 + $0x40] sm:$0xff]
    %v118 = vld [vmem:[#allocation2 + $0x50] sm:$0xff]
    %v119 = vld [vmem:[#allocation2 + $0x60] sm:$0xff]
    %v120 = vld [vmem:[#allocation2 + $0x70] sm:$0xff]
    %v121 = vld [vmem:[#allocation2 + $0xa0] sm:$0xff]
    %v122 = vld [vmem:[#allocation2 + $0xb0] sm:$0xff]
    %v123 = vld [vmem:[#allocation2 + $0xc0] sm:$0xff]
    %v124 = vld [vmem:[#allocation2 + $0xd0] sm:$0xff]
    %v125 = vld [vmem:[#allocation2 + $0xe0] sm:$0xff]
    %v126 = vld [vmem:[#allocation2 + $0xf0] sm:$0xff]
    %v127 = vld [vmem:[#allocation2 + $0x100] sm:$0xff]
    %v128 = vld [vmem:[#allocation2 + $0x110] sm:$0xff]
    %129 = vst.msk [vmem:[#allocation3] sm:$0xff] %vm28, %v113
    %130 = vst.msk [vmem:[#allocation3 + $0x18] sm:$0xff] %vm28, %v114
    %131 = vst.msk [vmem:[#allocation3 + $0x30] sm:$0xff] %vm28, %v115
    %132 = vst.msk [vmem:[#allocation3 + $0x48] sm:$0xff] %vm28, %v116
    %133 = vst.msk [vmem:[#allocation3 + $0x60] sm:$0xff] %vm28, %v117
    %134 = vst.msk [vmem:[#allocation3 + $0x78] sm:$0xff] %vm28, %v118
    %135 = vst.msk [vmem:[#allocation3 + $0x90] sm:$0xff] %vm28, %v119
    %136 = vst.msk [vmem:[#allocation3 + $0xa8] sm:$0xff] %vm28, %v120
    %137 = vst.msk [vmem:[#allocation3 + $0xc0] sm:$0xff] %vm28, %v121
    %138 = vst.msk [vmem:[#allocation3 + $0xd8] sm:$0xff] %vm28, %v122
    %139 = vst.msk [vmem:[#allocation3 + $0xf0] sm:$0xff] %vm28, %v123
    %140 = vst.msk [vmem:[#allocation3 + $0x108] sm:$0xff] %vm28, %v124
    %141 = vst.msk [vmem:[#allocation3 + $0x120] sm:$0xff] %vm28, %v125
    %142 = vst.msk [vmem:[#allocation3 + $0x138] sm:$0xff] %vm28, %v126
    %143 = vst.msk [vmem:[#allocation3 + $0x150] sm:$0xff] %vm28, %v127
    %144 = vst.msk [vmem:[#allocation3 + $0x168] sm:$0xff] %vm28, %v128
    %v145 = vld [vmem:[#allocation2 + $0x1] sm:$0xff]
    %v146 = vld [vmem:[#allocation2 + $0x11] sm:$0xff]
    %v147 = vld [vmem:[#allocation2 + $0x21] sm:$0xff]
    %v148 = vld [vmem:[#allocation2 + $0x31] sm:$0xff]
    %v149 = vld [vmem:[#allocation2 + $0x41] sm:$0xff]
    %v150 = vld [vmem:[#allocation2 + $0x51] sm:$0xff]
    %v151 = vld [vmem:[#allocation2 + $0x61] sm:$0xff]
    %v152 = vld [vmem:[#allocation2 + $0x71] sm:$0xff]
    %v153 = vld [vmem:[#allocation2 + $0xa1] sm:$0xff]
    %v154 = vld [vmem:[#allocation2 + $0xb1] sm:$0xff]
    %v155 = vld [vmem:[#allocation2 + $0xc1] sm:$0xff]
    %v156 = vld [vmem:[#allocation2 + $0xd1] sm:$0xff]
    %v157 = vld [vmem:[#allocation2 + $0xe1] sm:$0xff]
    %v158 = vld [vmem:[#allocation2 + $0xf1] sm:$0xff]
    %v159 = vld [vmem:[#allocation2 + $0x101] sm:$0xff]
    %v160 = vld [vmem:[#allocation2 + $0x111] sm:$0xff]
    %177 = vrot.lane.b32.xlu0 %v145, 32
    %v178 = vpop.permute.xlu0 %177
    %179 = vrot.lane.b32.xlu0 %v146, 32
    %v180 = vpop.permute.xlu0 %179
    %181 = vrot.lane.b32.xlu0 %v147, 32
    %v182 = vpop.permute.xlu0 %181
    %183 = vrot.lane.b32.xlu0 %v148, 32
    %v184 = vpop.permute.xlu0 %183
    %185 = vrot.lane.b32.xlu0 %v149, 32
    %v186 = vpop.permute.xlu0 %185
    %187 = vrot.lane.b32.xlu0 %v150, 32
    %v188 = vpop.permute.xlu0 %187
    %189 = vrot.lane.b32.xlu0 %v151, 32
    %v190 = vpop.permute.xlu0 %189
    %191 = vrot.lane.b32.xlu0 %v152, 32
    %v192 = vpop.permute.xlu0 %191
    %193 = vrot.lane.b32.xlu0 %v153, 32
    %v194 = vpop.permute.xlu0 %193
    %195 = vrot.lane.b32.xlu0 %v154, 32
    %v196 = vpop.permute.xlu0 %195
    %197 = vrot.lane.b32.xlu0 %v155, 32
    %v198 = vpop.permute.xlu0 %197
    %199 = vrot.lane.b32.xlu0 %v156, 32
    %v200 = vpop.permute.xlu0 %199
    %201 = vrot.lane.b32.xlu0 %v157, 32
    %v202 = vpop.permute.xlu0 %201
    %203 = vrot.lane.b32.xlu0 %v158, 32
    %v204 = vpop.permute.xlu0 %203
    %205 = vrot.lane.b32.xlu0 %v159, 32
    %v206 = vpop.permute.xlu0 %205
    %207 = vrot.lane.b32.xlu0 %v160, 32
    %v208 = vpop.permute.xlu0 %207
    %vm225 = vcmask 523520
    %226 = vst.msk [vmem:[#allocation3] sm:$0xff] %vm225, %v178
    %227 = vst.msk [vmem:[#allocation3 + $0x18] sm:$0xff] %vm225, %v180
    %228 = vst.msk [vmem:[#allocation3 + $0x30] sm:$0xff] %vm225, %v182
    %229 = vst.msk [vmem:[#allocation3 + $0x48] sm:$0xff] %vm225, %v184
    %230 = vst.msk [vmem:[#allocation3 + $0x60] sm:$0xff] %vm225, %v186
    %231 = vst.msk [vmem:[#allocation3 + $0x78] sm:$0xff] %vm225, %v188
    %232 = vst.msk [vmem:[#allocation3 + $0x90] sm:$0xff] %vm225, %v190
    %233 = vst.msk [vmem:[#allocation3 + $0xa8] sm:$0xff] %vm225, %v192
    %234 = vst.msk [vmem:[#allocation3 + $0xc0] sm:$0xff] %vm225, %v194
    %235 = vst.msk [vmem:[#allocation3 + $0xd8] sm:$0xff] %vm225, %v196
    %236 = vst.msk [vmem:[#allocation3 + $0xf0] sm:$0xff] %vm225, %v198
    %237 = vst.msk [vmem:[#allocation3 + $0x108] sm:$0xff] %vm225, %v200
    %238 = vst.msk [vmem:[#allocation3 + $0x120] sm:$0xff] %vm225, %v202
    %239 = vst.msk [vmem:[#allocation3 + $0x138] sm:$0xff] %vm225, %v204
    %240 = vst.msk [vmem:[#allocation3 + $0x150] sm:$0xff] %vm225, %v206
    %241 = vst.msk [vmem:[#allocation3 + $0x168] sm:$0xff] %vm225, %v208
    %v242 = vld [vmem:[#allocation2 + $0x2] sm:$0xff]
    %v243 = vld [vmem:[#allocation2 + $0x12] sm:$0xff]
    %v244 = vld [vmem:[#allocation2 + $0x22] sm:$0xff]
    %v245 = vld [vmem:[#allocation2 + $0x32] sm:$0xff]
    %v246 = vld [vmem:[#allocation2 + $0x42] sm:$0xff]
    %v247 = vld [vmem:[#allocation2 + $0x52] sm:$0xff]
    %v248 = vld [vmem:[#allocation2 + $0x62] sm:$0xff]
    %v249 = vld [vmem:[#allocation2 + $0x72] sm:$0xff]
    %v250 = vld [vmem:[#allocation2 + $0xa2] sm:$0xff]
    %v251 = vld [vmem:[#allocation2 + $0xb2] sm:$0xff]
    %v252 = vld [vmem:[#allocation2 + $0xc2] sm:$0xff]
    %v253 = vld [vmem:[#allocation2 + $0xd2] sm:$0xff]
    %v254 = vld [vmem:[#allocation2 + $0xe2] sm:$0xff]
    %v255 = vld [vmem:[#allocation2 + $0xf2] sm:$0xff]
    %v256 = vld [vmem:[#allocation2 + $0x102] sm:$0xff]
    %v257 = vld [vmem:[#allocation2 + $0x112] sm:$0xff]
    %274 = vrot.lane.b32.xlu0 %v242, 64
    %v275 = vpop.permute.xlu0 %274
    %276 = vrot.lane.b32.xlu0 %v243, 64
    %v277 = vpop.permute.xlu0 %276
    %278 = vrot.lane.b32.xlu0 %v244, 64
    %v279 = vpop.permute.xlu0 %278
    %280 = vrot.lane.b32.xlu0 %v245, 64
    %v281 = vpop.permute.xlu0 %280
    %282 = vrot.lane.b32.xlu0 %v246, 64
    %v283 = vpop.permute.xlu0 %282
    %284 = vrot.lane.b32.xlu0 %v247, 64
    %v285 = vpop.permute.xlu0 %284
    %286 = vrot.lane.b32.xlu0 %v248, 64
    %v287 = vpop.permute.xlu0 %286
    %288 = vrot.lane.b32.xlu0 %v249, 64
    %v289 = vpop.permute.xlu0 %288
    %290 = vrot.lane.b32.xlu0 %v250, 64
    %v291 = vpop.permute.xlu0 %290
    %292 = vrot.lane.b32.xlu0 %v251, 64
    %v293 = vpop.permute.xlu0 %292
    %294 = vrot.lane.b32.xlu0 %v252, 64
    %v295 = vpop.permute.xlu0 %294
    %296 = vrot.lane.b32.xlu0 %v253, 64
    %v297 = vpop.permute.xlu0 %296
    %298 = vrot.lane.b32.xlu0 %v254, 64
    %v299 = vpop.permute.xlu0 %298
    %300 = vrot.lane.b32.xlu0 %v255, 64
    %v301 = vpop.permute.xlu0 %300
    %302 = vrot.lane.b32.xlu0 %v256, 64
    %v303 = vpop.permute.xlu0 %302
    %304 = vrot.lane.b32.xlu0 %v257, 64
    %v305 = vpop.permute.xlu0 %304
    %vm322 = vcmask 785920
    %323 = vst.msk [vmem:[#allocation3] sm:$0xff] %vm322, %v275
    %324 = vst.msk [vmem:[#allocation3 + $0x18] sm:$0xff] %vm322, %v277
    %325 = vst.msk [vmem:[#allocation3 + $0x30] sm:$0xff] %vm322, %v279
    %326 = vst.msk [vmem:[#allocation3 + $0x48] sm:$0xff] %vm322, %v281
    %327 = vst.msk [vmem:[#allocation3 + $0x60] sm:$0xff] %vm322, %v283
    %328 = vst.msk [vmem:[#allocation3 + $0x78] sm:$0xff] %vm322, %v285
    %329 = vst.msk [vmem:[#allocation3 + $0x90] sm:$0xff] %vm322, %v287
    %330 = vst.msk [vmem:[#allocation3 + $0xa8] sm:$0xff] %vm322, %v289
    %331 = vst.msk [vmem:[#allocation3 + $0xc0] sm:$0xff] %vm322, %v291
    %332 = vst.msk [vmem:[#allocation3 + $0xd8] sm:$0xff] %vm322, %v293
    %333 = vst.msk [vmem:[#allocation3 + $0xf0] sm:$0xff] %vm322, %v295
    %334 = vst.msk [vmem:[#allocation3 + $0x108] sm:$0xff] %vm322, %v297
    %335 = vst.msk [vmem:[#allocation3 + $0x120] sm:$0xff] %vm322, %v299
    %336 = vst.msk [vmem:[#allocation3 + $0x138] sm:$0xff] %vm322, %v301
    %337 = vst.msk [vmem:[#allocation3 + $0x150] sm:$0xff] %vm322, %v303
    %338 = vst.msk [vmem:[#allocation3 + $0x168] sm:$0xff] %vm322, %v305
    %v339 = vld [vmem:[%s96] sm:$0xff]
    %v340 = vld [vmem:[%s96 + $0x10] sm:$0xff]
    %v341 = vld [vmem:[%s96 + $0x20] sm:$0xff]
    %v342 = vld [vmem:[%s96 + $0x30] sm:$0xff]
    %v343 = vld [vmem:[%s96 + $0x40] sm:$0xff]
    %v344 = vld [vmem:[%s96 + $0x50] sm:$0xff]
    %v345 = vld [vmem:[%s96 + $0x60] sm:$0xff]
    %v346 = vld [vmem:[%s96 + $0x70] sm:$0xff]
    %v347 = vld [vmem:[%s96 + $0xa0] sm:$0xff]
    %v348 = vld [vmem:[%s96 + $0xb0] sm:$0xff]
    %v349 = vld [vmem:[%s96 + $0xc0] sm:$0xff]
    %v350 = vld [vmem:[%s96 + $0xd0] sm:$0xff]
    %v351 = vld [vmem:[%s96 + $0xe0] sm:$0xff]
    %v352 = vld [vmem:[%s96 + $0xf0] sm:$0xff]
    %v353 = vld [vmem:[%s96 + $0x100] sm:$0xff]
    %v354 = vld [vmem:[%s96 + $0x110] sm:$0xff]
    %371 = vrot.lane.b32.xlu0 %v339, 96
    %v372 = vpop.permute.xlu0 %371
    %373 = vrot.lane.b32.xlu0 %v340, 96
    %v374 = vpop.permute.xlu0 %373
    %375 = vrot.lane.b32.xlu0 %v341, 96
    %v376 = vpop.permute.xlu0 %375
    %377 = vrot.lane.b32.xlu0 %v342, 96
    %v378 = vpop.permute.xlu0 %377
    %379 = vrot.lane.b32.xlu0 %v343, 96
    %v380 = vpop.permute.xlu0 %379
    %381 = vrot.lane.b32.xlu0 %v344, 96
    %v382 = vpop.permute.xlu0 %381
    %383 = vrot.lane.b32.xlu0 %v345, 96
    %v384 = vpop.permute.xlu0 %383
    %385 = vrot.lane.b32.xlu0 %v346, 96
    %v386 = vpop.permute.xlu0 %385
    %387 = vrot.lane.b32.xlu0 %v347, 96
    %v388 = vpop.permute.xlu0 %387
    %389 = vrot.lane.b32.xlu0 %v348, 96
    %v390 = vpop.permute.xlu0 %389
    %391 = vrot.lane.b32.xlu0 %v349, 96
    %v392 = vpop.permute.xlu0 %391
    %393 = vrot.lane.b32.xlu0 %v350, 96
    %v394 = vpop.permute.xlu0 %393
    %395 = vrot.lane.b32.xlu0 %v351, 96
    %v396 = vpop.permute.xlu0 %395
    %397 = vrot.lane.b32.xlu0 %v352, 96
    %v398 = vpop.permute.xlu0 %397
    %399 = vrot.lane.b32.xlu0 %v353, 96
    %v400 = vpop.permute.xlu0 %399
    %401 = vrot.lane.b32.xlu0 %v354, 96
    %v402 = vpop.permute.xlu0 %401
    %vm419 = vcmask 1048320
    %420 = vst.msk [vmem:[#allocation3] sm:$0xff] %vm419, %v372
    %421 = vst.msk [vmem:[#allocation3 + $0x18] sm:$0xff] %vm419, %v374
    %422 = vst.msk [vmem:[#allocation3 + $0x30] sm:$0xff] %vm419, %v376
    %423 = vst.msk [vmem:[#allocation3 + $0x48] sm:$0xff] %vm419, %v378
    %424 = vst.msk [vmem:[#allocation3 + $0x60] sm:$0xff] %vm419, %v380
    %425 = vst.msk [vmem:[#allocation3 + $0x78] sm:$0xff] %vm419, %v382
    %426 = vst.msk [vmem:[#allocation3 + $0x90] sm:$0xff] %vm419, %v384
    %427 = vst.msk [vmem:[#allocation3 + $0xa8] sm:$0xff] %vm419, %v386
    %428 = vst.msk [vmem:[#allocation3 + $0xc0] sm:$0xff] %vm419, %v388
    %429 = vst.msk [vmem:[#allocation3 + $0xd8] sm:$0xff] %vm419, %v390
    %430 = vst.msk [vmem:[#allocation3 + $0xf0] sm:$0xff] %vm419, %v392
    %431 = vst.msk [vmem:[#allocation3 + $0x108] sm:$0xff] %vm419, %v394
    %432 = vst.msk [vmem:[#allocation3 + $0x120] sm:$0xff] %vm419, %v396
    %433 = vst.msk [vmem:[#allocation3 + $0x138] sm:$0xff] %vm419, %v398
    %434 = vst.msk [vmem:[#allocation3 + $0x150] sm:$0xff] %vm419, %v400
    %435 = vst.msk [vmem:[#allocation3 + $0x168] sm:$0xff] %vm419, %v402
    %v436 = vld [vmem:[%s96 + $0x1] sm:$0xff]
    %v437 = vld [vmem:[%s96 + $0x11] sm:$0xff]
    %v438 = vld [vmem:[%s96 + $0x21] sm:$0xff]
    %v439 = vld [vmem:[%s96 + $0x31] sm:$0xff]
    %v440 = vld [vmem:[%s96 + $0x41] sm:$0xff]
    %v441 = vld [vmem:[%s96 + $0x51] sm:$0xff]
    %v442 = vld [vmem:[%s96 + $0x61] sm:$0xff]
    %v443 = vld [vmem:[%s96 + $0x71] sm:$0xff]
    %v444 = vld [vmem:[%s96 + $0xa1] sm:$0xff]
    %v445 = vld [vmem:[%s96 + $0xb1] sm:$0xff]
    %v446 = vld [vmem:[%s96 + $0xc1] sm:$0xff]
    %v447 = vld [vmem:[%s96 + $0xd1] sm:$0xff]
    %v448 = vld [vmem:[%s96 + $0xe1] sm:$0xff]
    %v449 = vld [vmem:[%s96 + $0xf1] sm:$0xff]
    %v450 = vld [vmem:[%s96 + $0x101] sm:$0xff]
    %v451 = vld [vmem:[%s96 + $0x111] sm:$0xff]
    %452 = vst.msk [vmem:[#allocation3 + $0x8] sm:$0xff] %vm28, %v436
    %453 = vst.msk [vmem:[#allocation3 + $0x20] sm:$0xff] %vm28, %v437
    %454 = vst.msk [vmem:[#allocation3 + $0x38] sm:$0xff] %vm28, %v438
    %455 = vst.msk [vmem:[#allocation3 + $0x50] sm:$0xff] %vm28, %v439
    %456 = vst.msk [vmem:[#allocation3 + $0x68] sm:$0xff] %vm28, %v440
    %457 = vst.msk [vmem:[#allocation3 + $0x80] sm:$0xff] %vm28, %v441
    %458 = vst.msk [vmem:[#allocation3 + $0x98] sm:$0xff] %vm28, %v442
    %459 = vst.msk [vmem:[#allocation3 + $0xb0] sm:$0xff] %vm28, %v443
    %460 = vst.msk [vmem:[#allocation3 + $0xc8] sm:$0xff] %vm28, %v444
    %461 = vst.msk [vmem:[#allocation3 + $0xe0] sm:$0xff] %vm28, %v445
    %462 = vst.msk [vmem:[#allocation3 + $0xf8] sm:$0xff] %vm28, %v446
    %463 = vst.msk [vmem:[#allocation3 + $0x110] sm:$0xff] %vm28, %v447
    %464 = vst.msk [vmem:[#allocation3 + $0x128] sm:$0xff] %vm28, %v448
    %465 = vst.msk [vmem:[#allocation3 + $0x140] sm:$0xff] %vm28, %v449
    %466 = vst.msk [vmem:[#allocation3 + $0x158] sm:$0xff] %vm28, %v450
    %467 = vst.msk [vmem:[#allocation3 + $0x170] sm:$0xff] %vm28, %v451
    %v468 = vld [vmem:[%s96 + $0x2] sm:$0xff]
    %v469 = vld [vmem:[%s96 + $0x12] sm:$0xff]
    %v470 = vld [vmem:[%s96 + $0x22] sm:$0xff]
    %v471 = vld [vmem:[%s96 + $0x32] sm:$0xff]
    %v472 = vld [vmem:[%s96 + $0x42] sm:$0xff]
    %v473 = vld [vmem:[%s96 + $0x52] sm:$0xff]
    %v474 = vld [vmem:[%s96 + $0x62] sm:$0xff]
    %v475 = vld [vmem:[%s96 + $0x72] sm:$0xff]
    %v476 = vld [vmem:[%s96 + $0xa2] sm:$0xff]
    %v477 = vld [vmem:[%s96 + $0xb2] sm:$0xff]
    %v478 = vld [vmem:[%s96 + $0xc2] sm:$0xff]
    %v479 = vld [vmem:[%s96 + $0xd2] sm:$0xff]
    %v480 = vld [vmem:[%s96 + $0xe2] sm:$0xff]
    %v481 = vld [vmem:[%s96 + $0xf2] sm:$0xff]
    %v482 = vld [vmem:[%s96 + $0x102] sm:$0xff]
    %v483 = vld [vmem:[%s96 + $0x112] sm:$0xff]
    %500 = vrot.lane.b32.xlu0 %v468, 32
    %v501 = vpop.permute.xlu0 %500
    %502 = vrot.lane.b32.xlu0 %v469, 32
    %v503 = vpop.permute.xlu0 %502
    %504 = vrot.lane.b32.xlu0 %v470, 32
    %v505 = vpop.permute.xlu0 %504
    %506 = vrot.lane.b32.xlu0 %v471, 32
    %v507 = vpop.permute.xlu0 %506
    %508 = vrot.lane.b32.xlu0 %v472, 32
    %v509 = vpop.permute.xlu0 %508
    %510 = vrot.lane.b32.xlu0 %v473, 32
    %v511 = vpop.permute.xlu0 %510
    %512 = vrot.lane.b32.xlu0 %v474, 32
    %v513 = vpop.permute.xlu0 %512
    %514 = vrot.lane.b32.xlu0 %v475, 32
    %v515 = vpop.permute.xlu0 %514
    %516 = vrot.lane.b32.xlu0 %v476, 32
    %v517 = vpop.permute.xlu0 %516
    %518 = vrot.lane.b32.xlu0 %v477, 32
    %v519 = vpop.permute.xlu0 %518
    %520 = vrot.lane.b32.xlu0 %v478, 32
    %v521 = vpop.permute.xlu0 %520
    %522 = vrot.lane.b32.xlu0 %v479, 32
    %v523 = vpop.permute.xlu0 %522
    %524 = vrot.lane.b32.xlu0 %v480, 32
    %v525 = vpop.permute.xlu0 %524
    %526 = vrot.lane.b32.xlu0 %v481, 32
    %v527 = vpop.permute.xlu0 %526
    %528 = vrot.lane.b32.xlu0 %v482, 32
    %v529 = vpop.permute.xlu0 %528
    %530 = vrot.lane.b32.xlu0 %v483, 32
    %v531 = vpop.permute.xlu0 %530
    %548 = vst.msk [vmem:[#allocation3 + $0x8] sm:$0xff] %vm225, %v501
    %549 = vst.msk [vmem:[#allocation3 + $0x20] sm:$0xff] %vm225, %v503
    %550 = vst.msk [vmem:[#allocation3 + $0x38] sm:$0xff] %vm225, %v505
    %551 = vst.msk [vmem:[#allocation3 + $0x50] sm:$0xff] %vm225, %v507
    %552 = vst.msk [vmem:[#allocation3 + $0x68] sm:$0xff] %vm225, %v509
    %553 = vst.msk [vmem:[#allocation3 + $0x80] sm:$0xff] %vm225, %v511
    %554 = vst.msk [vmem:[#allocation3 + $0x98] sm:$0xff] %vm225, %v513
    %555 = vst.msk [vmem:[#allocation3 + $0xb0] sm:$0xff] %vm225, %v515
    %556 = vst.msk [vmem:[#allocation3 + $0xc8] sm:$0xff] %vm225, %v517
    %557 = vst.msk [vmem:[#allocation3 + $0xe0] sm:$0xff] %vm225, %v519
    %558 = vst.msk [vmem:[#allocation3 + $0xf8] sm:$0xff] %vm225, %v521
    %559 = vst.msk [vmem:[#allocation3 + $0x110] sm:$0xff] %vm225, %v523
    %560 = vst.msk [vmem:[#allocation3 + $0x128] sm:$0xff] %vm225, %v525
    %561 = vst.msk [vmem:[#allocation3 + $0x140] sm:$0xff] %vm225, %v527
    %562 = vst.msk [vmem:[#allocation3 + $0x158] sm:$0xff] %vm225, %v529
    %563 = vst.msk [vmem:[#allocation3 + $0x170] sm:$0xff] %vm225, %v531
    %s564 = scalar_lea.vmem [#allocation2], 32
    %v565 = vld [vmem:[%s564] sm:$0xff]
    %v566 = vld [vmem:[%s564 + $0x10] sm:$0xff]
    %v567 = vld [vmem:[%s564 + $0x20] sm:$0xff]
    %v568 = vld [vmem:[%s564 + $0x30] sm:$0xff]
    %v569 = vld [vmem:[%s564 + $0x40] sm:$0xff]
    %v570 = vld [vmem:[%s564 + $0x50] sm:$0xff]
    %v571 = vld [vmem:[%s564 + $0x60] sm:$0xff]
    %v572 = vld [vmem:[%s564 + $0x70] sm:$0xff]
    %v573 = vld [vmem:[%s564 + $0xa0] sm:$0xff]
    %v574 = vld [vmem:[%s564 + $0xb0] sm:$0xff]
    %v575 = vld [vmem:[%s564 + $0xc0] sm:$0xff]
    %v576 = vld [vmem:[%s564 + $0xd0] sm:$0xff]
    %v577 = vld [vmem:[%s564 + $0xe0] sm:$0xff]
    %v578 = vld [vmem:[%s564 + $0xf0] sm:$0xff]
    %v579 = vld [vmem:[%s564 + $0x100] sm:$0xff]
    %v580 = vld [vmem:[%s564 + $0x110] sm:$0xff]
    %597 = vrot.lane.b32.xlu0 %v565, 64
    %v598 = vpop.permute.xlu0 %597
    %599 = vrot.lane.b32.xlu0 %v566, 64
    %v600 = vpop.permute.xlu0 %599
    %601 = vrot.lane.b32.xlu0 %v567, 64
    %v602 = vpop.permute.xlu0 %601
    %603 = vrot.lane.b32.xlu0 %v568, 64
    %v604 = vpop.permute.xlu0 %603
    %605 = vrot.lane.b32.xlu0 %v569, 64
    %v606 = vpop.permute.xlu0 %605
    %607 = vrot.lane.b32.xlu0 %v570, 64
    %v608 = vpop.permute.xlu0 %607
    %609 = vrot.lane.b32.xlu0 %v571, 64
    %v610 = vpop.permute.xlu0 %609
    %611 = vrot.lane.b32.xlu0 %v572, 64
    %v612 = vpop.permute.xlu0 %611
    %613 = vrot.lane.b32.xlu0 %v573, 64
    %v614 = vpop.permute.xlu0 %613
    %615 = vrot.lane.b32.xlu0 %v574, 64
    %v616 = vpop.permute.xlu0 %615
    %617 = vrot.lane.b32.xlu0 %v575, 64
    %v618 = vpop.permute.xlu0 %617
    %619 = vrot.lane.b32.xlu0 %v576, 64
    %v620 = vpop.permute.xlu0 %619
    %621 = vrot.lane.b32.xlu0 %v577, 64
    %v622 = vpop.permute.xlu0 %621
    %623 = vrot.lane.b32.xlu0 %v578, 64
    %v624 = vpop.permute.xlu0 %623
    %625 = vrot.lane.b32.xlu0 %v579, 64
    %v626 = vpop.permute.xlu0 %625
    %627 = vrot.lane.b32.xlu0 %v580, 64
    %v628 = vpop.permute.xlu0 %627
    %645 = vst.msk [vmem:[#allocation3 + $0x8] sm:$0xff] %vm322, %v598
    %646 = vst.msk [vmem:[#allocation3 + $0x20] sm:$0xff] %vm322, %v600
    %647 = vst.msk [vmem:[#allocation3 + $0x38] sm:$0xff] %vm322, %v602
    %648 = vst.msk [vmem:[#allocation3 + $0x50] sm:$0xff] %vm322, %v604
    %649 = vst.msk [vmem:[#allocation3 + $0x68] sm:$0xff] %vm322, %v606
    %650 = vst.msk [vmem:[#allocation3 + $0x80] sm:$0xff] %vm322, %v608
    %651 = vst.msk [vmem:[#allocation3 + $0x98] sm:$0xff] %vm322, %v610
    %652 = vst.msk [vmem:[#allocation3 + $0xb0] sm:$0xff] %vm322, %v612
    %653 = vst.msk [vmem:[#allocation3 + $0xc8] sm:$0xff] %vm322, %v614
    %654 = vst.msk [vmem:[#allocation3 + $0xe0] sm:$0xff] %vm322, %v616
    %655 = vst.msk [vmem:[#allocation3 + $0xf8] sm:$0xff] %vm322, %v618
    %656 = vst.msk [vmem:[#allocation3 + $0x110] sm:$0xff] %vm322, %v620
    %657 = vst.msk [vmem:[#allocation3 + $0x128] sm:$0xff] %vm322, %v622
    %658 = vst.msk [vmem:[#allocation3 + $0x140] sm:$0xff] %vm322, %v624
    %659 = vst.msk [vmem:[#allocation3 + $0x158] sm:$0xff] %vm322, %v626
    %660 = vst.msk [vmem:[#allocation3 + $0x170] sm:$0xff] %vm322, %v628
    %v661 = vld [vmem:[%s564 + $0x1] sm:$0xff]
    %v662 = vld [vmem:[%s564 + $0x11] sm:$0xff]
    %v663 = vld [vmem:[%s564 + $0x21] sm:$0xff]
    %v664 = vld [vmem:[%s564 + $0x31] sm:$0xff]
    %v665 = vld [vmem:[%s564 + $0x41] sm:$0xff]
    %v666 = vld [vmem:[%s564 + $0x51] sm:$0xff]
    %v667 = vld [vmem:[%s564 + $0x61] sm:$0xff]
    %v668 = vld [vmem:[%s564 + $0x71] sm:$0xff]
    %v669 = vld [vmem:[%s564 + $0xa1] sm:$0xff]
    %v670 = vld [vmem:[%s564 + $0xb1] sm:$0xff]
    %v671 = vld [vmem:[%s564 + $0xc1] sm:$0xff]
    %v672 = vld [vmem:[%s564 + $0xd1] sm:$0xff]
    %v673 = vld [vmem:[%s564 + $0xe1] sm:$0xff]
    %v674 = vld [vmem:[%s564 + $0xf1] sm:$0xff]
    %v675 = vld [vmem:[%s564 + $0x101] sm:$0xff]
    %v676 = vld [vmem:[%s564 + $0x111] sm:$0xff]
    %693 = vrot.lane.b32.xlu0 %v661, 96
    %v694 = vpop.permute.xlu0 %693
    %695 = vrot.lane.b32.xlu0 %v662, 96
    %v696 = vpop.permute.xlu0 %695
    %697 = vrot.lane.b32.xlu0 %v663, 96
    %v698 = vpop.permute.xlu0 %697
    %699 = vrot.lane.b32.xlu0 %v664, 96
    %v700 = vpop.permute.xlu0 %699
    %701 = vrot.lane.b32.xlu0 %v665, 96
    %v702 = vpop.permute.xlu0 %701
    %703 = vrot.lane.b32.xlu0 %v666, 96
    %v704 = vpop.permute.xlu0 %703
    %705 = vrot.lane.b32.xlu0 %v667, 96
    %v706 = vpop.permute.xlu0 %705
    %707 = vrot.lane.b32.xlu0 %v668, 96
    %v708 = vpop.permute.xlu0 %707
    %709 = vrot.lane.b32.xlu0 %v669, 96
    %v710 = vpop.permute.xlu0 %709
    %711 = vrot.lane.b32.xlu0 %v670, 96
    %v712 = vpop.permute.xlu0 %711
    %713 = vrot.lane.b32.xlu0 %v671, 96
    %v714 = vpop.permute.xlu0 %713
    %715 = vrot.lane.b32.xlu0 %v672, 96
    %v716 = vpop.permute.xlu0 %715
    %717 = vrot.lane.b32.xlu0 %v673, 96
    %v718 = vpop.permute.xlu0 %717
    %719 = vrot.lane.b32.xlu0 %v674, 96
    %v720 = vpop.permute.xlu0 %719
    %721 = vrot.lane.b32.xlu0 %v675, 96
    %v722 = vpop.permute.xlu0 %721
    %723 = vrot.lane.b32.xlu0 %v676, 96
    %v724 = vpop.permute.xlu0 %723
    %741 = vst.msk [vmem:[#allocation3 + $0x8] sm:$0xff] %vm419, %v694
    %742 = vst.msk [vmem:[#allocation3 + $0x20] sm:$0xff] %vm419, %v696
    %743 = vst.msk [vmem:[#allocation3 + $0x38] sm:$0xff] %vm419, %v698
    %744 = vst.msk [vmem:[#allocation3 + $0x50] sm:$0xff] %vm419, %v700
    %745 = vst.msk [vmem:[#allocation3 + $0x68] sm:$0xff] %vm419, %v702
    %746 = vst.msk [vmem:[#allocation3 + $0x80] sm:$0xff] %vm419, %v704
    %747 = vst.msk [vmem:[#allocation3 + $0x98] sm:$0xff] %vm419, %v706
    %748 = vst.msk [vmem:[#allocation3 + $0xb0] sm:$0xff] %vm419, %v708
    %749 = vst.msk [vmem:[#allocation3 + $0xc8] sm:$0xff] %vm419, %v710
    %750 = vst.msk [vmem:[#allocation3 + $0xe0] sm:$0xff] %vm419, %v712
    %751 = vst.msk [vmem:[#allocation3 + $0xf8] sm:$0xff] %vm419, %v714
    %752 = vst.msk [vmem:[#allocation3 + $0x110] sm:$0xff] %vm419, %v716
    %753 = vst.msk [vmem:[#allocation3 + $0x128] sm:$0xff] %vm419, %v718
    %754 = vst.msk [vmem:[#allocation3 + $0x140] sm:$0xff] %vm419, %v720
    %755 = vst.msk [vmem:[#allocation3 + $0x158] sm:$0xff] %vm419, %v722
    %756 = vst.msk [vmem:[#allocation3 + $0x170] sm:$0xff] %vm419, %v724
    %v757 = vld [vmem:[%s564 + $0x2] sm:$0xff]
    %v758 = vld [vmem:[%s564 + $0x12] sm:$0xff]
    %v759 = vld [vmem:[%s564 + $0x22] sm:$0xff]
    %v760 = vld [vmem:[%s564 + $0x32] sm:$0xff]
    %v761 = vld [vmem:[%s564 + $0x42] sm:$0xff]
    %v762 = vld [vmem:[%s564 + $0x52] sm:$0xff]
    %v763 = vld [vmem:[%s564 + $0x62] sm:$0xff]
    %v764 = vld [vmem:[%s564 + $0x72] sm:$0xff]
    %v765 = vld [vmem:[%s564 + $0xa2] sm:$0xff]
    %v766 = vld [vmem:[%s564 + $0xb2] sm:$0xff]
    %v767 = vld [vmem:[%s564 + $0xc2] sm:$0xff]
    %v768 = vld [vmem:[%s564 + $0xd2] sm:$0xff]
    %v769 = vld [vmem:[%s564 + $0xe2] sm:$0xff]
    %v770 = vld [vmem:[%s564 + $0xf2] sm:$0xff]
    %v771 = vld [vmem:[%s564 + $0x102] sm:$0xff]
    %v772 = vld [vmem:[%s564 + $0x112] sm:$0xff]
    %773 = vst.msk [vmem:[#allocation3 + $0x10] sm:$0xff] %vm28, %v757
    %774 = vst.msk [vmem:[#allocation3 + $0x28] sm:$0xff] %vm28, %v758
    %775 = vst.msk [vmem:[#allocation3 + $0x40] sm:$0xff] %vm28, %v759
    %776 = vst.msk [vmem:[#allocation3 + $0x58] sm:$0xff] %vm28, %v760
    %777 = vst.msk [vmem:[#allocation3 + $0x70] sm:$0xff] %vm28, %v761
    %778 = vst.msk [vmem:[#allocation3 + $0x88] sm:$0xff] %vm28, %v762
    %779 = vst.msk [vmem:[#allocation3 + $0xa0] sm:$0xff] %vm28, %v763
    %780 = vst.msk [vmem:[#allocation3 + $0xb8] sm:$0xff] %vm28, %v764
    %781 = vst.msk [vmem:[#allocation3 + $0xd0] sm:$0xff] %vm28, %v765
    %782 = vst.msk [vmem:[#allocation3 + $0xe8] sm:$0xff] %vm28, %v766
    %783 = vst.msk [vmem:[#allocation3 + $0x100] sm:$0xff] %vm28, %v767
    %784 = vst.msk [vmem:[#allocation3 + $0x118] sm:$0xff] %vm28, %v768
    %785 = vst.msk [vmem:[#allocation3 + $0x130] sm:$0xff] %vm28, %v769
    %786 = vst.msk [vmem:[#allocation3 + $0x148] sm:$0xff] %vm28, %v770
    %787 = vst.msk [vmem:[#allocation3 + $0x160] sm:$0xff] %vm28, %v771
    %788 = vst.msk [vmem:[#allocation3 + $0x178] sm:$0xff] %vm28, %v772
    %v789 = vld [vmem:[#allocation3] sm:$0xff]
    %v790 = vld [vmem:[#allocation3 + $0x8] sm:$0xff]
    %v791 = vld [vmem:[#allocation3 + $0x10] sm:$0xff]
    %v792 = vld [vmem:[#allocation3 + $0x18] sm:$0xff]
    %v793 = vld [vmem:[#allocation3 + $0x20] sm:$0xff]
    %v794 = vld [vmem:[#allocation3 + $0x28] sm:$0xff]
    %v795 = vld [vmem:[#allocation3 + $0x30] sm:$0xff]
    %v796 = vld [vmem:[#allocation3 + $0x38] sm:$0xff]
    %v797 = vld [vmem:[#allocation3 + $0x40] sm:$0xff]
    %v798 = vld [vmem:[#allocation3 + $0x48] sm:$0xff]
    %v799 = vld [vmem:[#allocation3 + $0x50] sm:$0xff]
    %v800 = vld [vmem:[#allocation3 + $0x58] sm:$0xff]
    %v801 = vld [vmem:[#allocation3 + $0x60] sm:$0xff]
    %v802 = vld [vmem:[#allocation3 + $0x68] sm:$0xff]
    %v803 = vld [vmem:[#allocation3 + $0x70] sm:$0xff]
    %v804 = vld [vmem:[#allocation3 + $0x78] sm:$0xff]
    %v805 = vld [vmem:[#allocation3 + $0x80] sm:$0xff]
    %v806 = vld [vmem:[#allocation3 + $0x88] sm:$0xff]
    %v807 = vld [vmem:[#allocation3 + $0x90] sm:$0xff]
    %v808 = vld [vmem:[#allocation3 + $0x98] sm:$0xff]
    %v809 = vld [vmem:[#allocation3 + $0xa0] sm:$0xff]
    %v810 = vld [vmem:[#allocation3 + $0xa8] sm:$0xff]
    %v811 = vld [vmem:[#allocation3 + $0xb0] sm:$0xff]
    %v812 = vld [vmem:[#allocation3 + $0xb8] sm:$0xff]
    %v813 = vld [vmem:[#allocation3 + $0xc0] sm:$0xff]
    %v814 = vld [vmem:[#allocation3 + $0xc8] sm:$0xff]
    %v815 = vld [vmem:[#allocation3 + $0xd0] sm:$0xff]
    %v816 = vld [vmem:[#allocation3 + $0xd8] sm:$0xff]
    %v817 = vld [vmem:[#allocation3 + $0xe0] sm:$0xff]
    %v818 = vld [vmem:[#allocation3 + $0xe8] sm:$0xff]
    %v819 = vld [vmem:[#allocation3 + $0xf0] sm:$0xff]
    %v820 = vld [vmem:[#allocation3 + $0xf8] sm:$0xff]
    %v821 = vld [vmem:[#allocation3 + $0x100] sm:$0xff]
    %v822 = vld [vmem:[#allocation3 + $0x108] sm:$0xff]
    %v823 = vld [vmem:[#allocation3 + $0x110] sm:$0xff]
    %v824 = vld [vmem:[#allocation3 + $0x118] sm:$0xff]
    %v825 = vld [vmem:[#allocation3 + $0x120] sm:$0xff]
    %v826 = vld [vmem:[#allocation3 + $0x128] sm:$0xff]
    %v827 = vld [vmem:[#allocation3 + $0x130] sm:$0xff]
    %v828 = vld [vmem:[#allocation3 + $0x138] sm:$0xff]
    %v829 = vld [vmem:[#allocation3 + $0x140] sm:$0xff]
    %v830 = vld [vmem:[#allocation3 + $0x148] sm:$0xff]
    %v831 = vld [vmem:[#allocation3 + $0x150] sm:$0xff]
    %v832 = vld [vmem:[#allocation3 + $0x158] sm:$0xff]
    %v833 = vld [vmem:[#allocation3 + $0x160] sm:$0xff]
    %v834 = vld [vmem:[#allocation3 + $0x168] sm:$0xff]
    %v835 = vld [vmem:[#allocation3 + $0x170] sm:$0xff]
    %v836 = vld [vmem:[#allocation3 + $0x178] sm:$0xff]
    %v837 = vpack.c.bf16 %v792, %v789
    %v838 = vpack.c.bf16 %v793, %v790
    %v839 = vpack.c.bf16 %v794, %v791
    %v840 = vpack.c.bf16 %v798, %v795
    %v841 = vpack.c.bf16 %v799, %v796
    %v842 = vpack.c.bf16 %v800, %v797
    %v843 = vpack.c.bf16 %v804, %v801
    %v844 = vpack.c.bf16 %v805, %v802
    %v845 = vpack.c.bf16 %v806, %v803
    %v846 = vpack.c.bf16 %v810, %v807
    %v847 = vpack.c.bf16 %v811, %v808
    %v848 = vpack.c.bf16 %v812, %v809
    %v849 = vpack.c.bf16 %v816, %v813
    %v850 = vpack.c.bf16 %v817, %v814
    %v851 = vpack.c.bf16 %v818, %v815
    %v852 = vpack.c.bf16 %v822, %v819
    %v853 = vpack.c.bf16 %v823, %v820
    %v854 = vpack.c.bf16 %v824, %v821
    %v855 = vpack.c.bf16 %v828, %v825
    %v856 = vpack.c.bf16 %v829, %v826
    %v857 = vpack.c.bf16 %v830, %v827
    %v858 = vpack.c.bf16 %v834, %v831
    %v859 = vpack.c.bf16 %v835, %v832
    %v860 = vpack.c.bf16 %v836, %v833
    %v861 = vld [vmem:[%s1] sm:$0xf]
    %v862 = vld [vmem:[%s1 + $0x4] sm:$0xf]
    %v863 = vld [vmem:[%s1 + $0x8] sm:$0xf]
    %v864 = vld [vmem:[%s1 + $0xc] sm:$0xf]
    %v865 = vld [vmem:[%s1 + $0x10] sm:$0xf]
    %v866 = vld [vmem:[%s1 + $0x14] sm:$0xf]
    %v867 = vld [vmem:[%s1 + $0x18] sm:$0xf]
    %v868 = vld [vmem:[%s1 + $0x1c] sm:$0xf]
    %v869 = vld [vmem:[%s1 + $0x20] sm:$0xf]
    %v870 = vld [vmem:[%s1 + $0x24] sm:$0xf]
    %v871 = vld [vmem:[%s1 + $0x28] sm:$0xf]
    %v872 = vld [vmem:[%s1 + $0x2c] sm:$0xf]
    %v873 = vld [vmem:[%s1 + $0x30] sm:$0xf]
    %v874 = vld [vmem:[%s1 + $0x34] sm:$0xf]
    %v875 = vld [vmem:[%s1 + $0x38] sm:$0xf]
    %v876 = vld [vmem:[%s1 + $0x3c] sm:$0xf]
    %v877 = vld [vmem:[%s1 + $0x40] sm:$0xf]
    %v878 = vld [vmem:[%s1 + $0x44] sm:$0xf]
    %v879 = vld [vmem:[%s1 + $0x48] sm:$0xf]
    %v880 = vld [vmem:[%s1 + $0x4c] sm:$0xf]
    %v881 = vld [vmem:[%s1 + $0x50] sm:$0xf]
    %v882 = vld [vmem:[%s1 + $0x54] sm:$0xf]
    %v883 = vld [vmem:[%s1 + $0x58] sm:$0xf]
    %v884 = vld [vmem:[%s1 + $0x5c] sm:$0xf]
    %v885 = vld [vmem:[%s1 + $0x60] sm:$0xf]
    %v886 = vld [vmem:[%s1 + $0x64] sm:$0xf]
    %v887 = vld [vmem:[%s1 + $0x68] sm:$0xf]
    %v888 = vld [vmem:[%s1 + $0x6c] sm:$0xf]
    %v889 = vld [vmem:[%s1 + $0x70] sm:$0xf]
    %v890 = vld [vmem:[%s1 + $0x74] sm:$0xf]
    %v891 = vld [vmem:[%s1 + $0x78] sm:$0xf]
    %v892 = vld [vmem:[%s1 + $0x7c] sm:$0xf]
    %v893 = vld [vmem:[%s1 + $0x80] sm:$0xf]
    %v894 = vld [vmem:[%s1 + $0x84] sm:$0xf]
    %v895 = vld [vmem:[%s1 + $0x88] sm:$0xf]
    %v896 = vld [vmem:[%s1 + $0x8c] sm:$0xf]
    %v933 = vunpack.c.l.b16 %v861
    %v934 = vunpack.c.l.b16 %v862
    %v935 = vunpack.c.l.b16 %v863
    %v936 = vunpack.c.l.b16 %v864
    %v937 = vunpack.c.l.b16 %v865
    %v938 = vunpack.c.l.b16 %v866
    %v939 = vunpack.c.l.b16 %v867
    %v940 = vunpack.c.l.b16 %v868
    %v941 = vunpack.c.l.b16 %v869
    %v942 = vunpack.c.l.b16 %v870
    %v943 = vunpack.c.l.b16 %v871
    %v944 = vunpack.c.l.b16 %v872
    %v945 = vunpack.c.l.b16 %v873
    %v946 = vunpack.c.l.b16 %v874
    %v947 = vunpack.c.l.b16 %v875
    %v948 = vunpack.c.l.b16 %v876
    %v949 = vunpack.c.l.b16 %v877
    %v950 = vunpack.c.l.b16 %v878
    %v951 = vunpack.c.l.b16 %v879
    %v952 = vunpack.c.l.b16 %v880
    %v953 = vunpack.c.l.b16 %v881
    %v954 = vunpack.c.l.b16 %v882
    %v955 = vunpack.c.l.b16 %v883
    %v956 = vunpack.c.l.b16 %v884
    %v957 = vunpack.c.l.b16 %v885
    %v958 = vunpack.c.l.b16 %v886
    %v959 = vunpack.c.l.b16 %v887
    %v960 = vunpack.c.l.b16 %v888
    %v961 = vunpack.c.l.b16 %v889
    %v962 = vunpack.c.l.b16 %v890
    %v963 = vunpack.c.l.b16 %v891
    %v964 = vunpack.c.l.b16 %v892
    %v965 = vunpack.c.l.b16 %v893
    %v966 = vunpack.c.l.b16 %v894
    %v967 = vunpack.c.l.b16 %v895
    %v968 = vunpack.c.l.b16 %v896
    %v969 = vpack.c.b16 %v934, %v933
    %v970 = vpack.c.b16 %v936, %v935
    %v971 = vpack.c.b16 %v938, %v937
    %v972 = vpack.c.b16 %v940, %v939
    %v973 = vpack.c.b16 %v942, %v941
    %v974 = vpack.c.b16 %v944, %v943
    %v975 = vpack.c.b16 %v946, %v945
    %v976 = vpack.c.b16 %v948, %v947
    %v977 = vpack.c.b16 %v950, %v949
    %v978 = vpack.c.b16 %v952, %v951
    %v979 = vpack.c.b16 %v954, %v953
    %v980 = vpack.c.b16 %v956, %v955
    %v981 = vpack.c.b16 %v958, %v957
    %v982 = vpack.c.b16 %v960, %v959
    %v983 = vpack.c.b16 %v962, %v961
    %v984 = vpack.c.b16 %v964, %v963
    %v985 = vpack.c.b16 %v966, %v965
    %v986 = vpack.c.b16 %v968, %v967
    %v1006 = vsel %vm28, %v839, 0
    %v1009 = vsel %vm28, %v842, 0
    %v1012 = vsel %vm28, %v845, 0
    %v1015 = vsel %vm28, %v848, 0
    %v1018 = vsel %vm28, %v851, 0
    %v1021 = vsel %vm28, %v854, 0
    %v1024 = vsel %vm28, %v857, 0
    %v1027 = vsel %vm28, %v860, 0
    %1029 = vmatprep.subr.bf16.mxu0 0
    %1030 = vmatpush1.bf16.msra.mxu0 %v976
    %1031 = vmatprep.subr.bf16.mxu0 0
    %1032 = vmatpush1.bf16.msra.mxu0 %v975
    %1033 = vmatprep.subr.bf16.mxu0 0
    %1034 = vmatpush1.bf16.msra.mxu0 %v974
    %1035 = vmatprep.subr.bf16.mxu0 0
    %1036 = vmatpush1.bf16.msra.mxu0 %v973
    %1037 = vmatprep.subr.bf16.mxu0 0
    %1038 = vmatpush1.bf16.msra.mxu0 %v972
    %1039 = vmatprep.subr.bf16.mxu0 0
    %1040 = vmatpush1.bf16.msra.mxu0 %v971
    %1041 = vmatprep.subr.bf16.mxu0 0
    %1042 = vmatpush1.bf16.msra.mxu0 %v970
    %1043 = vmatprep.subr.bf16.mxu0 0
    %1044 = vmatpush1.bf16.msra.mxu0 %v969
    %1045 = vmatprep.subr.bf16.mxu0 0
    %1046 = vmatpush2.bf16.msra.mxu0 %v984
    %1047 = vmatprep.subr.bf16.mxu0 0
    %1048 = vmatpush2.bf16.msra.mxu0 %v983
    %1049 = vmatprep.subr.bf16.mxu0 0
    %1050 = vmatpush2.bf16.msra.mxu0 %v982
    %1051 = vmatprep.subr.bf16.mxu0 0
    %1052 = vmatpush2.bf16.msra.mxu0 %v981
    %1053 = vmatprep.subr.bf16.mxu0 0
    %1054 = vmatpush2.bf16.msra.mxu0 %v980
    %1055 = vmatprep.subr.bf16.mxu0 0
    %1056 = vmatpush2.bf16.msra.mxu0 %v979
    %1057 = vmatprep.subr.bf16.mxu0 0
    %1058 = vmatpush2.bf16.msra.mxu0 %v978
    %1059 = vmatprep.subr.bf16.mxu0 0
    %1060 = vmatpush2.bf16.msra.mxu0 %v977
    %1061 = vmatprep.mubr.bf16.mxu0 %v838
    %1062 = vmatmul.mubr.bf16.gmra.mxu0 %v837
    %v1063 = vpop.f32.mrf.mxu0
    %v1064 = vadd.f32 0.0, %v1063
    %v1065 = vpop.f32.mrf.mxu0
    %v1066 = vpop.f32.mrf.mxu0
    %v1067 = vadd.f32 0.0, %v1066
    %v1068 = vpop.f32.mrf.mxu0
    %1069 = vmatprep.mubr.bf16.mxu0 %v841
    %1070 = vmatmul.mubr.bf16.gmra.mxu0 %v840
    %v1071 = vpop.f32.mrf.mxu0
    %v1072 = vadd.f32 0.0, %v1071
    %v1073 = vpop.f32.mrf.mxu0
    %v1074 = vpop.f32.mrf.mxu0
    %v1075 = vadd.f32 0.0, %v1074
    %v1076 = vpop.f32.mrf.mxu0
    %1077 = vmatprep.mubr.bf16.mxu0 %v844
    %1078 = vmatmul.mubr.bf16.gmra.mxu0 %v843
    %v1079 = vpop.f32.mrf.mxu0
    %v1080 = vadd.f32 0.0, %v1079
    %v1081 = vpop.f32.mrf.mxu0
    %v1082 = vpop.f32.mrf.mxu0
    %v1083 = vadd.f32 0.0, %v1082
    %v1084 = vpop.f32.mrf.mxu0
    %1085 = vmatprep.mubr.bf16.mxu0 %v847
    %1086 = vmatmul.mubr.bf16.gmra.mxu0 %v846
    %v1087 = vpop.f32.mrf.mxu0
    %v1088 = vadd.f32 0.0, %v1087
    %v1089 = vpop.f32.mrf.mxu0
    %v1090 = vpop.f32.mrf.mxu0
    %v1091 = vadd.f32 0.0, %v1090
    %v1092 = vpop.f32.mrf.mxu0
    %1093 = vmatprep.mubr.bf16.mxu0 %v850
    %1094 = vmatmul.mubr.bf16.gmra.mxu0 %v849
    %v1095 = vpop.f32.mrf.mxu0
    %v1096 = vadd.f32 0.0, %v1095
    %v1097 = vpop.f32.mrf.mxu0
    %v1098 = vpop.f32.mrf.mxu0
    %v1099 = vadd.f32 0.0, %v1098
    %v1100 = vpop.f32.mrf.mxu0
    %1101 = vmatprep.mubr.bf16.mxu0 %v853
    %1102 = vmatmul.mubr.bf16.gmra.mxu0 %v852
    %v1103 = vpop.f32.mrf.mxu0
    %v1104 = vadd.f32 0.0, %v1103
    %v1105 = vpop.f32.mrf.mxu0
    %v1106 = vpop.f32.mrf.mxu0
    %v1107 = vadd.f32 0.0, %v1106
    %v1108 = vpop.f32.mrf.mxu0
    %1109 = vmatprep.mubr.bf16.mxu0 %v856
    %1110 = vmatmul.mubr.bf16.gmra.mxu0 %v855
    %v1111 = vpop.f32.mrf.mxu0
    %v1112 = vadd.f32 0.0, %v1111
    %v1113 = vpop.f32.mrf.mxu0
    %v1114 = vpop.f32.mrf.mxu0
    %v1115 = vadd.f32 0.0, %v1114
    %v1116 = vpop.f32.mrf.mxu0
    %1117 = vmatprep.mubr.bf16.mxu0 %v859
    %1118 = vmatmul.mubr.bf16.gmra.mxu0 %v858
    %v1119 = vpop.f32.mrf.mxu0
    %v1120 = vadd.f32 0.0, %v1119
    %v1121 = vpop.f32.mrf.mxu0
    %v1122 = vpop.f32.mrf.mxu0
    %v1123 = vadd.f32 0.0, %v1122
    %v1124 = vpop.f32.mrf.mxu0
    %1125 = vdwg.mxu0
    %1126 = vmatprep.subr.bf16.mxu0 0
    %1127 = vmatpush1.bf16.msra.mxu0 0
    %1128 = vmatprep.subr.bf16.mxu0 0
    %1129 = vmatpush1.bf16.msra.mxu0 0
    %1130 = vmatprep.subr.bf16.mxu0 0
    %1131 = vmatpush1.bf16.msra.mxu0 0
    %1132 = vmatprep.subr.bf16.mxu0 0
    %1133 = vmatpush1.bf16.msra.mxu0 0
    %1134 = vmatprep.subr.bf16.mxu0 0
    %1135 = vmatpush1.bf16.msra.mxu0 0
    %1136 = vmatprep.subr.bf16.mxu0 0
    %1137 = vmatpush1.bf16.msra.mxu0 0
    %1138 = vmatprep.subr.bf16.mxu0 0
    %1139 = vmatpush1.bf16.msra.mxu0 %v986
    %1140 = vmatprep.subr.bf16.mxu0 0
    %1141 = vmatpush1.bf16.msra.mxu0 %v985
    %1142 = vmatprep.subr.bf16.mxu0 0
    %1143 = vmatpush2.bf16.msra.mxu0 0
    %1144 = vmatprep.subr.bf16.mxu0 0
    %1145 = vmatpush2.bf16.msra.mxu0 0
    %1146 = vmatprep.subr.bf16.mxu0 0
    %1147 = vmatpush2.bf16.msra.mxu0 0
    %1148 = vmatprep.subr.bf16.mxu0 0
    %1149 = vmatpush2.bf16.msra.mxu0 0
    %1150 = vmatprep.subr.bf16.mxu0 0
    %1151 = vmatpush2.bf16.msra.mxu0 0
    %1152 = vmatprep.subr.bf16.mxu0 0
    %1153 = vmatpush2.bf16.msra.mxu0 0
    %1154 = vmatprep.subr.bf16.mxu0 0
    %1155 = vmatpush2.bf16.msra.mxu0 0
    %1156 = vmatprep.subr.bf16.mxu0 0
    %1157 = vmatpush2.bf16.msra.mxu0 0
    %1158 = vmatprep.mubr.bf16.mxu0 0
    %1159 = vmatmul.mubr.bf16.gmra.mxu0 %v1006
    %v1160 = vpop.f32.mrf.mxu0
    %v1161 = vadd.f32 %v1064, %v1160
    %v1162 = vpop.f32.mrf.mxu0
    %v1163 = vpop.f32.mrf.mxu0
    %v1164 = vadd.f32 %v1067, %v1163
    %v1165 = vpop.f32.mrf.mxu0
    %1166 = vmatprep.mubr.bf16.mxu0 0
    %1167 = vmatmul.mubr.bf16.gmra.mxu0 %v1009
    %v1168 = vpop.f32.mrf.mxu0
    %v1169 = vadd.f32 %v1072, %v1168
    %v1170 = vpop.f32.mrf.mxu0
    %v1171 = vpop.f32.mrf.mxu0
    %v1172 = vadd.f32 %v1075, %v1171
    %v1173 = vpop.f32.mrf.mxu0
    %1174 = vmatprep.mubr.bf16.mxu0 0
    %1175 = vmatmul.mubr.bf16.gmra.mxu0 %v1012
    %v1176 = vpop.f32.mrf.mxu0
    %v1177 = vadd.f32 %v1080, %v1176
    %v1178 = vpop.f32.mrf.mxu0
    %v1179 = vpop.f32.mrf.mxu0
    %v1180 = vadd.f32 %v1083, %v1179
    %v1181 = vpop.f32.mrf.mxu0
    %1182 = vmatprep.mubr.bf16.mxu0 0
    %1183 = vmatmul.mubr.bf16.gmra.mxu0 %v1015
    %v1184 = vpop.f32.mrf.mxu0
    %v1185 = vadd.f32 %v1088, %v1184
    %v1186 = vpop.f32.mrf.mxu0
    %v1187 = vpop.f32.mrf.mxu0
    %v1188 = vadd.f32 %v1091, %v1187
    %v1189 = vpop.f32.mrf.mxu0
    %1190 = vmatprep.mubr.bf16.mxu0 0
    %1191 = vmatmul.mubr.bf16.gmra.mxu0 %v1018
    %v1192 = vpop.f32.mrf.mxu0
    %v1193 = vadd.f32 %v1096, %v1192
    %v1194 = vpop.f32.mrf.mxu0
    %v1195 = vpop.f32.mrf.mxu0
    %v1196 = vadd.f32 %v1099, %v1195
    %v1197 = vpop.f32.mrf.mxu0
    %1198 = vmatprep.mubr.bf16.mxu0 0
    %1199 = vmatmul.mubr.bf16.gmra.mxu0 %v1021
    %v1200 = vpop.f32.mrf.mxu0
    %v1201 = vadd.f32 %v1104, %v1200
    %v1202 = vpop.f32.mrf.mxu0
    %v1203 = vpop.f32.mrf.mxu0
    %v1204 = vadd.f32 %v1107, %v1203
    %v1205 = vpop.f32.mrf.mxu0
    %1206 = vmatprep.mubr.bf16.mxu0 0
    %1207 = vmatmul.mubr.bf16.gmra.mxu0 %v1024
    %v1208 = vpop.f32.mrf.mxu0
    %v1209 = vadd.f32 %v1112, %v1208
    %v1210 = vpop.f32.mrf.mxu0
    %v1211 = vpop.f32.mrf.mxu0
    %v1212 = vadd.f32 %v1115, %v1211
    %v1213 = vpop.f32.mrf.mxu0
    %1214 = vmatprep.mubr.bf16.mxu0 0
    %1215 = vmatmul.mubr.bf16.gmra.mxu0 %v1027
    %v1216 = vpop.f32.mrf.mxu0
    %v1217 = vadd.f32 %v1120, %v1216
    %v1218 = vpop.f32.mrf.mxu0
    %v1219 = vpop.f32.mrf.mxu0
    %v1220 = vadd.f32 %v1123, %v1219
    %v1221 = vpop.f32.mrf.mxu0
    %1222 = vdwg.mxu0
    %v1223 = vsel %vm28, %v1161, 0.0
    %v1224 = vsel %vm28, %v1164, 0.0
    %v1225 = vadd.f32 %v1223, %v1224
    %v1226 = vsel %vm28, %v1169, 0.0
    %v1227 = vadd.f32 %v1225, %v1226
    %v1228 = vsel %vm28, %v1172, 0.0
    %v1229 = vadd.f32 %v1227, %v1228
    %v1230 = vsel %vm28, %v1177, 0.0
    %v1231 = vadd.f32 %v1229, %v1230
    %v1232 = vsel %vm28, %v1180, 0.0
    %v1233 = vadd.f32 %v1231, %v1232
    %v1234 = vsel %vm28, %v1185, 0.0
    %v1235 = vadd.f32 %v1233, %v1234
    %v1236 = vsel %vm28, %v1188, 0.0
    %v1237 = vadd.f32 %v1235, %v1236
    %v1238 = vsel %vm28, %v1193, 0.0
    %v1239 = vadd.f32 %v1237, %v1238
    %v1240 = vsel %vm28, %v1196, 0.0
    %v1241 = vadd.f32 %v1239, %v1240
    %v1242 = vsel %vm28, %v1201, 0.0
    %v1243 = vadd.f32 %v1241, %v1242
    %v1244 = vsel %vm28, %v1204, 0.0
    %v1245 = vadd.f32 %v1243, %v1244
    %v1246 = vsel %vm28, %v1209, 0.0
    %v1247 = vadd.f32 %v1245, %v1246
    %v1248 = vsel %vm28, %v1212, 0.0
    %v1249 = vadd.f32 %v1247, %v1248
    %v1250 = vsel %vm28, %v1217, 0.0
    %v1251 = vadd.f32 %v1249, %v1250
    %v1252 = vsel %vm28, %v1220, 0.0
    %v1253 = vadd.f32 %v1251, %v1252
    %v1254 = vrot.slane %v1253, 4
    %v1255 = vadd.f32 %v1253, %v1254
    %v1256 = vrot.slane %v1255, 2
    %v1257 = vadd.f32 %v1255, %v1256
    %v1258 = vrot.slane %v1257, 1
    %v1259 = vadd.f32 %v1257, %v1258
    %v1260 = vmul.f32 %v1161, %v1161
    %v1261 = vmul.f32 %v1164, %v1164
    %v1262 = vmul.f32 %v1169, %v1169
    %v1263 = vmul.f32 %v1172, %v1172
    %v1264 = vmul.f32 %v1177, %v1177
    %v1265 = vmul.f32 %v1180, %v1180
    %v1266 = vmul.f32 %v1185, %v1185
    %v1267 = vmul.f32 %v1188, %v1188
    %v1268 = vmul.f32 %v1193, %v1193
    %v1269 = vmul.f32 %v1196, %v1196
    %v1270 = vmul.f32 %v1201, %v1201
    %v1271 = vmul.f32 %v1204, %v1204
    %v1272 = vmul.f32 %v1209, %v1209
    %v1273 = vmul.f32 %v1212, %v1212
    %v1274 = vmul.f32 %v1217, %v1217
    %v1275 = vmul.f32 %v1220, %v1220
    %v1276 = vsel %vm28, %v1260, 0.0
    %v1277 = vsel %vm28, %v1261, 0.0
    %v1278 = vadd.f32 %v1276, %v1277
    %v1279 = vsel %vm28, %v1262, 0.0
    %v1280 = vadd.f32 %v1278, %v1279
    %v1281 = vsel %vm28, %v1263, 0.0
    %v1282 = vadd.f32 %v1280, %v1281
    %v1283 = vsel %vm28, %v1264, 0.0
    %v1284 = vadd.f32 %v1282, %v1283
    %v1285 = vsel %vm28, %v1265, 0.0
    %v1286 = vadd.f32 %v1284, %v1285
    %v1287 = vsel %vm28, %v1266, 0.0
    %v1288 = vadd.f32 %v1286, %v1287
    %v1289 = vsel %vm28, %v1267, 0.0
    %v1290 = vadd.f32 %v1288, %v1289
    %v1291 = vsel %vm28, %v1268, 0.0
    %v1292 = vadd.f32 %v1290, %v1291
    %v1293 = vsel %vm28, %v1269, 0.0
    %v1294 = vadd.f32 %v1292, %v1293
    %v1295 = vsel %vm28, %v1270, 0.0
    %v1296 = vadd.f32 %v1294, %v1295
    %v1297 = vsel %vm28, %v1271, 0.0
    %v1298 = vadd.f32 %v1296, %v1297
    %v1299 = vsel %vm28, %v1272, 0.0
    %v1300 = vadd.f32 %v1298, %v1299
    %v1301 = vsel %vm28, %v1273, 0.0
    %v1302 = vadd.f32 %v1300, %v1301
    %v1303 = vsel %vm28, %v1274, 0.0
    %v1304 = vadd.f32 %v1302, %v1303
    %v1305 = vsel %vm28, %v1275, 0.0
    %v1306 = vadd.f32 %v1304, %v1305
    %v1307 = vrot.slane %v1306, 4
    %v1308 = vadd.f32 %v1306, %v1307
    %v1309 = vrot.slane %v1308, 2
    %v1310 = vadd.f32 %v1308, %v1309
    %v1311 = vrot.slane %v1310, 1
    %v1312 = vadd.f32 %v1310, %v1311
    %v1313 = vmul.f32 %v1259, 0.0078125
    %v1314 = vmul.f32 %v1312, 0.0078125
    %v1315 = vmul.f32 %v1313, %v1313
    %v1316 = vsub.f32 %v1314, %v1315
    %v1317 = vmax.f32 %v1316, 0.0
    %v1318 = vadd.f32 %v1317, 1e-05
    %v1319 = vrsqrt.pop %v1318
    %v1320 = vld [vmem:[%s2] sm:$0x1]
    %v1321 = vmul.f32 %v1319, %v1320
    %v1322 = vld [vmem:[%s3] sm:$0x1]
    %v1323 = vmul.f32 %v1313, %v1321
    %v1324 = vsub.f32 %v1322, %v1323
    %v1325 = vlaneseq
    %v1326 = vshrl.u32 %v1325, 7
    %v1327 = vsub.s32 0, %v1326
    %v1328 = vrot.slane %v1321, %v1327
    %v1329 = vmul.f32 %v1161, %v1328
    %v1330 = vmul.f32 %v1164, %v1328
    %v1331 = vmul.f32 %v1169, %v1328
    %v1332 = vmul.f32 %v1172, %v1328
    %v1333 = vmul.f32 %v1177, %v1328
    %v1334 = vmul.f32 %v1180, %v1328
    %v1335 = vmul.f32 %v1185, %v1328
    %v1336 = vmul.f32 %v1188, %v1328
    %v1337 = vmul.f32 %v1193, %v1328
    %v1338 = vmul.f32 %v1196, %v1328
    %v1339 = vmul.f32 %v1201, %v1328
    %v1340 = vmul.f32 %v1204, %v1328
    %v1341 = vmul.f32 %v1209, %v1328
    %v1342 = vmul.f32 %v1212, %v1328
    %v1343 = vmul.f32 %v1217, %v1328
    %v1344 = vmul.f32 %v1220, %v1328
    %v1346 = vlaneseq
    %v1347 = vshrl.u32 %v1346, 7
    %v1348 = vsub.s32 0, %v1347
    %v1349 = vrot.slane %v1324, %v1348
    %v1351 = vadd.f32 %v1329, %v1349
    %v1352 = vadd.f32 %v1330, %v1349
    %v1353 = vadd.f32 %v1331, %v1349
    %v1354 = vadd.f32 %v1332, %v1349
    %v1355 = vadd.f32 %v1333, %v1349
    %v1356 = vadd.f32 %v1334, %v1349
    %v1357 = vadd.f32 %v1335, %v1349
    %v1358 = vadd.f32 %v1336, %v1349
    %v1359 = vadd.f32 %v1337, %v1349
    %v1360 = vadd.f32 %v1338, %v1349
    %v1361 = vadd.f32 %v1339, %v1349
    %v1362 = vadd.f32 %v1340, %v1349
    %v1363 = vadd.f32 %v1341, %v1349
    %v1364 = vadd.f32 %v1342, %v1349
    %v1365 = vadd.f32 %v1343, %v1349
    %v1366 = vadd.f32 %v1344, %v1349
    %v1367 = vmax.f32 %v1351, 0.0
    %v1368 = vmax.f32 %v1352, 0.0
    %v1369 = vmax.f32 %v1353, 0.0
    %v1370 = vmax.f32 %v1354, 0.0
    %v1371 = vmax.f32 %v1355, 0.0
    %v1372 = vmax.f32 %v1356, 0.0
    %v1373 = vmax.f32 %v1357, 0.0
    %v1374 = vmax.f32 %v1358, 0.0
    %v1375 = vmax.f32 %v1359, 0.0
    %v1376 = vmax.f32 %v1360, 0.0
    %v1377 = vmax.f32 %v1361, 0.0
    %v1378 = vmax.f32 %v1362, 0.0
    %v1379 = vmax.f32 %v1363, 0.0
    %v1380 = vmax.f32 %v1364, 0.0
    %v1381 = vmax.f32 %v1365, 0.0
    %v1382 = vmax.f32 %v1366, 0.0
    %1383 = vst.msk [vmem:[%s96 + $0x1] sm:$0xff] %vm28, %v1367
    %1384 = vst.msk [vmem:[%s96 + $0x11] sm:$0xff] %vm28, %v1368
    %1385 = vst.msk [vmem:[%s96 + $0x21] sm:$0xff] %vm28, %v1369
    %1386 = vst.msk [vmem:[%s96 + $0x31] sm:$0xff] %vm28, %v1370
    %1387 = vst.msk [vmem:[%s96 + $0x41] sm:$0xff] %vm28, %v1371
    %1388 = vst.msk [vmem:[%s96 + $0x51] sm:$0xff] %vm28, %v1372
    %1389 = vst.msk [vmem:[%s96 + $0x61] sm:$0xff] %vm28, %v1373
    %1390 = vst.msk [vmem:[%s96 + $0x71] sm:$0xff] %vm28, %v1374
    %1391 = vst.msk [vmem:[%s96 + $0xa1] sm:$0xff] %vm28, %v1375
    %1392 = vst.msk [vmem:[%s96 + $0xb1] sm:$0xff] %vm28, %v1376
    %1393 = vst.msk [vmem:[%s96 + $0xc1] sm:$0xff] %vm28, %v1377
    %1394 = vst.msk [vmem:[%s96 + $0xd1] sm:$0xff] %vm28, %v1378
    %1395 = vst.msk [vmem:[%s96 + $0xe1] sm:$0xff] %vm28, %v1379
    %1396 = vst.msk [vmem:[%s96 + $0xf1] sm:$0xff] %vm28, %v1380
    %1397 = vst.msk [vmem:[%s96 + $0x101] sm:$0xff] %vm28, %v1381
    %1398 = vst.msk [vmem:[%s96 + $0x111] sm:$0xff] %vm28, %v1382
    %v1399 = vld [vmem:[#allocation2] sm:$0xff]
    %v1400 = vld [vmem:[#allocation2 + $0x10] sm:$0xff]
    %v1401 = vld [vmem:[#allocation2 + $0x20] sm:$0xff]
    %v1402 = vld [vmem:[#allocation2 + $0x30] sm:$0xff]
    %v1403 = vld [vmem:[#allocation2 + $0x40] sm:$0xff]
    %v1404 = vld [vmem:[#allocation2 + $0x50] sm:$0xff]
    %v1405 = vld [vmem:[#allocation2 + $0x60] sm:$0xff]
    %v1406 = vld [vmem:[#allocation2 + $0x70] sm:$0xff]
    %v1407 = vld [vmem:[#allocation2 + $0xa0] sm:$0xff]
    %v1408 = vld [vmem:[#allocation2 + $0xb0] sm:$0xff]
    %v1409 = vld [vmem:[#allocation2 + $0xc0] sm:$0xff]
    %v1410 = vld [vmem:[#allocation2 + $0xd0] sm:$0xff]
    %v1411 = vld [vmem:[#allocation2 + $0xe0] sm:$0xff]
    %v1412 = vld [vmem:[#allocation2 + $0xf0] sm:$0xff]
    %v1413 = vld [vmem:[#allocation2 + $0x100] sm:$0xff]
    %v1414 = vld [vmem:[#allocation2 + $0x110] sm:$0xff]
    %1415 = vst.msk [vmem:[#allocation3] sm:$0xff] %vm28, %v1399
    %1416 = vst.msk [vmem:[#allocation3 + $0x18] sm:$0xff] %vm28, %v1400
    %1417 = vst.msk [vmem:[#allocation3 + $0x30] sm:$0xff] %vm28, %v1401
    %1418 = vst.msk [vmem:[#allocation3 + $0x48] sm:$0xff] %vm28, %v1402
    %1419 = vst.msk [vmem:[#allocation3 + $0x60] sm:$0xff] %vm28, %v1403
    %1420 = vst.msk [vmem:[#allocation3 + $0x78] sm:$0xff] %vm28, %v1404
    %1421 = vst.msk [vmem:[#allocation3 + $0x90] sm:$0xff] %vm28, %v1405
    %1422 = vst.msk [vmem:[#allocation3 + $0xa8] sm:$0xff] %vm28, %v1406
    %1423 = vst.msk [vmem:[#allocation3 + $0xc0] sm:$0xff] %vm28, %v1407
    %1424 = vst.msk [vmem:[#allocation3 + $0xd8] sm:$0xff] %vm28, %v1408
    %1425 = vst.msk [vmem:[#allocation3 + $0xf0] sm:$0xff] %vm28, %v1409
    %1426 = vst.msk [vmem:[#allocation3 + $0x108] sm:$0xff] %vm28, %v1410
    %1427 = vst.msk [vmem:[#allocation3 + $0x120] sm:$0xff] %vm28, %v1411
    %1428 = vst.msk [vmem:[#allocation3 + $0x138] sm:$0xff] %vm28, %v1412
    %1429 = vst.msk [vmem:[#allocation3 + $0x150] sm:$0xff] %vm28, %v1413
    %1430 = vst.msk [vmem:[#allocation3 + $0x168] sm:$0xff] %vm28, %v1414
    %v1431 = vld [vmem:[#allocation2 + $0x1] sm:$0xff]
    %v1432 = vld [vmem:[#allocation2 + $0x11] sm:$0xff]
    %v1433 = vld [vmem:[#allocation2 + $0x21] sm:$0xff]
    %v1434 = vld [vmem:[#allocation2 + $0x31] sm:$0xff]
    %v1435 = vld [vmem:[#allocation2 + $0x41] sm:$0xff]
    %v1436 = vld [vmem:[#allocation2 + $0x51] sm:$0xff]
    %v1437 = vld [vmem:[#allocation2 + $0x61] sm:$0xff]
    %v1438 = vld [vmem:[#allocation2 + $0x71] sm:$0xff]
    %v1439 = vld [vmem:[#allocation2 + $0xa1] sm:$0xff]
    %v1440 = vld [vmem:[#allocation2 + $0xb1] sm:$0xff]
    %v1441 = vld [vmem:[#allocation2 + $0xc1] sm:$0xff]
    %v1442 = vld [vmem:[#allocation2 + $0xd1] sm:$0xff]
    %v1443 = vld [vmem:[#allocation2 + $0xe1] sm:$0xff]
    %v1444 = vld [vmem:[#allocation2 + $0xf1] sm:$0xff]
    %v1445 = vld [vmem:[#allocation2 + $0x101] sm:$0xff]
    %v1446 = vld [vmem:[#allocation2 + $0x111] sm:$0xff]
    %1463 = vrot.lane.b32.xlu0 %v1431, 32
    %v1464 = vpop.permute.xlu0 %1463
    %1465 = vrot.lane.b32.xlu0 %v1432, 32
    %v1466 = vpop.permute.xlu0 %1465
    %1467 = vrot.lane.b32.xlu0 %v1433, 32
    %v1468 = vpop.permute.xlu0 %1467
    %1469 = vrot.lane.b32.xlu0 %v1434, 32
    %v1470 = vpop.permute.xlu0 %1469
    %1471 = vrot.lane.b32.xlu0 %v1435, 32
    %v1472 = vpop.permute.xlu0 %1471
    %1473 = vrot.lane.b32.xlu0 %v1436, 32
    %v1474 = vpop.permute.xlu0 %1473
    %1475 = vrot.lane.b32.xlu0 %v1437, 32
    %v1476 = vpop.permute.xlu0 %1475
    %1477 = vrot.lane.b32.xlu0 %v1438, 32
    %v1478 = vpop.permute.xlu0 %1477
    %1479 = vrot.lane.b32.xlu0 %v1439, 32
    %v1480 = vpop.permute.xlu0 %1479
    %1481 = vrot.lane.b32.xlu0 %v1440, 32
    %v1482 = vpop.permute.xlu0 %1481
    %1483 = vrot.lane.b32.xlu0 %v1441, 32
    %v1484 = vpop.permute.xlu0 %1483
    %1485 = vrot.lane.b32.xlu0 %v1442, 32
    %v1486 = vpop.permute.xlu0 %1485
    %1487 = vrot.lane.b32.xlu0 %v1443, 32
    %v1488 = vpop.permute.xlu0 %1487
    %1489 = vrot.lane.b32.xlu0 %v1444, 32
    %v1490 = vpop.permute.xlu0 %1489
    %1491 = vrot.lane.b32.xlu0 %v1445, 32
    %v1492 = vpop.permute.xlu0 %1491
    %1493 = vrot.lane.b32.xlu0 %v1446, 32
    %v1494 = vpop.permute.xlu0 %1493
    %1511 = vst.msk [vmem:[#allocation3] sm:$0xff] %vm225, %v1464
    %1512 = vst.msk [vmem:[#allocation3 + $0x18] sm:$0xff] %vm225, %v1466
    %1513 = vst.msk [vmem:[#allocation3 + $0x30] sm:$0xff] %vm225, %v1468
    %1514 = vst.msk [vmem:[#allocation3 + $0x48] sm:$0xff] %vm225, %v1470
    %1515 = vst.msk [vmem:[#allocation3 + $0x60] sm:$0xff] %vm225, %v1472
    %1516 = vst.msk [vmem:[#allocation3 + $0x78] sm:$0xff] %vm225, %v1474
    %1517 = vst.msk [vmem:[#allocation3 + $0x90] sm:$0xff] %vm225, %v1476
    %1518 = vst.msk [vmem:[#allocation3 + $0xa8] sm:$0xff] %vm225, %v1478
    %1519 = vst.msk [vmem:[#allocation3 + $0xc0] sm:$0xff] %vm225, %v1480
    %1520 = vst.msk [vmem:[#allocation3 + $0xd8] sm:$0xff] %vm225, %v1482
    %1521 = vst.msk [vmem:[#allocation3 + $0xf0] sm:$0xff] %vm225, %v1484
    %1522 = vst.msk [vmem:[#allocation3 + $0x108] sm:$0xff] %vm225, %v1486
    %1523 = vst.msk [vmem:[#allocation3 + $0x120] sm:$0xff] %vm225, %v1488
    %1524 = vst.msk [vmem:[#allocation3 + $0x138] sm:$0xff] %vm225, %v1490
    %1525 = vst.msk [vmem:[#allocation3 + $0x150] sm:$0xff] %vm225, %v1492
    %1526 = vst.msk [vmem:[#allocation3 + $0x168] sm:$0xff] %vm225, %v1494
    %v1527 = vld [vmem:[#allocation2 + $0x2] sm:$0xff]
    %v1528 = vld [vmem:[#allocation2 + $0x12] sm:$0xff]
    %v1529 = vld [vmem:[#allocation2 + $0x22] sm:$0xff]
    %v1530 = vld [vmem:[#allocation2 + $0x32] sm:$0xff]
    %v1531 = vld [vmem:[#allocation2 + $0x42] sm:$0xff]
    %v1532 = vld [vmem:[#allocation2 + $0x52] sm:$0xff]
    %v1533 = vld [vmem:[#allocation2 + $0x62] sm:$0xff]
    %v1534 = vld [vmem:[#allocation2 + $0x72] sm:$0xff]
    %v1535 = vld [vmem:[#allocation2 + $0xa2] sm:$0xff]
    %v1536 = vld [vmem:[#allocation2 + $0xb2] sm:$0xff]
    %v1537 = vld [vmem:[#allocation2 + $0xc2] sm:$0xff]
    %v1538 = vld [vmem:[#allocation2 + $0xd2] sm:$0xff]
    %v1539 = vld [vmem:[#allocation2 + $0xe2] sm:$0xff]
    %v1540 = vld [vmem:[#allocation2 + $0xf2] sm:$0xff]
    %v1541 = vld [vmem:[#allocation2 + $0x102] sm:$0xff]
    %v1542 = vld [vmem:[#allocation2 + $0x112] sm:$0xff]
    %1559 = vrot.lane.b32.xlu0 %v1527, 64
    %v1560 = vpop.permute.xlu0 %1559
    %1561 = vrot.lane.b32.xlu0 %v1528, 64
    %v1562 = vpop.permute.xlu0 %1561
    %1563 = vrot.lane.b32.xlu0 %v1529, 64
    %v1564 = vpop.permute.xlu0 %1563
    %1565 = vrot.lane.b32.xlu0 %v1530, 64
    %v1566 = vpop.permute.xlu0 %1565
    %1567 = vrot.lane.b32.xlu0 %v1531, 64
    %v1568 = vpop.permute.xlu0 %1567
    %1569 = vrot.lane.b32.xlu0 %v1532, 64
    %v1570 = vpop.permute.xlu0 %1569
    %1571 = vrot.lane.b32.xlu0 %v1533, 64
    %v1572 = vpop.permute.xlu0 %1571
    %1573 = vrot.lane.b32.xlu0 %v1534, 64
    %v1574 = vpop.permute.xlu0 %1573
    %1575 = vrot.lane.b32.xlu0 %v1535, 64
    %v1576 = vpop.permute.xlu0 %1575
    %1577 = vrot.lane.b32.xlu0 %v1536, 64
    %v1578 = vpop.permute.xlu0 %1577
    %1579 = vrot.lane.b32.xlu0 %v1537, 64
    %v1580 = vpop.permute.xlu0 %1579
    %1581 = vrot.lane.b32.xlu0 %v1538, 64
    %v1582 = vpop.permute.xlu0 %1581
    %1583 = vrot.lane.b32.xlu0 %v1539, 64
    %v1584 = vpop.permute.xlu0 %1583
    %1585 = vrot.lane.b32.xlu0 %v1540, 64
    %v1586 = vpop.permute.xlu0 %1585
    %1587 = vrot.lane.b32.xlu0 %v1541, 64
    %v1588 = vpop.permute.xlu0 %1587
    %1589 = vrot.lane.b32.xlu0 %v1542, 64
    %v1590 = vpop.permute.xlu0 %1589
    %1607 = vst.msk [vmem:[#allocation3] sm:$0xff] %vm322, %v1560
    %1608 = vst.msk [vmem:[#allocation3 + $0x18] sm:$0xff] %vm322, %v1562
    %1609 = vst.msk [vmem:[#allocation3 + $0x30] sm:$0xff] %vm322, %v1564
    %1610 = vst.msk [vmem:[#allocation3 + $0x48] sm:$0xff] %vm322, %v1566
    %1611 = vst.msk [vmem:[#allocation3 + $0x60] sm:$0xff] %vm322, %v1568
    %1612 = vst.msk [vmem:[#allocation3 + $0x78] sm:$0xff] %vm322, %v1570
    %1613 = vst.msk [vmem:[#allocation3 + $0x90] sm:$0xff] %vm322, %v1572
    %1614 = vst.msk [vmem:[#allocation3 + $0xa8] sm:$0xff] %vm322, %v1574
    %1615 = vst.msk [vmem:[#allocation3 + $0xc0] sm:$0xff] %vm322, %v1576
    %1616 = vst.msk [vmem:[#allocation3 + $0xd8] sm:$0xff] %vm322, %v1578
    %1617 = vst.msk [vmem:[#allocation3 + $0xf0] sm:$0xff] %vm322, %v1580
    %1618 = vst.msk [vmem:[#allocation3 + $0x108] sm:$0xff] %vm322, %v1582
    %1619 = vst.msk [vmem:[#allocation3 + $0x120] sm:$0xff] %vm322, %v1584
    %1620 = vst.msk [vmem:[#allocation3 + $0x138] sm:$0xff] %vm322, %v1586
    %1621 = vst.msk [vmem:[#allocation3 + $0x150] sm:$0xff] %vm322, %v1588
    %1622 = vst.msk [vmem:[#allocation3 + $0x168] sm:$0xff] %vm322, %v1590
    %v1623 = vld [vmem:[%s96] sm:$0xff]
    %v1624 = vld [vmem:[%s96 + $0x10] sm:$0xff]
    %v1625 = vld [vmem:[%s96 + $0x20] sm:$0xff]
    %v1626 = vld [vmem:[%s96 + $0x30] sm:$0xff]
    %v1627 = vld [vmem:[%s96 + $0x40] sm:$0xff]
    %v1628 = vld [vmem:[%s96 + $0x50] sm:$0xff]
    %v1629 = vld [vmem:[%s96 + $0x60] sm:$0xff]
    %v1630 = vld [vmem:[%s96 + $0x70] sm:$0xff]
    %v1631 = vld [vmem:[%s96 + $0xa0] sm:$0xff]
    %v1632 = vld [vmem:[%s96 + $0xb0] sm:$0xff]
    %v1633 = vld [vmem:[%s96 + $0xc0] sm:$0xff]
    %v1634 = vld [vmem:[%s96 + $0xd0] sm:$0xff]
    %v1635 = vld [vmem:[%s96 + $0xe0] sm:$0xff]
    %v1636 = vld [vmem:[%s96 + $0xf0] sm:$0xff]
    %v1637 = vld [vmem:[%s96 + $0x100] sm:$0xff]
    %v1638 = vld [vmem:[%s96 + $0x110] sm:$0xff]
    %1655 = vrot.lane.b32.xlu0 %v1623, 96
    %v1656 = vpop.permute.xlu0 %1655
    %1657 = vrot.lane.b32.xlu0 %v1624, 96
    %v1658 = vpop.permute.xlu0 %1657
    %1659 = vrot.lane.b32.xlu0 %v1625, 96
    %v1660 = vpop.permute.xlu0 %1659
    %1661 = vrot.lane.b32.xlu0 %v1626, 96
    %v1662 = vpop.permute.xlu0 %1661
    %1663 = vrot.lane.b32.xlu0 %v1627, 96
    %v1664 = vpop.permute.xlu0 %1663
    %1665 = vrot.lane.b32.xlu0 %v1628, 96
    %v1666 = vpop.permute.xlu0 %1665
    %1667 = vrot.lane.b32.xlu0 %v1629, 96
    %v1668 = vpop.permute.xlu0 %1667
    %1669 = vrot.lane.b32.xlu0 %v1630, 96
    %v1670 = vpop.permute.xlu0 %1669
    %1671 = vrot.lane.b32.xlu0 %v1631, 96
    %v1672 = vpop.permute.xlu0 %1671
    %1673 = vrot.lane.b32.xlu0 %v1632, 96
    %v1674 = vpop.permute.xlu0 %1673
    %1675 = vrot.lane.b32.xlu0 %v1633, 96
    %v1676 = vpop.permute.xlu0 %1675
    %1677 = vrot.lane.b32.xlu0 %v1634, 96
    %v1678 = vpop.permute.xlu0 %1677
    %1679 = vrot.lane.b32.xlu0 %v1635, 96
    %v1680 = vpop.permute.xlu0 %1679
    %1681 = vrot.lane.b32.xlu0 %v1636, 96
    %v1682 = vpop.permute.xlu0 %1681
    %1683 = vrot.lane.b32.xlu0 %v1637, 96
    %v1684 = vpop.permute.xlu0 %1683
    %1685 = vrot.lane.b32.xlu0 %v1638, 96
    %v1686 = vpop.permute.xlu0 %1685
    %1703 = vst.msk [vmem:[#allocation3] sm:$0xff] %vm419, %v1656
    %1704 = vst.msk [vmem:[#allocation3 + $0x18] sm:$0xff] %vm419, %v1658
    %1705 = vst.msk [vmem:[#allocation3 + $0x30] sm:$0xff] %vm419, %v1660
    %1706 = vst.msk [vmem:[#allocation3 + $0x48] sm:$0xff] %vm419, %v1662
    %1707 = vst.msk [vmem:[#allocation3 + $0x60] sm:$0xff] %vm419, %v1664
    %1708 = vst.msk [vmem:[#allocation3 + $0x78] sm:$0xff] %vm419, %v1666
    %1709 = vst.msk [vmem:[#allocation3 + $0x90] sm:$0xff] %vm419, %v1668
    %1710 = vst.msk [vmem:[#allocation3 + $0xa8] sm:$0xff] %vm419, %v1670
    %1711 = vst.msk [vmem:[#allocation3 + $0xc0] sm:$0xff] %vm419, %v1672
    %1712 = vst.msk [vmem:[#allocation3 + $0xd8] sm:$0xff] %vm419, %v1674
    %1713 = vst.msk [vmem:[#allocation3 + $0xf0] sm:$0xff] %vm419, %v1676
    %1714 = vst.msk [vmem:[#allocation3 + $0x108] sm:$0xff] %vm419, %v1678
    %1715 = vst.msk [vmem:[#allocation3 + $0x120] sm:$0xff] %vm419, %v1680
    %1716 = vst.msk [vmem:[#allocation3 + $0x138] sm:$0xff] %vm419, %v1682
    %1717 = vst.msk [vmem:[#allocation3 + $0x150] sm:$0xff] %vm419, %v1684
    %1718 = vst.msk [vmem:[#allocation3 + $0x168] sm:$0xff] %vm419, %v1686
    %v1719 = vld [vmem:[%s96 + $0x1] sm:$0xff]
    %v1720 = vld [vmem:[%s96 + $0x11] sm:$0xff]
    %v1721 = vld [vmem:[%s96 + $0x21] sm:$0xff]
    %v1722 = vld [vmem:[%s96 + $0x31] sm:$0xff]
    %v1723 = vld [vmem:[%s96 + $0x41] sm:$0xff]
    %v1724 = vld [vmem:[%s96 + $0x51] sm:$0xff]
    %v1725 = vld [vmem:[%s96 + $0x61] sm:$0xff]
    %v1726 = vld [vmem:[%s96 + $0x71] sm:$0xff]
    %v1727 = vld [vmem:[%s96 + $0xa1] sm:$0xff]
    %v1728 = vld [vmem:[%s96 + $0xb1] sm:$0xff]
    %v1729 = vld [vmem:[%s96 + $0xc1] sm:$0xff]
    %v1730 = vld [vmem:[%s96 + $0xd1] sm:$0xff]
    %v1731 = vld [vmem:[%s96 + $0xe1] sm:$0xff]
    %v1732 = vld [vmem:[%s96 + $0xf1] sm:$0xff]
    %v1733 = vld [vmem:[%s96 + $0x101] sm:$0xff]
    %v1734 = vld [vmem:[%s96 + $0x111] sm:$0xff]
    %1735 = vst.msk [vmem:[#allocation3 + $0x8] sm:$0xff] %vm28, %v1719
    %1736 = vst.msk [vmem:[#allocation3 + $0x20] sm:$0xff] %vm28, %v1720
    %1737 = vst.msk [vmem:[#allocation3 + $0x38] sm:$0xff] %vm28, %v1721
    %1738 = vst.msk [vmem:[#allocation3 + $0x50] sm:$0xff] %vm28, %v1722
    %1739 = vst.msk [vmem:[#allocation3 + $0x68] sm:$0xff] %vm28, %v1723
    %1740 = vst.msk [vmem:[#allocation3 + $0x80] sm:$0xff] %vm28, %v1724
    %1741 = vst.msk [vmem:[#allocation3 + $0x98] sm:$0xff] %vm28, %v1725
    %1742 = vst.msk [vmem:[#allocation3 + $0xb0] sm:$0xff] %vm28, %v1726
    %1743 = vst.msk [vmem:[#allocation3 + $0xc8] sm:$0xff] %vm28, %v1727
    %1744 = vst.msk [vmem:[#allocation3 + $0xe0] sm:$0xff] %vm28, %v1728
    %1745 = vst.msk [vmem:[#allocation3 + $0xf8] sm:$0xff] %vm28, %v1729
    %1746 = vst.msk [vmem:[#allocation3 + $0x110] sm:$0xff] %vm28, %v1730
    %1747 = vst.msk [vmem:[#allocation3 + $0x128] sm:$0xff] %vm28, %v1731
    %1748 = vst.msk [vmem:[#allocation3 + $0x140] sm:$0xff] %vm28, %v1732
    %1749 = vst.msk [vmem:[#allocation3 + $0x158] sm:$0xff] %vm28, %v1733
    %1750 = vst.msk [vmem:[#allocation3 + $0x170] sm:$0xff] %vm28, %v1734
    %v1751 = vld [vmem:[%s96 + $0x2] sm:$0xff]
    %v1752 = vld [vmem:[%s96 + $0x12] sm:$0xff]
    %v1753 = vld [vmem:[%s96 + $0x22] sm:$0xff]
    %v1754 = vld [vmem:[%s96 + $0x32] sm:$0xff]
    %v1755 = vld [vmem:[%s96 + $0x42] sm:$0xff]
    %v1756 = vld [vmem:[%s96 + $0x52] sm:$0xff]
    %v1757 = vld [vmem:[%s96 + $0x62] sm:$0xff]
    %v1758 = vld [vmem:[%s96 + $0x72] sm:$0xff]
    %v1759 = vld [vmem:[%s96 + $0xa2] sm:$0xff]
    %v1760 = vld [vmem:[%s96 + $0xb2] sm:$0xff]
    %v1761 = vld [vmem:[%s96 + $0xc2] sm:$0xff]
    %v1762 = vld [vmem:[%s96 + $0xd2] sm:$0xff]
    %v1763 = vld [vmem:[%s96 + $0xe2] sm:$0xff]
    %v1764 = vld [vmem:[%s96 + $0xf2] sm:$0xff]
    %v1765 = vld [vmem:[%s96 + $0x102] sm:$0xff]
    %v1766 = vld [vmem:[%s96 + $0x112] sm:$0xff]
    %1783 = vrot.lane.b32.xlu0 %v1751, 32
    %v1784 = vpop.permute.xlu0 %1783
    %1785 = vrot.lane.b32.xlu0 %v1752, 32
    %v1786 = vpop.permute.xlu0 %1785
    %1787 = vrot.lane.b32.xlu0 %v1753, 32
    %v1788 = vpop.permute.xlu0 %1787
    %1789 = vrot.lane.b32.xlu0 %v1754, 32
    %v1790 = vpop.permute.xlu0 %1789
    %1791 = vrot.lane.b32.xlu0 %v1755, 32
    %v1792 = vpop.permute.xlu0 %1791
    %1793 = vrot.lane.b32.xlu0 %v1756, 32
    %v1794 = vpop.permute.xlu0 %1793
    %1795 = vrot.lane.b32.xlu0 %v1757, 32
    %v1796 = vpop.permute.xlu0 %1795
    %1797 = vrot.lane.b32.xlu0 %v1758, 32
    %v1798 = vpop.permute.xlu0 %1797
    %1799 = vrot.lane.b32.xlu0 %v1759, 32
    %v1800 = vpop.permute.xlu0 %1799
    %1801 = vrot.lane.b32.xlu0 %v1760, 32
    %v1802 = vpop.permute.xlu0 %1801
    %1803 = vrot.lane.b32.xlu0 %v1761, 32
    %v1804 = vpop.permute.xlu0 %1803
    %1805 = vrot.lane.b32.xlu0 %v1762, 32
    %v1806 = vpop.permute.xlu0 %1805
    %1807 = vrot.lane.b32.xlu0 %v1763, 32
    %v1808 = vpop.permute.xlu0 %1807
    %1809 = vrot.lane.b32.xlu0 %v1764, 32
    %v1810 = vpop.permute.xlu0 %1809
    %1811 = vrot.lane.b32.xlu0 %v1765, 32
    %v1812 = vpop.permute.xlu0 %1811
    %1813 = vrot.lane.b32.xlu0 %v1766, 32
    %v1814 = vpop.permute.xlu0 %1813
    %1831 = vst.msk [vmem:[#allocation3 + $0x8] sm:$0xff] %vm225, %v1784
    %1832 = vst.msk [vmem:[#allocation3 + $0x20] sm:$0xff] %vm225, %v1786
    %1833 = vst.msk [vmem:[#allocation3 + $0x38] sm:$0xff] %vm225, %v1788
    %1834 = vst.msk [vmem:[#allocation3 + $0x50] sm:$0xff] %vm225, %v1790
    %1835 = vst.msk [vmem:[#allocation3 + $0x68] sm:$0xff] %vm225, %v1792
    %1836 = vst.msk [vmem:[#allocation3 + $0x80] sm:$0xff] %vm225, %v1794
    %1837 = vst.msk [vmem:[#allocation3 + $0x98] sm:$0xff] %vm225, %v1796
    %1838 = vst.msk [vmem:[#allocation3 + $0xb0] sm:$0xff] %vm225, %v1798
    %1839 = vst.msk [vmem:[#allocation3 + $0xc8] sm:$0xff] %vm225, %v1800
    %1840 = vst.msk [vmem:[#allocation3 + $0xe0] sm:$0xff] %vm225, %v1802
    %1841 = vst.msk [vmem:[#allocation3 + $0xf8] sm:$0xff] %vm225, %v1804
    %1842 = vst.msk [vmem:[#allocation3 + $0x110] sm:$0xff] %vm225, %v1806
    %1843 = vst.msk [vmem:[#allocation3 + $0x128] sm:$0xff] %vm225, %v1808
    %1844 = vst.msk [vmem:[#allocation3 + $0x140] sm:$0xff] %vm225, %v1810
    %1845 = vst.msk [vmem:[#allocation3 + $0x158] sm:$0xff] %vm225, %v1812
    %1846 = vst.msk [vmem:[#allocation3 + $0x170] sm:$0xff] %vm225, %v1814
    %v1847 = vld [vmem:[%s564] sm:$0xff]
    %v1848 = vld [vmem:[%s564 + $0x10] sm:$0xff]
    %v1849 = vld [vmem:[%s564 + $0x20] sm:$0xff]
    %v1850 = vld [vmem:[%s564 + $0x30] sm:$0xff]
    %v1851 = vld [vmem:[%s564 + $0x40] sm:$0xff]
    %v1852 = vld [vmem:[%s564 + $0x50] sm:$0xff]
    %v1853 = vld [vmem:[%s564 + $0x60] sm:$0xff]
    %v1854 = vld [vmem:[%s564 + $0x70] sm:$0xff]
    %v1855 = vld [vmem:[%s564 + $0xa0] sm:$0xff]
    %v1856 = vld [vmem:[%s564 + $0xb0] sm:$0xff]
    %v1857 = vld [vmem:[%s564 + $0xc0] sm:$0xff]
    %v1858 = vld [vmem:[%s564 + $0xd0] sm:$0xff]
    %v1859 = vld [vmem:[%s564 + $0xe0] sm:$0xff]
    %v1860 = vld [vmem:[%s564 + $0xf0] sm:$0xff]
    %v1861 = vld [vmem:[%s564 + $0x100] sm:$0xff]
    %v1862 = vld [vmem:[%s564 + $0x110] sm:$0xff]
    %1879 = vrot.lane.b32.xlu0 %v1847, 64
    %v1880 = vpop.permute.xlu0 %1879
    %1881 = vrot.lane.b32.xlu0 %v1848, 64
    %v1882 = vpop.permute.xlu0 %1881
    %1883 = vrot.lane.b32.xlu0 %v1849, 64
    %v1884 = vpop.permute.xlu0 %1883
    %1885 = vrot.lane.b32.xlu0 %v1850, 64
    %v1886 = vpop.permute.xlu0 %1885
    %1887 = vrot.lane.b32.xlu0 %v1851, 64
    %v1888 = vpop.permute.xlu0 %1887
    %1889 = vrot.lane.b32.xlu0 %v1852, 64
    %v1890 = vpop.permute.xlu0 %1889
    %1891 = vrot.lane.b32.xlu0 %v1853, 64
    %v1892 = vpop.permute.xlu0 %1891
    %1893 = vrot.lane.b32.xlu0 %v1854, 64
    %v1894 = vpop.permute.xlu0 %1893
    %1895 = vrot.lane.b32.xlu0 %v1855, 64
    %v1896 = vpop.permute.xlu0 %1895
    %1897 = vrot.lane.b32.xlu0 %v1856, 64
    %v1898 = vpop.permute.xlu0 %1897
    %1899 = vrot.lane.b32.xlu0 %v1857, 64
    %v1900 = vpop.permute.xlu0 %1899
    %1901 = vrot.lane.b32.xlu0 %v1858, 64
    %v1902 = vpop.permute.xlu0 %1901
    %1903 = vrot.lane.b32.xlu0 %v1859, 64
    %v1904 = vpop.permute.xlu0 %1903
    %1905 = vrot.lane.b32.xlu0 %v1860, 64
    %v1906 = vpop.permute.xlu0 %1905
    %1907 = vrot.lane.b32.xlu0 %v1861, 64
    %v1908 = vpop.permute.xlu0 %1907
    %1909 = vrot.lane.b32.xlu0 %v1862, 64
    %v1910 = vpop.permute.xlu0 %1909
    %1927 = vst.msk [vmem:[#allocation3 + $0x8] sm:$0xff] %vm322, %v1880
    %1928 = vst.msk [vmem:[#allocation3 + $0x20] sm:$0xff] %vm322, %v1882
    %1929 = vst.msk [vmem:[#allocation3 + $0x38] sm:$0xff] %vm322, %v1884
    %1930 = vst.msk [vmem:[#allocation3 + $0x50] sm:$0xff] %vm322, %v1886
    %1931 = vst.msk [vmem:[#allocation3 + $0x68] sm:$0xff] %vm322, %v1888
    %1932 = vst.msk [vmem:[#allocation3 + $0x80] sm:$0xff] %vm322, %v1890
    %1933 = vst.msk [vmem:[#allocation3 + $0x98] sm:$0xff] %vm322, %v1892
    %1934 = vst.msk [vmem:[#allocation3 + $0xb0] sm:$0xff] %vm322, %v1894
    %1935 = vst.msk [vmem:[#allocation3 + $0xc8] sm:$0xff] %vm322, %v1896
    %1936 = vst.msk [vmem:[#allocation3 + $0xe0] sm:$0xff] %vm322, %v1898
    %1937 = vst.msk [vmem:[#allocation3 + $0xf8] sm:$0xff] %vm322, %v1900
    %1938 = vst.msk [vmem:[#allocation3 + $0x110] sm:$0xff] %vm322, %v1902
    %1939 = vst.msk [vmem:[#allocation3 + $0x128] sm:$0xff] %vm322, %v1904
    %1940 = vst.msk [vmem:[#allocation3 + $0x140] sm:$0xff] %vm322, %v1906
    %1941 = vst.msk [vmem:[#allocation3 + $0x158] sm:$0xff] %vm322, %v1908
    %1942 = vst.msk [vmem:[#allocation3 + $0x170] sm:$0xff] %vm322, %v1910
    %v1943 = vld [vmem:[%s564 + $0x1] sm:$0xff]
    %v1944 = vld [vmem:[%s564 + $0x11] sm:$0xff]
    %v1945 = vld [vmem:[%s564 + $0x21] sm:$0xff]
    %v1946 = vld [vmem:[%s564 + $0x31] sm:$0xff]
    %v1947 = vld [vmem:[%s564 + $0x41] sm:$0xff]
    %v1948 = vld [vmem:[%s564 + $0x51] sm:$0xff]
    %v1949 = vld [vmem:[%s564 + $0x61] sm:$0xff]
    %v1950 = vld [vmem:[%s564 + $0x71] sm:$0xff]
    %v1951 = vld [vmem:[%s564 + $0xa1] sm:$0xff]
    %v1952 = vld [vmem:[%s564 + $0xb1] sm:$0xff]
    %v1953 = vld [vmem:[%s564 + $0xc1] sm:$0xff]
    %v1954 = vld [vmem:[%s564 + $0xd1] sm:$0xff]
    %v1955 = vld [vmem:[%s564 + $0xe1] sm:$0xff]
    %v1956 = vld [vmem:[%s564 + $0xf1] sm:$0xff]
    %v1957 = vld [vmem:[%s564 + $0x101] sm:$0xff]
    %v1958 = vld [vmem:[%s564 + $0x111] sm:$0xff]
    %1975 = vrot.lane.b32.xlu0 %v1943, 96
    %v1976 = vpop.permute.xlu0 %1975
    %1977 = vrot.lane.b32.xlu0 %v1944, 96
    %v1978 = vpop.permute.xlu0 %1977
    %1979 = vrot.lane.b32.xlu0 %v1945, 96
    %v1980 = vpop.permute.xlu0 %1979
    %1981 = vrot.lane.b32.xlu0 %v1946, 96
    %v1982 = vpop.permute.xlu0 %1981
    %1983 = vrot.lane.b32.xlu0 %v1947, 96
    %v1984 = vpop.permute.xlu0 %1983
    %1985 = vrot.lane.b32.xlu0 %v1948, 96
    %v1986 = vpop.permute.xlu0 %1985
    %1987 = vrot.lane.b32.xlu0 %v1949, 96
    %v1988 = vpop.permute.xlu0 %1987
    %1989 = vrot.lane.b32.xlu0 %v1950, 96
    %v1990 = vpop.permute.xlu0 %1989
    %1991 = vrot.lane.b32.xlu0 %v1951, 96
    %v1992 = vpop.permute.xlu0 %1991
    %1993 = vrot.lane.b32.xlu0 %v1952, 96
    %v1994 = vpop.permute.xlu0 %1993
    %1995 = vrot.lane.b32.xlu0 %v1953, 96
    %v1996 = vpop.permute.xlu0 %1995
    %1997 = vrot.lane.b32.xlu0 %v1954, 96
    %v1998 = vpop.permute.xlu0 %1997
    %1999 = vrot.lane.b32.xlu0 %v1955, 96
    %v2000 = vpop.permute.xlu0 %1999
    %2001 = vrot.lane.b32.xlu0 %v1956, 96
    %v2002 = vpop.permute.xlu0 %2001
    %2003 = vrot.lane.b32.xlu0 %v1957, 96
    %v2004 = vpop.permute.xlu0 %2003
    %2005 = vrot.lane.b32.xlu0 %v1958, 96
    %v2006 = vpop.permute.xlu0 %2005
    %2023 = vst.msk [vmem:[#allocation3 + $0x8] sm:$0xff] %vm419, %v1976
    %2024 = vst.msk [vmem:[#allocation3 + $0x20] sm:$0xff] %vm419, %v1978
    %2025 = vst.msk [vmem:[#allocation3 + $0x38] sm:$0xff] %vm419, %v1980
    %2026 = vst.msk [vmem:[#allocation3 + $0x50] sm:$0xff] %vm419, %v1982
    %2027 = vst.msk [vmem:[#allocation3 + $0x68] sm:$0xff] %vm419, %v1984
    %2028 = vst.msk [vmem:[#allocation3 + $0x80] sm:$0xff] %vm419, %v1986
    %2029 = vst.msk [vmem:[#allocation3 + $0x98] sm:$0xff] %vm419, %v1988
    %2030 = vst.msk [vmem:[#allocation3 + $0xb0] sm:$0xff] %vm419, %v1990
    %2031 = vst.msk [vmem:[#allocation3 + $0xc8] sm:$0xff] %vm419, %v1992
    %2032 = vst.msk [vmem:[#allocation3 + $0xe0] sm:$0xff] %vm419, %v1994
    %2033 = vst.msk [vmem:[#allocation3 + $0xf8] sm:$0xff] %vm419, %v1996
    %2034 = vst.msk [vmem:[#allocation3 + $0x110] sm:$0xff] %vm419, %v1998
    %2035 = vst.msk [vmem:[#allocation3 + $0x128] sm:$0xff] %vm419, %v2000
    %2036 = vst.msk [vmem:[#allocation3 + $0x140] sm:$0xff] %vm419, %v2002
    %2037 = vst.msk [vmem:[#allocation3 + $0x158] sm:$0xff] %vm419, %v2004
    %2038 = vst.msk [vmem:[#allocation3 + $0x170] sm:$0xff] %vm419, %v2006
    %v2039 = vld [vmem:[%s564 + $0x2] sm:$0xff]
    %v2040 = vld [vmem:[%s564 + $0x12] sm:$0xff]
    %v2041 = vld [vmem:[%s564 + $0x22] sm:$0xff]
    %v2042 = vld [vmem:[%s564 + $0x32] sm:$0xff]
    %v2043 = vld [vmem:[%s564 + $0x42] sm:$0xff]
    %v2044 = vld [vmem:[%s564 + $0x52] sm:$0xff]
    %v2045 = vld [vmem:[%s564 + $0x62] sm:$0xff]
    %v2046 = vld [vmem:[%s564 + $0x72] sm:$0xff]
    %v2047 = vld [vmem:[%s564 + $0xa2] sm:$0xff]
    %v2048 = vld [vmem:[%s564 + $0xb2] sm:$0xff]
    %v2049 = vld [vmem:[%s564 + $0xc2] sm:$0xff]
    %v2050 = vld [vmem:[%s564 + $0xd2] sm:$0xff]
    %v2051 = vld [vmem:[%s564 + $0xe2] sm:$0xff]
    %v2052 = vld [vmem:[%s564 + $0xf2] sm:$0xff]
    %v2053 = vld [vmem:[%s564 + $0x102] sm:$0xff]
    %v2054 = vld [vmem:[%s564 + $0x112] sm:$0xff]
    %2055 = vst.msk [vmem:[#allocation3 + $0x10] sm:$0xff] %vm28, %v2039
    %2056 = vst.msk [vmem:[#allocation3 + $0x28] sm:$0xff] %vm28, %v2040
    %2057 = vst.msk [vmem:[#allocation3 + $0x40] sm:$0xff] %vm28, %v2041
    %2058 = vst.msk [vmem:[#allocation3 + $0x58] sm:$0xff] %vm28, %v2042
    %2059 = vst.msk [vmem:[#allocation3 + $0x70] sm:$0xff] %vm28, %v2043
    %2060 = vst.msk [vmem:[#allocation3 + $0x88] sm:$0xff] %vm28, %v2044
    %2061 = vst.msk [vmem:[#allocation3 + $0xa0] sm:$0xff] %vm28, %v2045
    %2062 = vst.msk [vmem:[#allocation3 + $0xb8] sm:$0xff] %vm28, %v2046
    %2063 = vst.msk [vmem:[#allocation3 + $0xd0] sm:$0xff] %vm28, %v2047
    %2064 = vst.msk [vmem:[#allocation3 + $0xe8] sm:$0xff] %vm28, %v2048
    %2065 = vst.msk [vmem:[#allocation3 + $0x100] sm:$0xff] %vm28, %v2049
    %2066 = vst.msk [vmem:[#allocation3 + $0x118] sm:$0xff] %vm28, %v2050
    %2067 = vst.msk [vmem:[#allocation3 + $0x130] sm:$0xff] %vm28, %v2051
    %2068 = vst.msk [vmem:[#allocation3 + $0x148] sm:$0xff] %vm28, %v2052
    %2069 = vst.msk [vmem:[#allocation3 + $0x160] sm:$0xff] %vm28, %v2053
    %2070 = vst.msk [vmem:[#allocation3 + $0x178] sm:$0xff] %vm28, %v2054
    %v2071 = vld [vmem:[#allocation3] sm:$0xff]
    %v2072 = vld [vmem:[#allocation3 + $0x8] sm:$0xff]
    %v2073 = vld [vmem:[#allocation3 + $0x10] sm:$0xff]
    %v2074 = vld [vmem:[#allocation3 + $0x18] sm:$0xff]
    %v2075 = vld [vmem:[#allocation3 + $0x20] sm:$0xff]
    %v2076 = vld [vmem:[#allocation3 + $0x28] sm:$0xff]
    %v2077 = vld [vmem:[#allocation3 + $0x30] sm:$0xff]
    %v2078 = vld [vmem:[#allocation3 + $0x38] sm:$0xff]
    %v2079 = vld [vmem:[#allocation3 + $0x40] sm:$0xff]
    %v2080 = vld [vmem:[#allocation3 + $0x48] sm:$0xff]
    %v2081 = vld [vmem:[#allocation3 + $0x50] sm:$0xff]
    %v2082 = vld [vmem:[#allocation3 + $0x58] sm:$0xff]
    %v2083 = vld [vmem:[#allocation3 + $0x60] sm:$0xff]
    %v2084 = vld [vmem:[#allocation3 + $0x68] sm:$0xff]
    %v2085 = vld [vmem:[#allocation3 + $0x70] sm:$0xff]
    %v2086 = vld [vmem:[#allocation3 + $0x78] sm:$0xff]
    %v2087 = vld [vmem:[#allocation3 + $0x80] sm:$0xff]
    %v2088 = vld [vmem:[#allocation3 + $0x88] sm:$0xff]
    %v2089 = vld [vmem:[#allocation3 + $0x90] sm:$0xff]
    %v2090 = vld [vmem:[#allocation3 + $0x98] sm:$0xff]
    %v2091 = vld [vmem:[#allocation3 + $0xa0] sm:$0xff]
    %v2092 = vld [vmem:[#allocation3 + $0xa8] sm:$0xff]
    %v2093 = vld [vmem:[#allocation3 + $0xb0] sm:$0xff]
    %v2094 = vld [vmem:[#allocation3 + $0xb8] sm:$0xff]
    %v2095 = vld [vmem:[#allocation3 + $0xc0] sm:$0xff]
    %v2096 = vld [vmem:[#allocation3 + $0xc8] sm:$0xff]
    %v2097 = vld [vmem:[#allocation3 + $0xd0] sm:$0xff]
    %v2098 = vld [vmem:[#allocation3 + $0xd8] sm:$0xff]
    %v2099 = vld [vmem:[#allocation3 + $0xe0] sm:$0xff]
    %v2100 = vld [vmem:[#allocation3 + $0xe8] sm:$0xff]
    %v2101 = vld [vmem:[#allocation3 + $0xf0] sm:$0xff]
    %v2102 = vld [vmem:[#allocation3 + $0xf8] sm:$0xff]
    %v2103 = vld [vmem:[#allocation3 + $0x100] sm:$0xff]
    %v2104 = vld [vmem:[#allocation3 + $0x108] sm:$0xff]
    %v2105 = vld [vmem:[#allocation3 + $0x110] sm:$0xff]
    %v2106 = vld [vmem:[#allocation3 + $0x118] sm:$0xff]
    %v2107 = vld [vmem:[#allocation3 + $0x120] sm:$0xff]
    %v2108 = vld [vmem:[#allocation3 + $0x128] sm:$0xff]
    %v2109 = vld [vmem:[#allocation3 + $0x130] sm:$0xff]
    %v2110 = vld [vmem:[#allocation3 + $0x138] sm:$0xff]
    %v2111 = vld [vmem:[#allocation3 + $0x140] sm:$0xff]
    %v2112 = vld [vmem:[#allocation3 + $0x148] sm:$0xff]
    %v2113 = vld [vmem:[#allocation3 + $0x150] sm:$0xff]
    %v2114 = vld [vmem:[#allocation3 + $0x158] sm:$0xff]
    %v2115 = vld [vmem:[#allocation3 + $0x160] sm:$0xff]
    %v2116 = vld [vmem:[#allocation3 + $0x168] sm:$0xff]
    %v2117 = vld [vmem:[#allocation3 + $0x170] sm:$0xff]
    %v2118 = vld [vmem:[#allocation3 + $0x178] sm:$0xff]
    %v2119 = vpack.c.bf16 %v2074, %v2071
    %v2120 = vpack.c.bf16 %v2075, %v2072
    %v2121 = vpack.c.bf16 %v2076, %v2073
    %v2122 = vpack.c.bf16 %v2080, %v2077
    %v2123 = vpack.c.bf16 %v2081, %v2078
    %v2124 = vpack.c.bf16 %v2082, %v2079
    %v2125 = vpack.c.bf16 %v2086, %v2083
    %v2126 = vpack.c.bf16 %v2087, %v2084
    %v2127 = vpack.c.bf16 %v2088, %v2085
    %v2128 = vpack.c.bf16 %v2092, %v2089
    %v2129 = vpack.c.bf16 %v2093, %v2090
    %v2130 = vpack.c.bf16 %v2094, %v2091
    %v2131 = vpack.c.bf16 %v2098, %v2095
    %v2132 = vpack.c.bf16 %v2099, %v2096
    %v2133 = vpack.c.bf16 %v2100, %v2097
    %v2134 = vpack.c.bf16 %v2104, %v2101
    %v2135 = vpack.c.bf16 %v2105, %v2102
    %v2136 = vpack.c.bf16 %v2106, %v2103
    %v2137 = vpack.c.bf16 %v2110, %v2107
    %v2138 = vpack.c.bf16 %v2111, %v2108
    %v2139 = vpack.c.bf16 %v2112, %v2109
    %v2140 = vpack.c.bf16 %v2116, %v2113
    %v2141 = vpack.c.bf16 %v2117, %v2114
    %v2142 = vpack.c.bf16 %v2118, %v2115
    %v2143 = vld [vmem:[%s4] sm:$0xf]
    %v2144 = vld [vmem:[%s4 + $0x4] sm:$0xf]
    %v2145 = vld [vmem:[%s4 + $0x8] sm:$0xf]
    %v2146 = vld [vmem:[%s4 + $0xc] sm:$0xf]
    %v2147 = vld [vmem:[%s4 + $0x10] sm:$0xf]
    %v2148 = vld [vmem:[%s4 + $0x14] sm:$0xf]
    %v2149 = vld [vmem:[%s4 + $0x18] sm:$0xf]
    %v2150 = vld [vmem:[%s4 + $0x1c] sm:$0xf]
    %v2151 = vld [vmem:[%s4 + $0x20] sm:$0xf]
    %v2152 = vld [vmem:[%s4 + $0x24] sm:$0xf]
    %v2153 = vld [vmem:[%s4 + $0x28] sm:$0xf]
    %v2154 = vld [vmem:[%s4 + $0x2c] sm:$0xf]
    %v2155 = vld [vmem:[%s4 + $0x30] sm:$0xf]
    %v2156 = vld [vmem:[%s4 + $0x34] sm:$0xf]
    %v2157 = vld [vmem:[%s4 + $0x38] sm:$0xf]
    %v2158 = vld [vmem:[%s4 + $0x3c] sm:$0xf]
    %v2159 = vld [vmem:[%s4 + $0x40] sm:$0xf]
    %v2160 = vld [vmem:[%s4 + $0x44] sm:$0xf]
    %v2161 = vld [vmem:[%s4 + $0x48] sm:$0xf]
    %v2162 = vld [vmem:[%s4 + $0x4c] sm:$0xf]
    %v2163 = vld [vmem:[%s4 + $0x50] sm:$0xf]
    %v2164 = vld [vmem:[%s4 + $0x54] sm:$0xf]
    %v2165 = vld [vmem:[%s4 + $0x58] sm:$0xf]
    %v2166 = vld [vmem:[%s4 + $0x5c] sm:$0xf]
    %v2167 = vld [vmem:[%s4 + $0x60] sm:$0xf]
    %v2168 = vld [vmem:[%s4 + $0x64] sm:$0xf]
    %v2169 = vld [vmem:[%s4 + $0x68] sm:$0xf]
    %v2170 = vld [vmem:[%s4 + $0x6c] sm:$0xf]
    %v2171 = vld [vmem:[%s4 + $0x70] sm:$0xf]
    %v2172 = vld [vmem:[%s4 + $0x74] sm:$0xf]
    %v2173 = vld [vmem:[%s4 + $0x78] sm:$0xf]
    %v2174 = vld [vmem:[%s4 + $0x7c] sm:$0xf]
    %v2175 = vld [vmem:[%s4 + $0x80] sm:$0xf]
    %v2176 = vld [vmem:[%s4 + $0x84] sm:$0xf]
    %v2177 = vld [vmem:[%s4 + $0x88] sm:$0xf]
    %v2178 = vld [vmem:[%s4 + $0x8c] sm:$0xf]
    %v2215 = vunpack.c.l.b16 %v2143
    %v2216 = vunpack.c.l.b16 %v2144
    %v2217 = vunpack.c.l.b16 %v2145
    %v2218 = vunpack.c.l.b16 %v2146
    %v2219 = vunpack.c.l.b16 %v2147
    %v2220 = vunpack.c.l.b16 %v2148
    %v2221 = vunpack.c.l.b16 %v2149
    %v2222 = vunpack.c.l.b16 %v2150
    %v2223 = vunpack.c.l.b16 %v2151
    %v2224 = vunpack.c.l.b16 %v2152
    %v2225 = vunpack.c.l.b16 %v2153
    %v2226 = vunpack.c.l.b16 %v2154
    %v2227 = vunpack.c.l.b16 %v2155
    %v2228 = vunpack.c.l.b16 %v2156
    %v2229 = vunpack.c.l.b16 %v2157
    %v2230 = vunpack.c.l.b16 %v2158
    %v2231 = vunpack.c.l.b16 %v2159
    %v2232 = vunpack.c.l.b16 %v2160
    %v2233 = vunpack.c.l.b16 %v2161
    %v2234 = vunpack.c.l.b16 %v2162
    %v2235 = vunpack.c.l.b16 %v2163
    %v2236 = vunpack.c.l.b16 %v2164
    %v2237 = vunpack.c.l.b16 %v2165
    %v2238 = vunpack.c.l.b16 %v2166
    %v2239 = vunpack.c.l.b16 %v2167
    %v2240 = vunpack.c.l.b16 %v2168
    %v2241 = vunpack.c.l.b16 %v2169
    %v2242 = vunpack.c.l.b16 %v2170
    %v2243 = vunpack.c.l.b16 %v2171
    %v2244 = vunpack.c.l.b16 %v2172
    %v2245 = vunpack.c.l.b16 %v2173
    %v2246 = vunpack.c.l.b16 %v2174
    %v2247 = vunpack.c.l.b16 %v2175
    %v2248 = vunpack.c.l.b16 %v2176
    %v2249 = vunpack.c.l.b16 %v2177
    %v2250 = vunpack.c.l.b16 %v2178
    %v2251 = vpack.c.b16 %v2216, %v2215
    %v2252 = vpack.c.b16 %v2218, %v2217
    %v2253 = vpack.c.b16 %v2220, %v2219
    %v2254 = vpack.c.b16 %v2222, %v2221
    %v2255 = vpack.c.b16 %v2224, %v2223
    %v2256 = vpack.c.b16 %v2226, %v2225
    %v2257 = vpack.c.b16 %v2228, %v2227
    %v2258 = vpack.c.b16 %v2230, %v2229
    %v2259 = vpack.c.b16 %v2232, %v2231
    %v2260 = vpack.c.b16 %v2234, %v2233
    %v2261 = vpack.c.b16 %v2236, %v2235
    %v2262 = vpack.c.b16 %v2238, %v2237
    %v2263 = vpack.c.b16 %v2240, %v2239
    %v2264 = vpack.c.b16 %v2242, %v2241
    %v2265 = vpack.c.b16 %v2244, %v2243
    %v2266 = vpack.c.b16 %v2246, %v2245
    %v2267 = vpack.c.b16 %v2248, %v2247
    %v2268 = vpack.c.b16 %v2250, %v2249
    %v2288 = vsel %vm28, %v2121, 0
    %v2291 = vsel %vm28, %v2124, 0
    %v2294 = vsel %vm28, %v2127, 0
    %v2297 = vsel %vm28, %v2130, 0
    %v2300 = vsel %vm28, %v2133, 0
    %v2303 = vsel %vm28, %v2136, 0
    %v2306 = vsel %vm28, %v2139, 0
    %v2309 = vsel %vm28, %v2142, 0
    %2311 = vmatprep.subr.bf16.mxu0 0
    %2312 = vmatpush1.bf16.msra.mxu0 %v2258
    %2313 = vmatprep.subr.bf16.mxu0 0
    %2314 = vmatpush1.bf16.msra.mxu0 %v2257
    %2315 = vmatprep.subr.bf16.mxu0 0
    %2316 = vmatpush1.bf16.msra.mxu0 %v2256
    %2317 = vmatprep.subr.bf16.mxu0 0
    %2318 = vmatpush1.bf16.msra.mxu0 %v2255
    %2319 = vmatprep.subr.bf16.mxu0 0
    %2320 = vmatpush1.bf16.msra.mxu0 %v2254
    %2321 = vmatprep.subr.bf16.mxu0 0
    %2322 = vmatpush1.bf16.msra.mxu0 %v2253
    %2323 = vmatprep.subr.bf16.mxu0 0
    %2324 = vmatpush1.bf16.msra.mxu0 %v2252
    %2325 = vmatprep.subr.bf16.mxu0 0
    %2326 = vmatpush1.bf16.msra.mxu0 %v2251
    %2327 = vmatprep.subr.bf16.mxu0 0
    %2328 = vmatpush2.bf16.msra.mxu0 %v2266
    %2329 = vmatprep.subr.bf16.mxu0 0
    %2330 = vmatpush2.bf16.msra.mxu0 %v2265
    %2331 = vmatprep.subr.bf16.mxu0 0
    %2332 = vmatpush2.bf16.msra.mxu0 %v2264
    %2333 = vmatprep.subr.bf16.mxu0 0
    %2334 = vmatpush2.bf16.msra.mxu0 %v2263
    %2335 = vmatprep.subr.bf16.mxu0 0
    %2336 = vmatpush2.bf16.msra.mxu0 %v2262
    %2337 = vmatprep.subr.bf16.mxu0 0
    %2338 = vmatpush2.bf16.msra.mxu0 %v2261
    %2339 = vmatprep.subr.bf16.mxu0 0
    %2340 = vmatpush2.bf16.msra.mxu0 %v2260
    %2341 = vmatprep.subr.bf16.mxu0 0
    %2342 = vmatpush2.bf16.msra.mxu0 %v2259
    %2343 = vmatprep.mubr.bf16.mxu0 %v2120
    %2344 = vmatmul.mubr.bf16.gmra.mxu0 %v2119
    %v2345 = vpop.f32.mrf.mxu0
    %v2346 = vadd.f32 0.0, %v2345
    %v2347 = vpop.f32.mrf.mxu0
    %v2348 = vpop.f32.mrf.mxu0
    %v2349 = vadd.f32 0.0, %v2348
    %v2350 = vpop.f32.mrf.mxu0
    %2351 = vmatprep.mubr.bf16.mxu0 %v2123
    %2352 = vmatmul.mubr.bf16.gmra.mxu0 %v2122
    %v2353 = vpop.f32.mrf.mxu0
    %v2354 = vadd.f32 0.0, %v2353
    %v2355 = vpop.f32.mrf.mxu0
    %v2356 = vpop.f32.mrf.mxu0
    %v2357 = vadd.f32 0.0, %v2356
    %v2358 = vpop.f32.mrf.mxu0
    %2359 = vmatprep.mubr.bf16.mxu0 %v2126
    %2360 = vmatmul.mubr.bf16.gmra.mxu0 %v2125
    %v2361 = vpop.f32.mrf.mxu0
    %v2362 = vadd.f32 0.0, %v2361
    %v2363 = vpop.f32.mrf.mxu0
    %v2364 = vpop.f32.mrf.mxu0
    %v2365 = vadd.f32 0.0, %v2364
    %v2366 = vpop.f32.mrf.mxu0
    %2367 = vmatprep.mubr.bf16.mxu0 %v2129
    %2368 = vmatmul.mubr.bf16.gmra.mxu0 %v2128
    %v2369 = vpop.f32.mrf.mxu0
    %v2370 = vadd.f32 0.0, %v2369
    %v2371 = vpop.f32.mrf.mxu0
    %v2372 = vpop.f32.mrf.mxu0
    %v2373 = vadd.f32 0.0, %v2372
    %v2374 = vpop.f32.mrf.mxu0
    %2375 = vmatprep.mubr.bf16.mxu0 %v2132
    %2376 = vmatmul.mubr.bf16.gmra.mxu0 %v2131
    %v2377 = vpop.f32.mrf.mxu0
    %v2378 = vadd.f32 0.0, %v2377
    %v2379 = vpop.f32.mrf.mxu0
    %v2380 = vpop.f32.mrf.mxu0
    %v2381 = vadd.f32 0.0, %v2380
    %v2382 = vpop.f32.mrf.mxu0
    %2383 = vmatprep.mubr.bf16.mxu0 %v2135
    %2384 = vmatmul.mubr.bf16.gmra.mxu0 %v2134
    %v2385 = vpop.f32.mrf.mxu0
    %v2386 = vadd.f32 0.0, %v2385
    %v2387 = vpop.f32.mrf.mxu0
    %v2388 = vpop.f32.mrf.mxu0
    %v2389 = vadd.f32 0.0, %v2388
    %v2390 = vpop.f32.mrf.mxu0
    %2391 = vmatprep.mubr.bf16.mxu0 %v2138
    %2392 = vmatmul.mubr.bf16.gmra.mxu0 %v2137
    %v2393 = vpop.f32.mrf.mxu0
    %v2394 = vadd.f32 0.0, %v2393
    %v2395 = vpop.f32.mrf.mxu0
    %v2396 = vpop.f32.mrf.mxu0
    %v2397 = vadd.f32 0.0, %v2396
    %v2398 = vpop.f32.mrf.mxu0
    %2399 = vmatprep.mubr.bf16.mxu0 %v2141
    %2400 = vmatmul.mubr.bf16.gmra.mxu0 %v2140
    %v2401 = vpop.f32.mrf.mxu0
    %v2402 = vadd.f32 0.0, %v2401
    %v2403 = vpop.f32.mrf.mxu0
    %v2404 = vpop.f32.mrf.mxu0
    %v2405 = vadd.f32 0.0, %v2404
    %v2406 = vpop.f32.mrf.mxu0
    %2407 = vdwg.mxu0
    %2408 = vmatprep.subr.bf16.mxu0 0
    %2409 = vmatpush1.bf16.msra.mxu0 0
    %2410 = vmatprep.subr.bf16.mxu0 0
    %2411 = vmatpush1.bf16.msra.mxu0 0
    %2412 = vmatprep.subr.bf16.mxu0 0
    %2413 = vmatpush1.bf16.msra.mxu0 0
    %2414 = vmatprep.subr.bf16.mxu0 0
    %2415 = vmatpush1.bf16.msra.mxu0 0
    %2416 = vmatprep.subr.bf16.mxu0 0
    %2417 = vmatpush1.bf16.msra.mxu0 0
    %2418 = vmatprep.subr.bf16.mxu0 0
    %2419 = vmatpush1.bf16.msra.mxu0 0
    %2420 = vmatprep.subr.bf16.mxu0 0
    %2421 = vmatpush1.bf16.msra.mxu0 %v2268
    %2422 = vmatprep.subr.bf16.mxu0 0
    %2423 = vmatpush1.bf16.msra.mxu0 %v2267
    %2424 = vmatprep.subr.bf16.mxu0 0
    %2425 = vmatpush2.bf16.msra.mxu0 0
    %2426 = vmatprep.subr.bf16.mxu0 0
    %2427 = vmatpush2.bf16.msra.mxu0 0
    %2428 = vmatprep.subr.bf16.mxu0 0
    %2429 = vmatpush2.bf16.msra.mxu0 0
    %2430 = vmatprep.subr.bf16.mxu0 0
    %2431 = vmatpush2.bf16.msra.mxu0 0
    %2432 = vmatprep.subr.bf16.mxu0 0
    %2433 = vmatpush2.bf16.msra.mxu0 0
    %2434 = vmatprep.subr.bf16.mxu0 0
    %2435 = vmatpush2.bf16.msra.mxu0 0
    %2436 = vmatprep.subr.bf16.mxu0 0
    %2437 = vmatpush2.bf16.msra.mxu0 0
    %2438 = vmatprep.subr.bf16.mxu0 0
    %2439 = vmatpush2.bf16.msra.mxu0 0
    %2440 = vmatprep.mubr.bf16.mxu0 0
    %2441 = vmatmul.mubr.bf16.gmra.mxu0 %v2288
    %v2442 = vpop.f32.mrf.mxu0
    %v2443 = vadd.f32 %v2346, %v2442
    %v2444 = vpop.f32.mrf.mxu0
    %v2445 = vpop.f32.mrf.mxu0
    %v2446 = vadd.f32 %v2349, %v2445
    %v2447 = vpop.f32.mrf.mxu0
    %2448 = vmatprep.mubr.bf16.mxu0 0
    %2449 = vmatmul.mubr.bf16.gmra.mxu0 %v2291
    %v2450 = vpop.f32.mrf.mxu0
    %v2451 = vadd.f32 %v2354, %v2450
    %v2452 = vpop.f32.mrf.mxu0
    %v2453 = vpop.f32.mrf.mxu0
    %v2454 = vadd.f32 %v2357, %v2453
    %v2455 = vpop.f32.mrf.mxu0
    %2456 = vmatprep.mubr.bf16.mxu0 0
    %2457 = vmatmul.mubr.bf16.gmra.mxu0 %v2294
    %v2458 = vpop.f32.mrf.mxu0
    %v2459 = vadd.f32 %v2362, %v2458
    %v2460 = vpop.f32.mrf.mxu0
    %v2461 = vpop.f32.mrf.mxu0
    %v2462 = vadd.f32 %v2365, %v2461
    %v2463 = vpop.f32.mrf.mxu0
    %2464 = vmatprep.mubr.bf16.mxu0 0
    %2465 = vmatmul.mubr.bf16.gmra.mxu0 %v2297
    %v2466 = vpop.f32.mrf.mxu0
    %v2467 = vadd.f32 %v2370, %v2466
    %v2468 = vpop.f32.mrf.mxu0
    %v2469 = vpop.f32.mrf.mxu0
    %v2470 = vadd.f32 %v2373, %v2469
    %v2471 = vpop.f32.mrf.mxu0
    %2472 = vmatprep.mubr.bf16.mxu0 0
    %2473 = vmatmul.mubr.bf16.gmra.mxu0 %v2300
    %v2474 = vpop.f32.mrf.mxu0
    %v2475 = vadd.f32 %v2378, %v2474
    %v2476 = vpop.f32.mrf.mxu0
    %v2477 = vpop.f32.mrf.mxu0
    %v2478 = vadd.f32 %v2381, %v2477
    %v2479 = vpop.f32.mrf.mxu0
    %2480 = vmatprep.mubr.bf16.mxu0 0
    %2481 = vmatmul.mubr.bf16.gmra.mxu0 %v2303
    %v2482 = vpop.f32.mrf.mxu0
    %v2483 = vadd.f32 %v2386, %v2482
    %v2484 = vpop.f32.mrf.mxu0
    %v2485 = vpop.f32.mrf.mxu0
    %v2486 = vadd.f32 %v2389, %v2485
    %v2487 = vpop.f32.mrf.mxu0
    %2488 = vmatprep.mubr.bf16.mxu0 0
    %2489 = vmatmul.mubr.bf16.gmra.mxu0 %v2306
    %v2490 = vpop.f32.mrf.mxu0
    %v2491 = vadd.f32 %v2394, %v2490
    %v2492 = vpop.f32.mrf.mxu0
    %v2493 = vpop.f32.mrf.mxu0
    %v2494 = vadd.f32 %v2397, %v2493
    %v2495 = vpop.f32.mrf.mxu0
    %2496 = vmatprep.mubr.bf16.mxu0 0
    %2497 = vmatmul.mubr.bf16.gmra.mxu0 %v2309
    %v2498 = vpop.f32.mrf.mxu0
    %v2499 = vadd.f32 %v2402, %v2498
    %v2500 = vpop.f32.mrf.mxu0
    %v2501 = vpop.f32.mrf.mxu0
    %v2502 = vadd.f32 %v2405, %v2501
    %v2503 = vpop.f32.mrf.mxu0
    %2504 = vdwg.mxu0
    %v2505 = vsel %vm28, %v2443, 0.0
    %v2506 = vsel %vm28, %v2446, 0.0
    %v2507 = vadd.f32 %v2505, %v2506
    %v2508 = vsel %vm28, %v2451, 0.0
    %v2509 = vadd.f32 %v2507, %v2508
    %v2510 = vsel %vm28, %v2454, 0.0
    %v2511 = vadd.f32 %v2509, %v2510
    %v2512 = vsel %vm28, %v2459, 0.0
    %v2513 = vadd.f32 %v2511, %v2512
    %v2514 = vsel %vm28, %v2462, 0.0
    %v2515 = vadd.f32 %v2513, %v2514
    %v2516 = vsel %vm28, %v2467, 0.0
    %v2517 = vadd.f32 %v2515, %v2516
    %v2518 = vsel %vm28, %v2470, 0.0
    %v2519 = vadd.f32 %v2517, %v2518
    %v2520 = vsel %vm28, %v2475, 0.0
    %v2521 = vadd.f32 %v2519, %v2520
    %v2522 = vsel %vm28, %v2478, 0.0
    %v2523 = vadd.f32 %v2521, %v2522
    %v2524 = vsel %vm28, %v2483, 0.0
    %v2525 = vadd.f32 %v2523, %v2524
    %v2526 = vsel %vm28, %v2486, 0.0
    %v2527 = vadd.f32 %v2525, %v2526
    %v2528 = vsel %vm28, %v2491, 0.0
    %v2529 = vadd.f32 %v2527, %v2528
    %v2530 = vsel %vm28, %v2494, 0.0
    %v2531 = vadd.f32 %v2529, %v2530
    %v2532 = vsel %vm28, %v2499, 0.0
    %v2533 = vadd.f32 %v2531, %v2532
    %v2534 = vsel %vm28, %v2502, 0.0
    %v2535 = vadd.f32 %v2533, %v2534
    %v2536 = vrot.slane %v2535, 4
    %v2537 = vadd.f32 %v2535, %v2536
    %v2538 = vrot.slane %v2537, 2
    %v2539 = vadd.f32 %v2537, %v2538
    %v2540 = vrot.slane %v2539, 1
    %v2541 = vadd.f32 %v2539, %v2540
    %v2542 = vmul.f32 %v2443, %v2443
    %v2543 = vmul.f32 %v2446, %v2446
    %v2544 = vmul.f32 %v2451, %v2451
    %v2545 = vmul.f32 %v2454, %v2454
    %v2546 = vmul.f32 %v2459, %v2459
    %v2547 = vmul.f32 %v2462, %v2462
    %v2548 = vmul.f32 %v2467, %v2467
    %v2549 = vmul.f32 %v2470, %v2470
    %v2550 = vmul.f32 %v2475, %v2475
    %v2551 = vmul.f32 %v2478, %v2478
    %v2552 = vmul.f32 %v2483, %v2483
    %v2553 = vmul.f32 %v2486, %v2486
    %v2554 = vmul.f32 %v2491, %v2491
    %v2555 = vmul.f32 %v2494, %v2494
    %v2556 = vmul.f32 %v2499, %v2499
    %v2557 = vmul.f32 %v2502, %v2502
    %v2558 = vsel %vm28, %v2542, 0.0
    %v2559 = vsel %vm28, %v2543, 0.0
    %v2560 = vadd.f32 %v2558, %v2559
    %v2561 = vsel %vm28, %v2544, 0.0
    %v2562 = vadd.f32 %v2560, %v2561
    %v2563 = vsel %vm28, %v2545, 0.0
    %v2564 = vadd.f32 %v2562, %v2563
    %v2565 = vsel %vm28, %v2546, 0.0
    %v2566 = vadd.f32 %v2564, %v2565
    %v2567 = vsel %vm28, %v2547, 0.0
    %v2568 = vadd.f32 %v2566, %v2567
    %v2569 = vsel %vm28, %v2548, 0.0
    %v2570 = vadd.f32 %v2568, %v2569
    %v2571 = vsel %vm28, %v2549, 0.0
    %v2572 = vadd.f32 %v2570, %v2571
    %v2573 = vsel %vm28, %v2550, 0.0
    %v2574 = vadd.f32 %v2572, %v2573
    %v2575 = vsel %vm28, %v2551, 0.0
    %v2576 = vadd.f32 %v2574, %v2575
    %v2577 = vsel %vm28, %v2552, 0.0
    %v2578 = vadd.f32 %v2576, %v2577
    %v2579 = vsel %vm28, %v2553, 0.0
    %v2580 = vadd.f32 %v2578, %v2579
    %v2581 = vsel %vm28, %v2554, 0.0
    %v2582 = vadd.f32 %v2580, %v2581
    %v2583 = vsel %vm28, %v2555, 0.0
    %v2584 = vadd.f32 %v2582, %v2583
    %v2585 = vsel %vm28, %v2556, 0.0
    %v2586 = vadd.f32 %v2584, %v2585
    %v2587 = vsel %vm28, %v2557, 0.0
    %v2588 = vadd.f32 %v2586, %v2587
    %v2589 = vrot.slane %v2588, 4
    %v2590 = vadd.f32 %v2588, %v2589
    %v2591 = vrot.slane %v2590, 2
    %v2592 = vadd.f32 %v2590, %v2591
    %v2593 = vrot.slane %v2592, 1
    %v2594 = vadd.f32 %v2592, %v2593
    %v2595 = vmul.f32 %v2541, 0.0078125
    %v2596 = vmul.f32 %v2594, 0.0078125
    %v2597 = vmul.f32 %v2595, %v2595
    %v2598 = vsub.f32 %v2596, %v2597
    %v2599 = vmax.f32 %v2598, 0.0
    %v2600 = vadd.f32 %v2599, 1e-05
    %v2601 = vrsqrt.pop %v2600
    %v2602 = vld [vmem:[%s5] sm:$0x1]
    %v2603 = vmul.f32 %v2601, %v2602
    %v2604 = vld [vmem:[%s6] sm:$0x1]
    %v2605 = vmul.f32 %v2595, %v2603
    %v2606 = vsub.f32 %v2604, %v2605
    %v2607 = vlaneseq
    %v2608 = vshrl.u32 %v2607, 7
    %v2609 = vsub.s32 0, %v2608
    %v2610 = vrot.slane %v2603, %v2609
    %v2611 = vmul.f32 %v2443, %v2610
    %v2612 = vmul.f32 %v2446, %v2610
    %v2613 = vmul.f32 %v2451, %v2610
    %v2614 = vmul.f32 %v2454, %v2610
    %v2615 = vmul.f32 %v2459, %v2610
    %v2616 = vmul.f32 %v2462, %v2610
    %v2617 = vmul.f32 %v2467, %v2610
    %v2618 = vmul.f32 %v2470, %v2610
    %v2619 = vmul.f32 %v2475, %v2610
    %v2620 = vmul.f32 %v2478, %v2610
    %v2621 = vmul.f32 %v2483, %v2610
    %v2622 = vmul.f32 %v2486, %v2610
    %v2623 = vmul.f32 %v2491, %v2610
    %v2624 = vmul.f32 %v2494, %v2610
    %v2625 = vmul.f32 %v2499, %v2610
    %v2626 = vmul.f32 %v2502, %v2610
    %v2628 = vlaneseq
    %v2629 = vshrl.u32 %v2628, 7
    %v2630 = vsub.s32 0, %v2629
    %v2631 = vrot.slane %v2606, %v2630
    %v2633 = vadd.f32 %v2611, %v2631
    %v2634 = vadd.f32 %v2612, %v2631
    %v2635 = vadd.f32 %v2613, %v2631
    %v2636 = vadd.f32 %v2614, %v2631
    %v2637 = vadd.f32 %v2615, %v2631
    %v2638 = vadd.f32 %v2616, %v2631
    %v2639 = vadd.f32 %v2617, %v2631
    %v2640 = vadd.f32 %v2618, %v2631
    %v2641 = vadd.f32 %v2619, %v2631
    %v2642 = vadd.f32 %v2620, %v2631
    %v2643 = vadd.f32 %v2621, %v2631
    %v2644 = vadd.f32 %v2622, %v2631
    %v2645 = vadd.f32 %v2623, %v2631
    %v2646 = vadd.f32 %v2624, %v2631
    %v2647 = vadd.f32 %v2625, %v2631
    %v2648 = vadd.f32 %v2626, %v2631
    %v2649 = vld [vmem:[%s0] sm:$0xff]
    %v2650 = vld [vmem:[%s0 + $0x8] sm:$0xff]
    %v2651 = vld [vmem:[%s0 + $0x10] sm:$0xff]
    %v2652 = vld [vmem:[%s0 + $0x18] sm:$0xff]
    %v2653 = vld [vmem:[%s0 + $0x20] sm:$0xff]
    %v2654 = vld [vmem:[%s0 + $0x28] sm:$0xff]
    %v2655 = vld [vmem:[%s0 + $0x30] sm:$0xff]
    %v2656 = vld [vmem:[%s0 + $0x38] sm:$0xff]
    %v2657 = vld [vmem:[%s0 + $0x40] sm:$0xff]
    %v2658 = vld [vmem:[%s0 + $0x48] sm:$0xff]
    %v2659 = vld [vmem:[%s0 + $0x50] sm:$0xff]
    %v2660 = vld [vmem:[%s0 + $0x58] sm:$0xff]
    %v2661 = vld [vmem:[%s0 + $0x60] sm:$0xff]
    %v2662 = vld [vmem:[%s0 + $0x68] sm:$0xff]
    %v2663 = vld [vmem:[%s0 + $0x70] sm:$0xff]
    %v2664 = vld [vmem:[%s0 + $0x78] sm:$0xff]
    %v2665 = vadd.f32 %v2633, %v2649
    %v2666 = vadd.f32 %v2634, %v2650
    %v2667 = vadd.f32 %v2635, %v2651
    %v2668 = vadd.f32 %v2636, %v2652
    %v2669 = vadd.f32 %v2637, %v2653
    %v2670 = vadd.f32 %v2638, %v2654
    %v2671 = vadd.f32 %v2639, %v2655
    %v2672 = vadd.f32 %v2640, %v2656
    %v2673 = vadd.f32 %v2641, %v2657
    %v2674 = vadd.f32 %v2642, %v2658
    %v2675 = vadd.f32 %v2643, %v2659
    %v2676 = vadd.f32 %v2644, %v2660
    %v2677 = vadd.f32 %v2645, %v2661
    %v2678 = vadd.f32 %v2646, %v2662
    %v2679 = vadd.f32 %v2647, %v2663
    %v2680 = vadd.f32 %v2648, %v2664
    %v2681 = vmax.f32 %v2665, 0.0
    %v2682 = vmax.f32 %v2666, 0.0
    %v2683 = vmax.f32 %v2667, 0.0
    %v2684 = vmax.f32 %v2668, 0.0
    %v2685 = vmax.f32 %v2669, 0.0
    %v2686 = vmax.f32 %v2670, 0.0
    %v2687 = vmax.f32 %v2671, 0.0
    %v2688 = vmax.f32 %v2672, 0.0
    %v2689 = vmax.f32 %v2673, 0.0
    %v2690 = vmax.f32 %v2674, 0.0
    %v2691 = vmax.f32 %v2675, 0.0
    %v2692 = vmax.f32 %v2676, 0.0
    %v2693 = vmax.f32 %v2677, 0.0
    %v2694 = vmax.f32 %v2678, 0.0
    %v2695 = vmax.f32 %v2679, 0.0
    %v2696 = vmax.f32 %v2680, 0.0
    %2697 = vst.msk [vmem:[#allocation4] sm:$0xff] %vm28, %v2681
    %2698 = vst.msk [vmem:[#allocation4 + $0x8] sm:$0xff] %vm28, %v2682
    %2699 = vst.msk [vmem:[#allocation4 + $0x10] sm:$0xff] %vm28, %v2683
    %2700 = vst.msk [vmem:[#allocation4 + $0x18] sm:$0xff] %vm28, %v2684
    %2701 = vst.msk [vmem:[#allocation4 + $0x20] sm:$0xff] %vm28, %v2685
    %2702 = vst.msk [vmem:[#allocation4 + $0x28] sm:$0xff] %vm28, %v2686
    %2703 = vst.msk [vmem:[#allocation4 + $0x30] sm:$0xff] %vm28, %v2687
    %2704 = vst.msk [vmem:[#allocation4 + $0x38] sm:$0xff] %vm28, %v2688
    %2705 = vst.msk [vmem:[#allocation4 + $0x40] sm:$0xff] %vm28, %v2689
    %2706 = vst.msk [vmem:[#allocation4 + $0x48] sm:$0xff] %vm28, %v2690
    %2707 = vst.msk [vmem:[#allocation4 + $0x50] sm:$0xff] %vm28, %v2691
    %2708 = vst.msk [vmem:[#allocation4 + $0x58] sm:$0xff] %vm28, %v2692
    %2709 = vst.msk [vmem:[#allocation4 + $0x60] sm:$0xff] %vm28, %v2693
    %2710 = vst.msk [vmem:[#allocation4 + $0x68] sm:$0xff] %vm28, %v2694
    %2711 = vst.msk [vmem:[#allocation4 + $0x70] sm:$0xff] %vm28, %v2695
    %2712 = vst.msk [vmem:[#allocation4 + $0x78] sm:$0xff] %vm28, %v2696
    // Predicated region
    $region30: #{tpu_custom_call.1} parent=1 // pred_check
      _
    $region31: #{tpu_custom_call.1} parent=1 // pred_check_branch
      %2714 = sbr.rel (0) target = $region33
    $region32: #{tpu_custom_call.1} parent=1 // pred_region
      %s2716 = ssub.s32 2048, 2048
      %2717 = vsyncadd [#allocation5], %s2716
      %s2718 = sshll.u32 [#allocation4], 4
      %s2719 = int_to_ptr.vmem [resolvable:$true] %s2718
      %2724 = dma.vmem_to_hbm [thread:$0]  %s2719, 2048, %s7, [#allocation5], 128, 128, 8
    $region33: #{tpu_custom_call.1} parent=1 // pred_fallthru
      _
    // Predicated region
    $region34: #{tpu_custom_call.1} parent=1 // pred_check
      _
    $region35: #{tpu_custom_call.1} parent=1 // pred_check_branch
      %2726 = sbr.rel (0) target = $region37
    $region36: #{tpu_custom_call.1} parent=1 // pred_region
      %2727 = dma.done [#allocation5], 2048
    $region37: #{tpu_custom_call.1} parent=1 // pred_fallthru
      _
    %2728 = vsyncpa [#allocation5], 1

</llo_original>
